<compile_context>
chip_gen: v7x
topology: tpu7x:2x2x1
jax: 0.10.0
libtpu: 0.0.40
codegen_flags: <defaults>
</compile_context>

<pallas_src>
import functools

import jax
import jax.numpy as jnp
import numpy as np
from jax.experimental import pallas as pl
from jax.experimental.pallas import tpu as pltpu


def temporal_attention_kernel(x_ref, w1_ref, b1_ref, w2r_ref, o_ref, *,
                              BT, S, S_valid, D, G):
    # x_ref:   (BT, S, D)     batch-row block, native dtype
    # w1_ref:  (D, D)         W1 as stored by nn.Linear (out_features, in_features)
    # b1_ref:  (1, D)         b1 (f32)
    # w2r_ref: (1, D)         W2 as a row (f32)
    # o_ref:   (BT//G, G*D)   lane-dense packed output (x.dtype)
    x = x_ref[...]

    # ---- Linear1 + tanh: one MXU matmul over all BT*S rows -----------------
    xf = x.reshape(BT * S, D)                 # layout-preserving (S % sublane-tile == 0)
    h = jax.lax.dot_general(
        xf, w1_ref[...],
        dimension_numbers=(((1,), (1,)), ((), ())),   # xf @ W1^T without a transpose op
        preferred_element_type=jnp.float32)
    h = jnp.tanh(h + b1_ref[...])                      # (BT*S, D) f32

    # ---- Linear2 (out_features=1) as VPU mul + XLU lane reduce --------------
    scores = jnp.sum(h.reshape(BT, S, D) * w2r_ref[...], axis=-1)   # (BT, S) f32
    # b2 omitted: softmax(scores + c) == softmax(scores)

    if S_valid != S:   # mask padded sequence positions out of the softmax
        col = jax.lax.broadcasted_iota(jnp.int32, (BT, S), 1)
        scores = jnp.where(col < S_valid, scores, jnp.float32(-1e30))

    # ---- Softmax over the sequence axis --------------------------------------
    m = jnp.max(scores, axis=-1, keepdims=True)        # (BT, 1)
    e = jnp.exp(scores - m)                             # (BT, S)
    denom = jnp.sum(e, axis=-1, keepdims=True)          # (BT, 1)
    attn = e * pl.reciprocal(denom, approx=True)        # EUP reciprocal (free slot)

    # ---- Weighted sum over the sequence axis ----------------------------------
    # Multiply in x's dtype (no full-tile f32 copy of x); accumulate in f32.
    prod = x * attn[:, :, None].astype(x.dtype)          # (BT, S, D)
    attended = jnp.sum(prod, axis=1, dtype=jnp.float32)  # (BT, D) f32

    # ---- Lane-dense packed store ----------------------------------------------
    if G > 1:
        rows = BT // G
        for g in range(G):                # static loop; output DMA is a dense 128-lane slab
            o_ref[:, g * D:(g + 1) * D] = (
                attended[g * rows:(g + 1) * rows, :].astype(o_ref.dtype))
    else:
        o_ref[...] = attended.astype(o_ref.dtype)


def _round_up(n, m):
    return ((n + m - 1) // m) * m


def _sublane_tile(dtype):
    return max(8, 32 // max(1, jnp.dtype(dtype).itemsize))


def _vmem_budget_and_limit():
    try:
        cap = int(pltpu.get_tpu_info().vmem_capacity_bytes)
    except Exception:
        cap = 64 * 1024 * 1024          # conservative (v7x-sized) fallback
    return int(cap * 0.45), int(cap * 0.70)


def _num_tensorcores():
    try:
        kind = jax.devices()[0].device_kind.lower()
    except Exception:
        return 1
    return 2 if "v7" in kind else 1      # v7x shards "parallel" grid axes across 2 TCs


def _choose_bt(B, S, D, x_bytes, G, vmem_budget, num_tc):
    """Batch rows per grid step, sized for DMA efficiency under a VMEM budget."""
    mult = 8 * G                          # sublane alignment of the packed output slab
    lane_d = _round_up(max(D, 128), 128)  # every (., D) VMEM tile is lane-padded to 128
    # Live VMEM per batch row: 2x x (double-buffered DMA) + f32 h + f32 product.
    per_row = S * lane_d * (2 * x_bytes + 4 + 4)
    # Resident weights / biases (assume double-buffered worst case).
    fixed = 2 * _round_up(D, 8) * lane_d * x_bytes + 4 * 8 * lane_d * 4
    avail = max(vmem_budget - fixed, per_row * mult)
    bt_vmem = max(mult, (avail // per_row) // mult * mult)
    # DMA-efficiency target: ~4 MiB of HBM reads per grid step (2-8 MiB sweet spot).
    target = 4 * 1024 * 1024
    bt_dma = max(mult, (target // max(1, S * D * x_bytes)) // mult * mult)
    bt = min(bt_vmem, bt_dma)
    bt = min(bt, _round_up(B, mult))      # never exceed the (padded) batch
    # v7x: give each TensorCore >= 2 grid steps when the batch allows it, but
    # never shrink a block below ~1 MiB of HBM traffic (overhead regime).
    if num_tc > 1:
        bt_steps = max(mult, _round_up(-(-B // (2 * num_tc)), mult))
        if bt_steps < bt and bt_steps * S * D * x_bytes >= (1 << 20):
            bt = bt_steps
    return bt


def temporal_attention(x, w1, b1, w2, b2):
    """x: (B, S, D); w1: (D, D); b1: (D,); w2: (1, D); b2: (1,) -> (B, D)."""
    B, S, D = x.shape
    x_bytes = jnp.dtype(x.dtype).itemsize
    del b2   # adding a constant before softmax is a no-op

    # Lane-dense output packing factor (pack G batch rows per 128-lane output row).
    G = 128 // D if (D < 128 and 128 % D == 0) else 1

    # Pad the sequence axis to the sublane tile so in-kernel reshapes are
    # layout-preserving; padded positions are masked out of the softmax.
    S_pad = _round_up(S, _sublane_tile(x.dtype))

    vmem_budget, vmem_limit = _vmem_budget_and_limit()
    BT = _choose_bt(B, S_pad, D, x_bytes, G, vmem_budget, _num_tensorcores())
    n_blocks = pl.cdiv(B, BT)
    B_pad = n_blocks * BT

    if B_pad != B or S_pad != S:
        # Zero-padding is safe: padded seq positions are masked in-kernel and
        # padded batch rows produce finite garbage that is sliced off below.
        x = jnp.pad(x, ((0, B_pad - B), (0, S_pad - S), (0, 0)))

    w1c = jnp.asarray(w1, x.dtype)                        # (D, D), nn.Linear layout
    b1r = jnp.asarray(b1, jnp.float32).reshape(1, D)      # (1, D)
    w2r = jnp.asarray(w2, jnp.float32).reshape(1, D)      # (1, D)

    kernel = functools.partial(temporal_attention_kernel,
                               BT=BT, S=S_pad, S_valid=S, D=D, G=G)
    out_rows = B_pad // G

    def build(single_buffer_weights):
        w_kw = ({"pipeline_mode": pl.Buffered(1)} if single_buffer_weights else {})
        return pl.pallas_call(
            kernel,
            out_shape=jax.ShapeDtypeStruct((out_rows, G * D), x.dtype),
            grid_spec=pltpu.PrefetchScalarGridSpec(
                num_scalar_prefetch=0,
                grid=(n_blocks,),
                in_specs=[
                    pl.BlockSpec((BT, S_pad, D), lambda i: (i, 0, 0)),  # x block
                    pl.BlockSpec((D, D), lambda i: (0, 0), **w_kw),     # W1 (resident)
                    pl.BlockSpec((1, D), lambda i: (0, 0), **w_kw),     # b1
                    pl.BlockSpec((1, D), lambda i: (0, 0), **w_kw),     # W2 row
                ],
                out_specs=pl.BlockSpec((BT // G, G * D), lambda i: (i, 0)),
            ),
            compiler_params=pltpu.CompilerParams(
                dimension_semantics=("parallel",),
                vmem_limit_bytes=vmem_limit,
            ),
        )

    try:
        out = build(True)(x, w1c, b1r, w2r)
    except Exception:
        # pipeline_mode=Buffered(1) not supported by this runtime: fall back to
        # default double buffering (numerically identical).
        out = build(False)(x, w1c, b1r, w2r)

    if G > 1:
        out = out.reshape(n_blocks, BT // G, G, D).transpose(0, 2, 1, 3).reshape(B_pad, D)
    return out[:B]


def temporal_attention_ref(x, w1, b1, w2, b2):
    # Pure-JAX reference mirroring the PyTorch forward (keeps b2).
    h = jnp.tanh(jnp.einsum("bsd,ed->bse", x, w1) + b1)   # (B, S, D)
    scores = jnp.einsum("bsd,od->bso", h, w2) + b2        # (B, S, 1)
    attn = jax.nn.softmax(scores, axis=1)                 # (B, S, 1)
    return jnp.sum(x * attn, axis=1)                      # (B, D)


if __name__ == "__main__":
    B, S, D = 2, 8, 32  # batch, seq, input_dim

    key = jax.random.PRNGKey(0)
    kx, k1, k2, k3, k4 = jax.random.split(key, 5)

    x = jax.random.normal(kx, (B, S, D), dtype=jnp.float32)

    # Deterministic parameter init (PyTorch Linear-style uniform bounds).
    bound1 = 1.0 / np.sqrt(D)
    w1 = jax.random.uniform(k1, (D, D), jnp.float32, -bound1, bound1)
    b1 = jax.random.uniform(k2, (D,), jnp.float32, -bound1, bound1)
    w2 = jax.random.uniform(k3, (1, D), jnp.float32, -bound1, bound1)
    b2 = jax.random.uniform(k4, (1,), jnp.float32, -bound1, bound1)

    out = jax.block_until_ready(temporal_attention(x, w1, b1, w2, b2))

    ref = temporal_attention_ref(x, w1, b1, w2, b2)
    # Tolerance loosened slightly for the EUP approximate reciprocal in the
    # softmax denominator (rel. error ~1e-4).
    np.testing.assert_allclose(np.asarray(out), np.asarray(ref),
                               rtol=1e-3, atol=1e-3)

    print("KERNEL_OK")
</pallas_src>

<mosaic_0001>
module attributes {stable_mosaic.version = 11 : i64} {
  func.func @temporal_attention_kernel(%arg0: i32, %arg1: memref<32x8x32xf32, #tpu.memory_space<vmem>>, %arg2: memref<32x32xf32, #tpu.memory_space<vmem>>, %arg3: memref<1x32xf32, #tpu.memory_space<vmem>>, %arg4: memref<1x32xf32, #tpu.memory_space<vmem>>, %arg5: memref<8x128xf32, #tpu.memory_space<vmem>>) attributes {dimension_semantics = [#tpu.dimension_semantics<parallel>], iteration_bounds = array<i64: 1>, scalar_prefetch = 0 : i64, scratch_operands = 0 : i64, tpu.core_type = #tpu.core_type<tc>, window_params = [{transform_indices = @transform_0, window_bounds = array<i64: 32, 8, 32>}, {pipeline_mode = #tpu.pipeline_mode<synchronous>, transform_indices = @transform_1, window_bounds = array<i64: 32, 32>}, {pipeline_mode = #tpu.pipeline_mode<synchronous>, transform_indices = @transform_2, window_bounds = array<i64: 1, 32>}, {pipeline_mode = #tpu.pipeline_mode<synchronous>, transform_indices = @transform_3, window_bounds = array<i64: 1, 32>}, {transform_indices = @transform_4, window_bounds = array<i64: 8, 128>}]} {
    %c0 = arith.constant 0 : index
    %c0_0 = arith.constant 0 : index
    %c0_1 = arith.constant 0 : index
    %0 = vector.load %arg1[%c0, %c0_0, %c0_1] : memref<32x8x32xf32, #tpu.memory_space<vmem>>, vector<32x8x32xf32>
    %1 = vector.shape_cast %0 : vector<32x8x32xf32> to vector<256x32xf32>
    %c0_2 = arith.constant 0 : index
    %c0_3 = arith.constant 0 : index
    %2 = vector.load %arg2[%c0_2, %c0_3] : memref<32x32xf32, #tpu.memory_space<vmem>>, vector<32x32xf32>
    %cst = arith.constant dense<0.000000e+00> : vector<256x32xf32>
    %3 = tpu.matmul %1, %2, %cst {dimension_numbers = #tpu.dot_dimension_numbers<[1], [1], [0], [0], [0, 0, 1, 0], [], []>} : vector<256x32xf32>, vector<32x32xf32>, vector<256x32xf32> -> vector<256x32xf32>
    %c0_4 = arith.constant 0 : index
    %c0_5 = arith.constant 0 : index
    %4 = vector.load %arg3[%c0_4, %c0_5] : memref<1x32xf32, #tpu.memory_space<vmem>>, vector<1x32xf32>
    %5 = vector.broadcast %4 : vector<1x32xf32> to vector<256x32xf32>
    %6 = arith.addf %3, %5 : vector<256x32xf32>
    %7 = math.tanh %6 : vector<256x32xf32>
    %8 = vector.shape_cast %7 : vector<256x32xf32> to vector<32x8x32xf32>
    %c0_6 = arith.constant 0 : index
    %c0_7 = arith.constant 0 : index
    %9 = vector.load %arg4[%c0_6, %c0_7] : memref<1x32xf32, #tpu.memory_space<vmem>>, vector<1x32xf32>
    %10 = vector.shape_cast %9 : vector<1x32xf32> to vector<1x1x32xf32>
    %11 = vector.broadcast %10 : vector<1x1x32xf32> to vector<32x8x32xf32>
    %12 = arith.mulf %8, %11 : vector<32x8x32xf32>
    %cst_8 = arith.constant dense<0.000000e+00> : vector<32x8xf32>
    %13 = vector.multi_reduction <add>, %12, %cst_8 [2] : vector<32x8x32xf32> to vector<32x8xf32>
    %cst_9 = arith.constant dense<0xFF800000> : vector<32xf32>
    %14 = vector.multi_reduction <maximumf>, %13, %cst_9 [1] : vector<32x8xf32> to vector<32xf32>
    %15 = vector.shape_cast %14 : vector<32xf32> to vector<32x1xf32>
    %16 = vector.broadcast %15 : vector<32x1xf32> to vector<32x8xf32>
    %17 = arith.subf %13, %16 : vector<32x8xf32>
    %18 = math.exp %17 : vector<32x8xf32>
    %cst_10 = arith.constant dense<0.000000e+00> : vector<32xf32>
    %19 = vector.multi_reduction <add>, %18, %cst_10 [1] : vector<32x8xf32> to vector<32xf32>
    %20 = vector.shape_cast %19 : vector<32xf32> to vector<32x1xf32>
    %21 = tpu.reciprocal %20 {approx = true} : vector<32x1xf32> -> vector<32x1xf32>
    %22 = vector.broadcast %21 : vector<32x1xf32> to vector<32x8xf32>
    %23 = arith.mulf %18, %22 : vector<32x8xf32>
    %24 = vector.shape_cast %23 : vector<32x8xf32> to vector<32x8x1xf32>
    %25 = vector.broadcast %24 : vector<32x8x1xf32> to vector<32x8x32xf32>
    %26 = arith.mulf %0, %25 : vector<32x8x32xf32>
    %cst_11 = arith.constant dense<0.000000e+00> : vector<32x32xf32>
    %27 = vector.multi_reduction <add>, %26, %cst_11 [1] : vector<32x8x32xf32> to vector<32x32xf32>
    %28 = vector.extract_strided_slice %27 {offsets = [0, 0], sizes = [8, 32], strides = [1, 1]} : vector<32x32xf32> to vector<8x32xf32>
    %c0_12 = arith.constant 0 : index
    %c0_13 = arith.constant 0 : index
    %29 = vector.load %arg5[%c0_12, %c0_13] : memref<8x128xf32, #tpu.memory_space<vmem>>, vector<8x32xf32>
    tpu.vector_store %arg5[%c0_12, %c0_13], %28 {strides = array<i32>} : memref<8x128xf32, #tpu.memory_space<vmem>>, vector<8x32xf32>,
    %30 = vector.extract_strided_slice %27 {offsets = [8, 0], sizes = [8, 32], strides = [1, 1]} : vector<32x32xf32> to vector<8x32xf32>
    %c0_14 = arith.constant 0 : index
    %c32 = arith.constant 32 : index
    %31 = vector.load %arg5[%c0_14, %c32] : memref<8x128xf32, #tpu.memory_space<vmem>>, vector<8x32xf32>
    tpu.vector_store %arg5[%c0_14, %c32], %30 {strides = array<i32>} : memref<8x128xf32, #tpu.memory_space<vmem>>, vector<8x32xf32>,
    %32 = vector.extract_strided_slice %27 {offsets = [16, 0], sizes = [8, 32], strides = [1, 1]} : vector<32x32xf32> to vector<8x32xf32>
    %c0_15 = arith.constant 0 : index
    %c64 = arith.constant 64 : index
    %33 = vector.load %arg5[%c0_15, %c64] : memref<8x128xf32, #tpu.memory_space<vmem>>, vector<8x32xf32>
    tpu.vector_store %arg5[%c0_15, %c64], %32 {strides = array<i32>} : memref<8x128xf32, #tpu.memory_space<vmem>>, vector<8x32xf32>,
    %34 = vector.extract_strided_slice %27 {offsets = [24, 0], sizes = [8, 32], strides = [1, 1]} : vector<32x32xf32> to vector<8x32xf32>
    %c0_16 = arith.constant 0 : index
    %c96 = arith.constant 96 : index
    %35 = vector.load %arg5[%c0_16, %c96] : memref<8x128xf32, #tpu.memory_space<vmem>>, vector<8x32xf32>
    tpu.vector_store %arg5[%c0_16, %c96], %34 {strides = array<i32>} : memref<8x128xf32, #tpu.memory_space<vmem>>, vector<8x32xf32>,
    return
  }
  func.func @transform_0(%arg0: i32) -> (i32, i32, i32) {
    %c0_i32 = arith.constant 0 : i32
    %c0_i32_0 = arith.constant 0 : i32
    %c0_i32_1 = arith.constant 0 : i32
    return %arg0, %c0_i32, %c0_i32_0 : i32, i32, i32
  }
  func.func @transform_1(%arg0: i32) -> (i32, i32) {
    %c0_i32 = arith.constant 0 : i32
    %c0_i32_0 = arith.constant 0 : i32
    %c0_i32_1 = arith.constant 0 : i32
    return %c0_i32, %c0_i32_0 : i32, i32
  }
  func.func @transform_2(%arg0: i32) -> (i32, i32) {
    %c0_i32 = arith.constant 0 : i32
    %c0_i32_0 = arith.constant 0 : i32
    %c0_i32_1 = arith.constant 0 : i32
    return %c0_i32, %c0_i32_0 : i32, i32
  }
  func.func @transform_3(%arg0: i32) -> (i32, i32) {
    %c0_i32 = arith.constant 0 : i32
    %c0_i32_0 = arith.constant 0 : i32
    %c0_i32_1 = arith.constant 0 : i32
    return %c0_i32, %c0_i32_0 : i32, i32
  }
  func.func @transform_4(%arg0: i32) -> (i32, i32) {
    %c0_i32 = arith.constant 0 : i32
    %c0_i32_0 = arith.constant 0 : i32
    return %arg0, %c0_i32 : i32, i32
  }
}

module attributes {stable_mosaic.version = 11 : i64} {
  func.func @temporal_attention_kernel(%arg0: i32, %arg1: memref<32x8x32xf32, #tpu.memory_space<vmem>>, %arg2: memref<32x32xf32, #tpu.memory_space<vmem>>, %arg3: memref<1x32xf32, #tpu.memory_space<vmem>>, %arg4: memref<1x32xf32, #tpu.memory_space<vmem>>, %arg5: memref<8x128xf32, #tpu.memory_space<vmem>>) attributes {dimension_semantics = [#tpu.dimension_semantics<parallel>], iteration_bounds = array<i64: 1>, scalar_prefetch = 0 : i64, scratch_operands = 0 : i64, tpu.core_type = #tpu.core_type<tc>, window_params = [{transform_indices = @transform_0, window_bounds = array<i64: 32, 8, 32>}, {pipeline_mode = #tpu.pipeline_mode<synchronous>, transform_indices = @transform_1, window_bounds = array<i64: 32, 32>}, {pipeline_mode = #tpu.pipeline_mode<synchronous>, transform_indices = @transform_2, window_bounds = array<i64: 1, 32>}, {pipeline_mode = #tpu.pipeline_mode<synchronous>, transform_indices = @transform_3, window_bounds = array<i64: 1, 32>}, {transform_indices = @transform_4, window_bounds = array<i64: 8, 128>}]} {
    %c0 = arith.constant 0 : index
    %c0_0 = arith.constant 0 : index
    %c0_1 = arith.constant 0 : index
    %0 = vector.load %arg1[%c0, %c0_0, %c0_1] : memref<32x8x32xf32, #tpu.memory_space<vmem>>, vector<32x8x32xf32>
    %1 = vector.shape_cast %0 : vector<32x8x32xf32> to vector<256x32xf32>
    %c0_2 = arith.constant 0 : index
    %c0_3 = arith.constant 0 : index
    %2 = vector.load %arg2[%c0_2, %c0_3] : memref<32x32xf32, #tpu.memory_space<vmem>>, vector<32x32xf32>
    %cst = arith.constant dense<0.000000e+00> : vector<256x32xf32>
    %3 = tpu.matmul %1, %2, %cst {dimension_numbers = #tpu.dot_dimension_numbers<[1], [1], [0], [0], [0, 0, 1, 0], [], []>} : vector<256x32xf32>, vector<32x32xf32>, vector<256x32xf32> -> vector<256x32xf32>
    %c0_4 = arith.constant 0 : index
    %c0_5 = arith.constant 0 : index
    %4 = vector.load %arg3[%c0_4, %c0_5] : memref<1x32xf32, #tpu.memory_space<vmem>>, vector<1x32xf32>
    %5 = vector.broadcast %4 : vector<1x32xf32> to vector<256x32xf32>
    %6 = arith.addf %3, %5 : vector<256x32xf32>
    %7 = math.tanh %6 : vector<256x32xf32>
    %8 = vector.shape_cast %7 : vector<256x32xf32> to vector<32x8x32xf32>
    %c0_6 = arith.constant 0 : index
    %c0_7 = arith.constant 0 : index
    %9 = vector.load %arg4[%c0_6, %c0_7] : memref<1x32xf32, #tpu.memory_space<vmem>>, vector<1x32xf32>
    %10 = vector.shape_cast %9 : vector<1x32xf32> to vector<1x1x32xf32>
    %11 = vector.broadcast %10 : vector<1x1x32xf32> to vector<32x8x32xf32>
    %12 = arith.mulf %8, %11 : vector<32x8x32xf32>
    %cst_8 = arith.constant dense<0.000000e+00> : vector<32x8xf32>
    %13 = vector.multi_reduction <add>, %12, %cst_8 [2] : vector<32x8x32xf32> to vector<32x8xf32>
    %cst_9 = arith.constant dense<0xFF800000> : vector<32xf32>
    %14 = vector.multi_reduction <maximumf>, %13, %cst_9 [1] : vector<32x8xf32> to vector<32xf32>
    %15 = vector.shape_cast %14 : vector<32xf32> to vector<32x1xf32>
    %16 = vector.broadcast %15 : vector<32x1xf32> to vector<32x8xf32>
    %17 = arith.subf %13, %16 : vector<32x8xf32>
    %18 = math.exp %17 : vector<32x8xf32>
    %cst_10 = arith.constant dense<0.000000e+00> : vector<32xf32>
    %19 = vector.multi_reduction <add>, %18, %cst_10 [1] : vector<32x8xf32> to vector<32xf32>
    %20 = vector.shape_cast %19 : vector<32xf32> to vector<32x1xf32>
    %21 = tpu.reciprocal %20 {approx = true} : vector<32x1xf32> -> vector<32x1xf32>
    %22 = vector.broadcast %21 : vector<32x1xf32> to vector<32x8xf32>
    %23 = arith.mulf %18, %22 : vector<32x8xf32>
    %24 = vector.shape_cast %23 : vector<32x8xf32> to vector<32x8x1xf32>
    %25 = vector.broadcast %24 : vector<32x8x1xf32> to vector<32x8x32xf32>
    %26 = arith.mulf %0, %25 : vector<32x8x32xf32>
    %cst_11 = arith.constant dense<0.000000e+00> : vector<32x32xf32>
    %27 = vector.multi_reduction <add>, %26, %cst_11 [1] : vector<32x8x32xf32> to vector<32x32xf32>
    %28 = vector.extract_strided_slice %27 {offsets = [0, 0], sizes = [8, 32], strides = [1, 1]} : vector<32x32xf32> to vector<8x32xf32>
    %c0_12 = arith.constant 0 : index
    %c0_13 = arith.constant 0 : index
    %29 = vector.load %arg5[%c0_12, %c0_13] : memref<8x128xf32, #tpu.memory_space<vmem>>, vector<8x32xf32>
    tpu.vector_store %arg5[%c0_12, %c0_13], %28 {strides = array<i32>} : memref<8x128xf32, #tpu.memory_space<vmem>>, vector<8x32xf32>,
    %30 = vector.extract_strided_slice %27 {offsets = [8, 0], sizes = [8, 32], strides = [1, 1]} : vector<32x32xf32> to vector<8x32xf32>
    %c0_14 = arith.constant 0 : index
    %c32 = arith.constant 32 : index
    %31 = vector.load %arg5[%c0_14, %c32] : memref<8x128xf32, #tpu.memory_space<vmem>>, vector<8x32xf32>
    tpu.vector_store %arg5[%c0_14, %c32], %30 {strides = array<i32>} : memref<8x128xf32, #tpu.memory_space<vmem>>, vector<8x32xf32>,
    %32 = vector.extract_strided_slice %27 {offsets = [16, 0], sizes = [8, 32], strides = [1, 1]} : vector<32x32xf32> to vector<8x32xf32>
    %c0_15 = arith.constant 0 : index
    %c64 = arith.constant 64 : index
    %33 = vector.load %arg5[%c0_15, %c64] : memref<8x128xf32, #tpu.memory_space<vmem>>, vector<8x32xf32>
    tpu.vector_store %arg5[%c0_15, %c64], %32 {strides = array<i32>} : memref<8x128xf32, #tpu.memory_space<vmem>>, vector<8x32xf32>,
    %34 = vector.extract_strided_slice %27 {offsets = [24, 0], sizes = [8, 32], strides = [1, 1]} : vector<32x32xf32> to vector<8x32xf32>
    %c0_16 = arith.constant 0 : index
    %c96 = arith.constant 96 : index
    %35 = vector.load %arg5[%c0_16, %c96] : memref<8x128xf32, #tpu.memory_space<vmem>>, vector<8x32xf32>
    tpu.vector_store %arg5[%c0_16, %c96], %34 {strides = array<i32>} : memref<8x128xf32, #tpu.memory_space<vmem>>, vector<8x32xf32>,
    return
  }
  func.func @transform_0(%arg0: i32) -> (i32, i32, i32) {
    %c0_i32 = arith.constant 0 : i32
    %c0_i32_0 = arith.constant 0 : i32
    %c0_i32_1 = arith.constant 0 : i32
    return %arg0, %c0_i32, %c0_i32_0 : i32, i32, i32
  }
  func.func @transform_1(%arg0: i32) -> (i32, i32) {
    %c0_i32 = arith.constant 0 : i32
    %c0_i32_0 = arith.constant 0 : i32
    %c0_i32_1 = arith.constant 0 : i32
    return %c0_i32, %c0_i32_0 : i32, i32
  }
  func.func @transform_2(%arg0: i32) -> (i32, i32) {
    %c0_i32 = arith.constant 0 : i32
    %c0_i32_0 = arith.constant 0 : i32
    %c0_i32_1 = arith.constant 0 : i32
    return %c0_i32, %c0_i32_0 : i32, i32
  }
  func.func @transform_3(%arg0: i32) -> (i32, i32) {
    %c0_i32 = arith.constant 0 : i32
    %c0_i32_0 = arith.constant 0 : i32
    %c0_i32_1 = arith.constant 0 : i32
    return %c0_i32, %c0_i32_0 : i32, i32
  }
  func.func @transform_4(%arg0: i32) -> (i32, i32) {
    %c0_i32 = arith.constant 0 : i32
    %c0_i32_0 = arith.constant 0 : i32
    return %arg0, %c0_i32 : i32, i32
  }
}

</mosaic_0001>

<llo_original>
// kernel: tpu_custom_call.1
$region0: #{tpu_custom_call.1}
  #allocation0 [shape = 'u32[]', space=smem, size = 0x4, offset = 0x4, fixed_abs, tag = 'smem constant byte address 0x4 - core index']
  #allocation1 [shape = 'u32[144,128]{1,0:T(1,128)}', space=vmem, size = 0x12000, scoped, tag = 'internal scratch']
  %s0 = inlined_call_operand.hbm [shape: f32[32,8,32], index: 0, kind: input, shape index: {}]
  %s1 = inlined_call_operand.hbm [shape: f32[32,32], index: 1, kind: input, shape index: {}]
  %s2 = inlined_call_operand.vmem [shape: f32[1,32], index: 2, kind: input, shape index: {}]
  %s3 = inlined_call_operand.vmem [shape: f32[1,32], index: 3, kind: input, shape index: {}]
  %s4 = inlined_call_operand.hbm [shape: f32[8,128], index: 4, kind: output, shape index: {}]
  %s5 = sld [smem:[#allocation0]]
  $region34: #{tpu_custom_call.1} parent=0
    _
  %s7 = ssub.s32 1, %s5
  %s8 = scalar_select 0, %s7, %s5
  $region1: #{tpu_custom_call.1} parent=0
    #allocation2 [shape = 'u8[131072]{0}', space=vmem, size = 0x20000, scoped, tag = 'input window, operand 0, single buffered']
    #allocation3 [shape = 's32[1]{0}', space=sflag, size = 0x4, scoped, tag = 'scoped memory for tpu_custom_call.1']
    #allocation4 [shape = 's32[1]{0}', space=sflag, size = 0x4, scoped, tag = 'scoped memory for tpu_custom_call.1']
    #allocation5 [shape = 'u8[16384]{0}', space=vmem, size = 0x4000, scoped, tag = 'input window, operand 1, single buffered']
    #allocation6 [shape = 's32[1]{0}', space=sflag, size = 0x4, scoped, tag = 'scoped memory for tpu_custom_call.1']
    #allocation7 [shape = 'u8[4096]{0}', space=vmem, size = 0x1000, scoped, tag = 'output window, operand 0, single buffered']
    %9 = vsyncpa [#allocation3], 0
    %10 = vsyncpa [#allocation6], 0
    %11 = vsyncpa [#allocation4], 0
    // Predicated region
    $region2: #{tpu_custom_call.1} parent=1 // pred_check
      _
    $region3: #{tpu_custom_call.1} parent=1 // pred_check_branch
      %13 = sbr.rel (0) target = $region5
    $region4: #{tpu_custom_call.1} parent=1 // pred_region
      %s15 = ssub.s32 4096, 4096
      %16 = vsyncadd [#allocation3], %s15
      %s17 = sshll.u32 [#allocation2], 4
      %s18 = int_to_ptr.vmem [resolvable:$true] %s17
      %23 = dma.hbm_to_vmem [thread:$0]  %s0, 4096, %s18, [#allocation3], 128, 128, 8
    $region5: #{tpu_custom_call.1} parent=1 // pred_fallthru
      _
    // Predicated region
    $region6: #{tpu_custom_call.1} parent=1 // pred_check
      _
    $region7: #{tpu_custom_call.1} parent=1 // pred_check_branch
      %25 = sbr.rel (0) target = $region9
    $region8: #{tpu_custom_call.1} parent=1 // pred_region
      %s27 = ssub.s32 512, 512
      %28 = vsyncadd [#allocation6], %s27
      %s29 = sshll.u32 [#allocation5], 4
      %s30 = int_to_ptr.vmem [resolvable:$true] %s29
      %35 = dma.hbm_to_vmem [thread:$0]  %s1, 512, %s30, [#allocation6], 128, 128, 8
    $region9: #{tpu_custom_call.1} parent=1 // pred_fallthru
      _
    // Predicated region
    $region10: #{tpu_custom_call.1} parent=1 // pred_check
      _
    $region11: #{tpu_custom_call.1} parent=1 // pred_check_branch
      %37 = sbr.rel (0) target = $region13
    $region12: #{tpu_custom_call.1} parent=1 // pred_region
      _
    $region13: #{tpu_custom_call.1} parent=1 // pred_fallthru
      _
    // Predicated region
    $region14: #{tpu_custom_call.1} parent=1 // pred_check
      _
    $region15: #{tpu_custom_call.1} parent=1 // pred_check_branch
      %39 = sbr.rel (0) target = $region17
    $region16: #{tpu_custom_call.1} parent=1 // pred_region
      _
    $region17: #{tpu_custom_call.1} parent=1 // pred_fallthru
      _
    // Predicated region
    $region18: #{tpu_custom_call.1} parent=1 // pred_check
      _
    $region19: #{tpu_custom_call.1} parent=1 // pred_check_branch
      %41 = sbr.rel (0) target = $region21
    $region20: #{tpu_custom_call.1} parent=1 // pred_region
      %42 = dma.done [#allocation3], 4096
    $region21: #{tpu_custom_call.1} parent=1 // pred_fallthru
      _
    // Predicated region
    $region22: #{tpu_custom_call.1} parent=1 // pred_check
      _
    $region23: #{tpu_custom_call.1} parent=1 // pred_check_branch
      %44 = sbr.rel (0) target = $region25
    $region24: #{tpu_custom_call.1} parent=1 // pred_region
      %45 = dma.done [#allocation6], 512
    $region25: #{tpu_custom_call.1} parent=1 // pred_fallthru
      _
    %v46 = vld [vmem:[#allocation2] sm:$0xff]
    %v47 = vld [vmem:[#allocation2 + $0x8] sm:$0xff]
    %v48 = vld [vmem:[#allocation2 + $0x10] sm:$0xff]
    %v49 = vld [vmem:[#allocation2 + $0x18] sm:$0xff]
    %v50 = vld [vmem:[#allocation2 + $0x20] sm:$0xff]
    %v51 = vld [vmem:[#allocation2 + $0x28] sm:$0xff]
    %v52 = vld [vmem:[#allocation2 + $0x30] sm:$0xff]
    %v53 = vld [vmem:[#allocation2 + $0x38] sm:$0xff]
    %v54 = vld [vmem:[#allocation2 + $0x40] sm:$0xff]
    %v55 = vld [vmem:[#allocation2 + $0x48] sm:$0xff]
    %v56 = vld [vmem:[#allocation2 + $0x50] sm:$0xff]
    %v57 = vld [vmem:[#allocation2 + $0x58] sm:$0xff]
    %v58 = vld [vmem:[#allocation2 + $0x60] sm:$0xff]
    %v59 = vld [vmem:[#allocation2 + $0x68] sm:$0xff]
    %v60 = vld [vmem:[#allocation2 + $0x70] sm:$0xff]
    %v61 = vld [vmem:[#allocation2 + $0x78] sm:$0xff]
    %v62 = vld [vmem:[#allocation2 + $0x80] sm:$0xff]
    %v63 = vld [vmem:[#allocation2 + $0x88] sm:$0xff]
    %v64 = vld [vmem:[#allocation2 + $0x90] sm:$0xff]
    %v65 = vld [vmem:[#allocation2 + $0x98] sm:$0xff]
    %v66 = vld [vmem:[#allocation2 + $0xa0] sm:$0xff]
    %v67 = vld [vmem:[#allocation2 + $0xa8] sm:$0xff]
    %v68 = vld [vmem:[#allocation2 + $0xb0] sm:$0xff]
    %v69 = vld [vmem:[#allocation2 + $0xb8] sm:$0xff]
    %v70 = vld [vmem:[#allocation2 + $0xc0] sm:$0xff]
    %v71 = vld [vmem:[#allocation2 + $0xc8] sm:$0xff]
    %v72 = vld [vmem:[#allocation2 + $0xd0] sm:$0xff]
    %v73 = vld [vmem:[#allocation2 + $0xd8] sm:$0xff]
    %v74 = vld [vmem:[#allocation2 + $0xe0] sm:$0xff]
    %v75 = vld [vmem:[#allocation2 + $0xe8] sm:$0xff]
    %v76 = vld [vmem:[#allocation2 + $0xf0] sm:$0xff]
    %v77 = vld [vmem:[#allocation2 + $0xf8] sm:$0xff]
    %v78 = vld [vmem:[#allocation5] sm:$0xff]
    %v79 = vld [vmem:[#allocation5 + $0x8] sm:$0xff]
    %v80 = vld [vmem:[#allocation5 + $0x10] sm:$0xff]
    %v81 = vld [vmem:[#allocation5 + $0x18] sm:$0xff]
    %v82 = vld [vmem:[%s2] sm:$0x1]
    %v84 = vlaneseq
    %v85 = vshrl.u32 %v84, 7
    %v86 = vsub.s32 0, %v85
    %v87 = vrot.slane %v82, %v86
    %vm89 = vcmask 261120
    %v91 = vsel %vm89, %v46, 0
    %v94 = vsel %vm89, %v47, 0
    %v97 = vsel %vm89, %v48, 0
    %v100 = vsel %vm89, %v49, 0
    %v103 = vsel %vm89, %v50, 0
    %v106 = vsel %vm89, %v51, 0
    %v109 = vsel %vm89, %v52, 0
    %v112 = vsel %vm89, %v53, 0
    %v115 = vsel %vm89, %v54, 0
    %v118 = vsel %vm89, %v55, 0
    %v121 = vsel %vm89, %v56, 0
    %v124 = vsel %vm89, %v57, 0
    %v127 = vsel %vm89, %v58, 0
    %v130 = vsel %vm89, %v59, 0
    %v133 = vsel %vm89, %v60, 0
    %v136 = vsel %vm89, %v61, 0
    %v139 = vsel %vm89, %v62, 0
    %v142 = vsel %vm89, %v63, 0
    %v145 = vsel %vm89, %v64, 0
    %v148 = vsel %vm89, %v65, 0
    %v151 = vsel %vm89, %v66, 0
    %v154 = vsel %vm89, %v67, 0
    %v157 = vsel %vm89, %v68, 0
    %v160 = vsel %vm89, %v69, 0
    %v163 = vsel %vm89, %v70, 0
    %v166 = vsel %vm89, %v71, 0
    %v169 = vsel %vm89, %v72, 0
    %v172 = vsel %vm89, %v73, 0
    %v175 = vsel %vm89, %v74, 0
    %v178 = vsel %vm89, %v75, 0
    %v181 = vsel %vm89, %v76, 0
    %v184 = vsel %vm89, %v77, 0
    %v187 = vsel %vm89, %v78, 0
    %v190 = vsel %vm89, %v79, 0
    %v193 = vsel %vm89, %v80, 0
    %v196 = vsel %vm89, %v81, 0
    %198 = vmatprep.subr.mxu0 0.0
    %199 = vmatpush1.xpose.msra.mxu0 %v187
    %200 = vmatprep.subr.mxu0 0.0
    %201 = vmatpush1.xpose.msra.mxu0 %v190
    %202 = vmatprep.subr.mxu0 0.0
    %203 = vmatpush1.xpose.msra.mxu0 %v193
    %204 = vmatprep.subr.mxu0 0.0
    %205 = vmatpush1.xpose.msra.mxu0 %v196
    %206 = vmatprep.subr.mxu0 0.0
    %207 = vmatpush1.xpose.msra.mxu0 0.0
    %208 = vmatprep.subr.mxu0 0.0
    %209 = vmatpush1.xpose.msra.mxu0 0.0
    %210 = vmatprep.subr.mxu0 0.0
    %211 = vmatpush1.xpose.msra.mxu0 0.0
    %212 = vmatprep.subr.mxu0 0.0
    %213 = vmatpush1.xpose.msra.mxu0 0.0
    %214 = vmatprep.subr.mxu0 0.0
    %215 = vmatpush1.xpose.msra.mxu0 0.0
    %216 = vmatprep.subr.mxu0 0.0
    %217 = vmatpush1.xpose.msra.mxu0 0.0
    %218 = vmatprep.subr.mxu0 0.0
    %219 = vmatpush1.xpose.msra.mxu0 0.0
    %220 = vmatprep.subr.mxu0 0.0
    %221 = vmatpush1.xpose.msra.mxu0 0.0
    %222 = vmatprep.subr.mxu0 0.0
    %223 = vmatpush1.xpose.msra.mxu0 0.0
    %224 = vmatprep.subr.mxu0 0.0
    %225 = vmatpush1.xpose.msra.mxu0 0.0
    %226 = vmatprep.subr.mxu0 0.0
    %227 = vmatpush1.xpose.msra.mxu0 0.0
    %228 = vmatprep.subr.mxu0 0.0
    %229 = vmatpush1.xpose.msra.mxu0 0.0
    %230 = vmatprep.subr.mxu0 0.0
    %231 = vmatpush1.xpose.msra.mxu0 0.0
    %232 = vmatprep.subr.mxu0 0.0
    %233 = vmatpush1.xpose.msra.mxu0 0.0
    %234 = vmatprep.subr.mxu0 0.0
    %235 = vmatpush1.xpose.msra.mxu0 0.0
    %236 = vmatprep.subr.mxu0 0.0
    %237 = vmatpush1.xpose.msra.mxu0 0.0
    %238 = vmatprep.subr.mxu0 0.0
    %239 = vmatpush1.xpose.msra.mxu0 0.0
    %240 = vmatprep.subr.mxu0 0.0
    %241 = vmatpush1.xpose.msra.mxu0 0.0
    %242 = vmatprep.subr.mxu0 0.0
    %243 = vmatpush1.xpose.msra.mxu0 0.0
    %244 = vmatprep.subr.mxu0 0.0
    %245 = vmatpush1.xpose.msra.mxu0 0.0
    %246 = vmatprep.subr.mxu0 0.0
    %247 = vmatpush1.xpose.msra.mxu0 0.0
    %248 = vmatprep.subr.mxu0 0.0
    %249 = vmatpush1.xpose.msra.mxu0 0.0
    %250 = vmatprep.subr.mxu0 0.0
    %251 = vmatpush1.xpose.msra.mxu0 0.0
    %252 = vmatprep.subr.mxu0 0.0
    %253 = vmatpush1.xpose.msra.mxu0 0.0
    %254 = vmatprep.subr.mxu0 0.0
    %255 = vmatpush1.xpose.msra.mxu0 0.0
    %256 = vmatprep.subr.mxu0 0.0
    %257 = vmatpush1.xpose.msra.mxu0 0.0
    %258 = vmatprep.subr.mxu0 0.0
    %259 = vmatpush1.xpose.msra.mxu0 0.0
    %260 = vmatprep.subr.mxu0 0.0
    %261 = vmatpush1.xpose.msra.mxu0 0.0
    %262 = vmatprep.mubr.f32.mxu0 0.0
    %263 = vmatmul.mubr.f32.gmra.mrb[0].mxu0 %v91
    %v264 = vpop.f32.mrb[0].mxu0
    %v265 = vadd.f32 %v87, %v264
    %v266 = vpop.f32.mrb[0].mxu0
    %267 = vmatprep.mubr.f32.mxu0 0.0
    %268 = vmatmul.mubr.f32.gmra.mrb[0].mxu0 %v94
    %v269 = vpop.f32.mrb[0].mxu0
    %v270 = vadd.f32 %v87, %v269
    %v271 = vpop.f32.mrb[0].mxu0
    %272 = vmatprep.mubr.f32.mxu0 0.0
    %273 = vmatmul.mubr.f32.gmra.mrb[0].mxu0 %v97
    %v274 = vpop.f32.mrb[0].mxu0
    %v275 = vadd.f32 %v87, %v274
    %v276 = vpop.f32.mrb[0].mxu0
    %277 = vmatprep.mubr.f32.mxu0 0.0
    %278 = vmatmul.mubr.f32.gmra.mrb[0].mxu0 %v100
    %v279 = vpop.f32.mrb[0].mxu0
    %v280 = vadd.f32 %v87, %v279
    %v281 = vpop.f32.mrb[0].mxu0
    %282 = vmatprep.mubr.f32.mxu0 0.0
    %283 = vmatmul.mubr.f32.gmra.mrb[0].mxu0 %v103
    %v284 = vpop.f32.mrb[0].mxu0
    %v285 = vadd.f32 %v87, %v284
    %v286 = vpop.f32.mrb[0].mxu0
    %287 = vmatprep.mubr.f32.mxu0 0.0
    %288 = vmatmul.mubr.f32.gmra.mrb[0].mxu0 %v106
    %v289 = vpop.f32.mrb[0].mxu0
    %v290 = vadd.f32 %v87, %v289
    %v291 = vpop.f32.mrb[0].mxu0
    %292 = vmatprep.mubr.f32.mxu0 0.0
    %293 = vmatmul.mubr.f32.gmra.mrb[0].mxu0 %v109
    %v294 = vpop.f32.mrb[0].mxu0
    %v295 = vadd.f32 %v87, %v294
    %v296 = vpop.f32.mrb[0].mxu0
    %297 = vmatprep.mubr.f32.mxu0 0.0
    %298 = vmatmul.mubr.f32.gmra.mrb[0].mxu0 %v112
    %v299 = vpop.f32.mrb[0].mxu0
    %v300 = vadd.f32 %v87, %v299
    %v301 = vpop.f32.mrb[0].mxu0
    %302 = vmatprep.mubr.f32.mxu0 0.0
    %303 = vmatmul.mubr.f32.gmra.mrb[0].mxu0 %v115
    %v304 = vpop.f32.mrb[0].mxu0
    %v305 = vadd.f32 %v87, %v304
    %v306 = vpop.f32.mrb[0].mxu0
    %307 = vmatprep.mubr.f32.mxu0 0.0
    %308 = vmatmul.mubr.f32.gmra.mrb[0].mxu0 %v118
    %v309 = vpop.f32.mrb[0].mxu0
    %v310 = vadd.f32 %v87, %v309
    %v311 = vpop.f32.mrb[0].mxu0
    %312 = vmatprep.mubr.f32.mxu0 0.0
    %313 = vmatmul.mubr.f32.gmra.mrb[0].mxu0 %v121
    %v314 = vpop.f32.mrb[0].mxu0
    %v315 = vadd.f32 %v87, %v314
    %v316 = vpop.f32.mrb[0].mxu0
    %317 = vmatprep.mubr.f32.mxu0 0.0
    %318 = vmatmul.mubr.f32.gmra.mrb[0].mxu0 %v124
    %v319 = vpop.f32.mrb[0].mxu0
    %v320 = vadd.f32 %v87, %v319
    %v321 = vpop.f32.mrb[0].mxu0
    %322 = vmatprep.mubr.f32.mxu0 0.0
    %323 = vmatmul.mubr.f32.gmra.mrb[0].mxu0 %v127
    %v324 = vpop.f32.mrb[0].mxu0
    %v325 = vadd.f32 %v87, %v324
    %v326 = vpop.f32.mrb[0].mxu0
    %327 = vmatprep.mubr.f32.mxu0 0.0
    %328 = vmatmul.mubr.f32.gmra.mrb[0].mxu0 %v130
    %v329 = vpop.f32.mrb[0].mxu0
    %v330 = vadd.f32 %v87, %v329
    %v331 = vpop.f32.mrb[0].mxu0
    %332 = vmatprep.mubr.f32.mxu0 0.0
    %333 = vmatmul.mubr.f32.gmra.mrb[0].mxu0 %v133
    %v334 = vpop.f32.mrb[0].mxu0
    %v335 = vadd.f32 %v87, %v334
    %v336 = vpop.f32.mrb[0].mxu0
    %337 = vmatprep.mubr.f32.mxu0 0.0
    %338 = vmatmul.mubr.f32.gmra.mrb[0].mxu0 %v136
    %v339 = vpop.f32.mrb[0].mxu0
    %v340 = vadd.f32 %v87, %v339
    %v341 = vpop.f32.mrb[0].mxu0
    %342 = vmatprep.mubr.f32.mxu0 0.0
    %343 = vmatmul.mubr.f32.gmra.mrb[0].mxu0 %v139
    %v344 = vpop.f32.mrb[0].mxu0
    %v345 = vadd.f32 %v87, %v344
    %v346 = vpop.f32.mrb[0].mxu0
    %347 = vmatprep.mubr.f32.mxu0 0.0
    %348 = vmatmul.mubr.f32.gmra.mrb[0].mxu0 %v142
    %v349 = vpop.f32.mrb[0].mxu0
    %v350 = vadd.f32 %v87, %v349
    %v351 = vpop.f32.mrb[0].mxu0
    %352 = vmatprep.mubr.f32.mxu0 0.0
    %353 = vmatmul.mubr.f32.gmra.mrb[0].mxu0 %v145
    %v354 = vpop.f32.mrb[0].mxu0
    %v355 = vadd.f32 %v87, %v354
    %v356 = vpop.f32.mrb[0].mxu0
    %357 = vmatprep.mubr.f32.mxu0 0.0
    %358 = vmatmul.mubr.f32.gmra.mrb[0].mxu0 %v148
    %v359 = vpop.f32.mrb[0].mxu0
    %v360 = vadd.f32 %v87, %v359
    %v361 = vpop.f32.mrb[0].mxu0
    %362 = vmatprep.mubr.f32.mxu0 0.0
    %363 = vmatmul.mubr.f32.gmra.mrb[0].mxu0 %v151
    %v364 = vpop.f32.mrb[0].mxu0
    %v365 = vadd.f32 %v87, %v364
    %v366 = vpop.f32.mrb[0].mxu0
    %367 = vmatprep.mubr.f32.mxu0 0.0
    %368 = vmatmul.mubr.f32.gmra.mrb[0].mxu0 %v154
    %v369 = vpop.f32.mrb[0].mxu0
    %v370 = vadd.f32 %v87, %v369
    %v371 = vpop.f32.mrb[0].mxu0
    %372 = vmatprep.mubr.f32.mxu0 0.0
    %373 = vmatmul.mubr.f32.gmra.mrb[0].mxu0 %v157
    %v374 = vpop.f32.mrb[0].mxu0
    %v375 = vadd.f32 %v87, %v374
    %v376 = vpop.f32.mrb[0].mxu0
    %377 = vmatprep.mubr.f32.mxu0 0.0
    %378 = vmatmul.mubr.f32.gmra.mrb[0].mxu0 %v160
    %v379 = vpop.f32.mrb[0].mxu0
    %v380 = vadd.f32 %v87, %v379
    %v381 = vpop.f32.mrb[0].mxu0
    %382 = vmatprep.mubr.f32.mxu0 0.0
    %383 = vmatmul.mubr.f32.gmra.mrb[0].mxu0 %v163
    %v384 = vpop.f32.mrb[0].mxu0
    %v385 = vadd.f32 %v87, %v384
    %v386 = vpop.f32.mrb[0].mxu0
    %387 = vmatprep.mubr.f32.mxu0 0.0
    %388 = vmatmul.mubr.f32.gmra.mrb[0].mxu0 %v166
    %v389 = vpop.f32.mrb[0].mxu0
    %v390 = vadd.f32 %v87, %v389
    %v391 = vpop.f32.mrb[0].mxu0
    %392 = vmatprep.mubr.f32.mxu0 0.0
    %393 = vmatmul.mubr.f32.gmra.mrb[0].mxu0 %v169
    %v394 = vpop.f32.mrb[0].mxu0
    %v395 = vadd.f32 %v87, %v394
    %v396 = vpop.f32.mrb[0].mxu0
    %397 = vmatprep.mubr.f32.mxu0 0.0
    %398 = vmatmul.mubr.f32.gmra.mrb[0].mxu0 %v172
    %v399 = vpop.f32.mrb[0].mxu0
    %v400 = vadd.f32 %v87, %v399
    %v401 = vpop.f32.mrb[0].mxu0
    %402 = vmatprep.mubr.f32.mxu0 0.0
    %403 = vmatmul.mubr.f32.gmra.mrb[0].mxu0 %v175
    %v404 = vpop.f32.mrb[0].mxu0
    %v405 = vadd.f32 %v87, %v404
    %v406 = vpop.f32.mrb[0].mxu0
    %407 = vmatprep.mubr.f32.mxu0 0.0
    %408 = vmatmul.mubr.f32.gmra.mrb[0].mxu0 %v178
    %v409 = vpop.f32.mrb[0].mxu0
    %v410 = vadd.f32 %v87, %v409
    %v411 = vpop.f32.mrb[0].mxu0
    %412 = vmatprep.mubr.f32.mxu0 0.0
    %413 = vmatmul.mubr.f32.gmra.mrb[0].mxu0 %v181
    %v414 = vpop.f32.mrb[0].mxu0
    %v415 = vadd.f32 %v87, %v414
    %v416 = vpop.f32.mrb[0].mxu0
    %417 = vmatprep.mubr.f32.mxu0 0.0
    %418 = vmatmul.mubr.f32.gmra.mrb[0].mxu0 %v184
    %v419 = vpop.f32.mrb[0].mxu0
    %v420 = vadd.f32 %v87, %v419
    %v421 = vpop.f32.mrb[0].mxu0
    %422 = vdwg.mxu0
    %v423 = vtanh.pop %v265
    %v424 = vtanh.pop %v270
    %v425 = vtanh.pop %v275
    %v426 = vtanh.pop %v280
    %v427 = vtanh.pop %v285
    %v428 = vtanh.pop %v290
    %v429 = vtanh.pop %v295
    %v430 = vtanh.pop %v300
    %v431 = vtanh.pop %v305
    %v432 = vtanh.pop %v310
    %v433 = vtanh.pop %v315
    %v434 = vtanh.pop %v320
    %v435 = vtanh.pop %v325
    %v436 = vtanh.pop %v330
    %v437 = vtanh.pop %v335
    %v438 = vtanh.pop %v340
    %v439 = vtanh.pop %v345
    %v440 = vtanh.pop %v350
    %v441 = vtanh.pop %v355
    %v442 = vtanh.pop %v360
    %v443 = vtanh.pop %v365
    %v444 = vtanh.pop %v370
    %v445 = vtanh.pop %v375
    %v446 = vtanh.pop %v380
    %v447 = vtanh.pop %v385
    %v448 = vtanh.pop %v390
    %v449 = vtanh.pop %v395
    %v450 = vtanh.pop %v400
    %v451 = vtanh.pop %v405
    %v452 = vtanh.pop %v410
    %v453 = vtanh.pop %v415
    %v454 = vtanh.pop %v420
    %v455 = vld [vmem:[%s3] sm:$0x1]
    %v457 = vlaneseq
    %v458 = vshrl.u32 %v457, 7
    %v459 = vsub.s32 0, %v458
    %v460 = vrot.slane %v455, %v459
    %v462 = vmul.f32 %v423, %v460
    %v463 = vmul.f32 %v424, %v460
    %v464 = vmul.f32 %v425, %v460
    %v465 = vmul.f32 %v426, %v460
    %v466 = vmul.f32 %v427, %v460
    %v467 = vmul.f32 %v428, %v460
    %v468 = vmul.f32 %v429, %v460
    %v469 = vmul.f32 %v430, %v460
    %v470 = vmul.f32 %v431, %v460
    %v471 = vmul.f32 %v432, %v460
    %v472 = vmul.f32 %v433, %v460
    %v473 = vmul.f32 %v434, %v460
    %v474 = vmul.f32 %v435, %v460
    %v475 = vmul.f32 %v436, %v460
    %v476 = vmul.f32 %v437, %v460
    %v477 = vmul.f32 %v438, %v460
    %v478 = vmul.f32 %v439, %v460
    %v479 = vmul.f32 %v440, %v460
    %v480 = vmul.f32 %v441, %v460
    %v481 = vmul.f32 %v442, %v460
    %v482 = vmul.f32 %v443, %v460
    %v483 = vmul.f32 %v444, %v460
    %v484 = vmul.f32 %v445, %v460
    %v485 = vmul.f32 %v446, %v460
    %v486 = vmul.f32 %v447, %v460
    %v487 = vmul.f32 %v448, %v460
    %v488 = vmul.f32 %v449, %v460
    %v489 = vmul.f32 %v450, %v460
    %v490 = vmul.f32 %v451, %v460
    %v491 = vmul.f32 %v452, %v460
    %v492 = vmul.f32 %v453, %v460
    %v493 = vmul.f32 %v454, %v460
    %v494 = vsel %vm89, %v462, 0.0
    %495 = vadd.xlane.f32.xlu0 %v494
    %v496 = vpop.xlane.xlu0 %495
    %v497 = vsel %vm89, %v463, 0.0
    %498 = vadd.xlane.f32.xlu0 %v497
    %v499 = vpop.xlane.xlu0 %498
    %v500 = vsel %vm89, %v464, 0.0
    %501 = vadd.xlane.f32.xlu0 %v500
    %v502 = vpop.xlane.xlu0 %501
    %v503 = vsel %vm89, %v465, 0.0
    %504 = vadd.xlane.f32.xlu0 %v503
    %v505 = vpop.xlane.xlu0 %504
    %v506 = vsel %vm89, %v466, 0.0
    %507 = vadd.xlane.f32.xlu0 %v506
    %v508 = vpop.xlane.xlu0 %507
    %v509 = vsel %vm89, %v467, 0.0
    %510 = vadd.xlane.f32.xlu0 %v509
    %v511 = vpop.xlane.xlu0 %510
    %v512 = vsel %vm89, %v468, 0.0
    %513 = vadd.xlane.f32.xlu0 %v512
    %v514 = vpop.xlane.xlu0 %513
    %v515 = vsel %vm89, %v469, 0.0
    %516 = vadd.xlane.f32.xlu0 %v515
    %v517 = vpop.xlane.xlu0 %516
    %v518 = vsel %vm89, %v470, 0.0
    %519 = vadd.xlane.f32.xlu0 %v518
    %v520 = vpop.xlane.xlu0 %519
    %v521 = vsel %vm89, %v471, 0.0
    %522 = vadd.xlane.f32.xlu0 %v521
    %v523 = vpop.xlane.xlu0 %522
    %v524 = vsel %vm89, %v472, 0.0
    %525 = vadd.xlane.f32.xlu0 %v524
    %v526 = vpop.xlane.xlu0 %525
    %v527 = vsel %vm89, %v473, 0.0
    %528 = vadd.xlane.f32.xlu0 %v527
    %v529 = vpop.xlane.xlu0 %528
    %v530 = vsel %vm89, %v474, 0.0
    %531 = vadd.xlane.f32.xlu0 %v530
    %v532 = vpop.xlane.xlu0 %531
    %v533 = vsel %vm89, %v475, 0.0
    %534 = vadd.xlane.f32.xlu0 %v533
    %v535 = vpop.xlane.xlu0 %534
    %v536 = vsel %vm89, %v476, 0.0
    %537 = vadd.xlane.f32.xlu0 %v536
    %v538 = vpop.xlane.xlu0 %537
    %v539 = vsel %vm89, %v477, 0.0
    %540 = vadd.xlane.f32.xlu0 %v539
    %v541 = vpop.xlane.xlu0 %540
    %v542 = vsel %vm89, %v478, 0.0
    %543 = vadd.xlane.f32.xlu0 %v542
    %v544 = vpop.xlane.xlu0 %543
    %v545 = vsel %vm89, %v479, 0.0
    %546 = vadd.xlane.f32.xlu0 %v545
    %v547 = vpop.xlane.xlu0 %546
    %v548 = vsel %vm89, %v480, 0.0
    %549 = vadd.xlane.f32.xlu0 %v548
    %v550 = vpop.xlane.xlu0 %549
    %v551 = vsel %vm89, %v481, 0.0
    %552 = vadd.xlane.f32.xlu0 %v551
    %v553 = vpop.xlane.xlu0 %552
    %v554 = vsel %vm89, %v482, 0.0
    %555 = vadd.xlane.f32.xlu0 %v554
    %v556 = vpop.xlane.xlu0 %555
    %v557 = vsel %vm89, %v483, 0.0
    %558 = vadd.xlane.f32.xlu0 %v557
    %v559 = vpop.xlane.xlu0 %558
    %v560 = vsel %vm89, %v484, 0.0
    %561 = vadd.xlane.f32.xlu0 %v560
    %v562 = vpop.xlane.xlu0 %561
    %v563 = vsel %vm89, %v485, 0.0
    %564 = vadd.xlane.f32.xlu0 %v563
    %v565 = vpop.xlane.xlu0 %564
    %v566 = vsel %vm89, %v486, 0.0
    %567 = vadd.xlane.f32.xlu0 %v566
    %v568 = vpop.xlane.xlu0 %567
    %v569 = vsel %vm89, %v487, 0.0
    %570 = vadd.xlane.f32.xlu0 %v569
    %v571 = vpop.xlane.xlu0 %570
    %v572 = vsel %vm89, %v488, 0.0
    %573 = vadd.xlane.f32.xlu0 %v572
    %v574 = vpop.xlane.xlu0 %573
    %v575 = vsel %vm89, %v489, 0.0
    %576 = vadd.xlane.f32.xlu0 %v575
    %v577 = vpop.xlane.xlu0 %576
    %v578 = vsel %vm89, %v490, 0.0
    %579 = vadd.xlane.f32.xlu0 %v578
    %v580 = vpop.xlane.xlu0 %579
    %v581 = vsel %vm89, %v491, 0.0
    %582 = vadd.xlane.f32.xlu0 %v581
    %v583 = vpop.xlane.xlu0 %582
    %v584 = vsel %vm89, %v492, 0.0
    %585 = vadd.xlane.f32.xlu0 %v584
    %v586 = vpop.xlane.xlu0 %585
    %v587 = vsel %vm89, %v493, 0.0
    %588 = vadd.xlane.f32.xlu0 %v587
    %v589 = vpop.xlane.xlu0 %588
    %v622 = vlaneseq
    %v623 = vand.u32 %v622, 127
    %v624 = vlaneseq
    %v625 = vshrl.u32 %v624, 7
    %v626 = vsub.s32 %v623, %v625
    %v627 = vrot.slane %v496, %v626
    %v628 = vlaneseq
    %v629 = vshrl.u32 %v628, 7
    %v630 = vsub.s32 %v623, %v629
    %v631 = vrot.slane %v499, %v630
    %v632 = vlaneseq
    %v633 = vshrl.u32 %v632, 7
    %v634 = vsub.s32 %v623, %v633
    %v635 = vrot.slane %v502, %v634
    %v636 = vlaneseq
    %v637 = vshrl.u32 %v636, 7
    %v638 = vsub.s32 %v623, %v637
    %v639 = vrot.slane %v505, %v638
    %v640 = vlaneseq
    %v641 = vshrl.u32 %v640, 7
    %v642 = vsub.s32 %v623, %v641
    %v643 = vrot.slane %v508, %v642
    %v644 = vlaneseq
    %v645 = vshrl.u32 %v644, 7
    %v646 = vsub.s32 %v623, %v645
    %v647 = vrot.slane %v511, %v646
    %v648 = vlaneseq
    %v649 = vshrl.u32 %v648, 7
    %v650 = vsub.s32 %v623, %v649
    %v651 = vrot.slane %v514, %v650
    %v652 = vlaneseq
    %v653 = vshrl.u32 %v652, 7
    %v654 = vsub.s32 %v623, %v653
    %v655 = vrot.slane %v517, %v654
    %v656 = vlaneseq
    %v657 = vshrl.u32 %v656, 7
    %v658 = vsub.s32 %v623, %v657
    %v659 = vrot.slane %v520, %v658
    %v660 = vlaneseq
    %v661 = vshrl.u32 %v660, 7
    %v662 = vsub.s32 %v623, %v661
    %v663 = vrot.slane %v523, %v662
    %v664 = vlaneseq
    %v665 = vshrl.u32 %v664, 7
    %v666 = vsub.s32 %v623, %v665
    %v667 = vrot.slane %v526, %v666
    %v668 = vlaneseq
    %v669 = vshrl.u32 %v668, 7
    %v670 = vsub.s32 %v623, %v669
    %v671 = vrot.slane %v529, %v670
    %v672 = vlaneseq
    %v673 = vshrl.u32 %v672, 7
    %v674 = vsub.s32 %v623, %v673
    %v675 = vrot.slane %v532, %v674
    %v676 = vlaneseq
    %v677 = vshrl.u32 %v676, 7
    %v678 = vsub.s32 %v623, %v677
    %v679 = vrot.slane %v535, %v678
    %v680 = vlaneseq
    %v681 = vshrl.u32 %v680, 7
    %v682 = vsub.s32 %v623, %v681
    %v683 = vrot.slane %v538, %v682
    %v684 = vlaneseq
    %v685 = vshrl.u32 %v684, 7
    %v686 = vsub.s32 %v623, %v685
    %v687 = vrot.slane %v541, %v686
    %v688 = vlaneseq
    %v689 = vshrl.u32 %v688, 7
    %v690 = vsub.s32 %v623, %v689
    %v691 = vrot.slane %v544, %v690
    %v692 = vlaneseq
    %v693 = vshrl.u32 %v692, 7
    %v694 = vsub.s32 %v623, %v693
    %v695 = vrot.slane %v547, %v694
    %v696 = vlaneseq
    %v697 = vshrl.u32 %v696, 7
    %v698 = vsub.s32 %v623, %v697
    %v699 = vrot.slane %v550, %v698
    %v700 = vlaneseq
    %v701 = vshrl.u32 %v700, 7
    %v702 = vsub.s32 %v623, %v701
    %v703 = vrot.slane %v553, %v702
    %v704 = vlaneseq
    %v705 = vshrl.u32 %v704, 7
    %v706 = vsub.s32 %v623, %v705
    %v707 = vrot.slane %v556, %v706
    %v708 = vlaneseq
    %v709 = vshrl.u32 %v708, 7
    %v710 = vsub.s32 %v623, %v709
    %v711 = vrot.slane %v559, %v710
    %v712 = vlaneseq
    %v713 = vshrl.u32 %v712, 7
    %v714 = vsub.s32 %v623, %v713
    %v715 = vrot.slane %v562, %v714
    %v716 = vlaneseq
    %v717 = vshrl.u32 %v716, 7
    %v718 = vsub.s32 %v623, %v717
    %v719 = vrot.slane %v565, %v718
    %v720 = vlaneseq
    %v721 = vshrl.u32 %v720, 7
    %v722 = vsub.s32 %v623, %v721
    %v723 = vrot.slane %v568, %v722
    %v724 = vlaneseq
    %v725 = vshrl.u32 %v724, 7
    %v726 = vsub.s32 %v623, %v725
    %v727 = vrot.slane %v571, %v726
    %v728 = vlaneseq
    %v729 = vshrl.u32 %v728, 7
    %v730 = vsub.s32 %v623, %v729
    %v731 = vrot.slane %v574, %v730
    %v732 = vlaneseq
    %v733 = vshrl.u32 %v732, 7
    %v734 = vsub.s32 %v623, %v733
    %v735 = vrot.slane %v577, %v734
    %v736 = vlaneseq
    %v737 = vshrl.u32 %v736, 7
    %v738 = vsub.s32 %v623, %v737
    %v739 = vrot.slane %v580, %v738
    %v740 = vlaneseq
    %v741 = vshrl.u32 %v740, 7
    %v742 = vsub.s32 %v623, %v741
    %v743 = vrot.slane %v583, %v742
    %v744 = vlaneseq
    %v745 = vshrl.u32 %v744, 7
    %v746 = vsub.s32 %v623, %v745
    %v747 = vrot.slane %v586, %v746
    %v748 = vlaneseq
    %v749 = vshrl.u32 %v748, 7
    %v750 = vsub.s32 %v623, %v749
    %v751 = vrot.slane %v589, %v750
    %vm752 = vcmask 1041409
    %v753 = vsel %vm752, %v631, %v627
    %vm754 = vcmask 1042434
    %v755 = vsel %vm754, %v635, %v753
    %vm756 = vcmask 1043459
    %v757 = vsel %vm756, %v639, %v755
    %vm758 = vcmask 1044484
    %v759 = vsel %vm758, %v643, %v757
    %vm760 = vcmask 1045509
    %v761 = vsel %vm760, %v647, %v759
    %vm762 = vcmask 1046534
    %v763 = vsel %vm762, %v651, %v761
    %vm764 = vcmask 1047559
    %v765 = vsel %vm764, %v655, %v763
    %v766 = vsel %vm752, %v663, %v659
    %v767 = vsel %vm754, %v667, %v766
    %v768 = vsel %vm756, %v671, %v767
    %v769 = vsel %vm758, %v675, %v768
    %v770 = vsel %vm760, %v679, %v769
    %v771 = vsel %vm762, %v683, %v770
    %v772 = vsel %vm764, %v687, %v771
    %v773 = vsel %vm752, %v695, %v691
    %v774 = vsel %vm754, %v699, %v773
    %v775 = vsel %vm756, %v703, %v774
    %v776 = vsel %vm758, %v707, %v775
    %v777 = vsel %vm760, %v711, %v776
    %v778 = vsel %vm762, %v715, %v777
    %v779 = vsel %vm764, %v719, %v778
    %v780 = vsel %vm752, %v727, %v723
    %v781 = vsel %vm754, %v731, %v780
    %v782 = vsel %vm756, %v735, %v781
    %v783 = vsel %vm758, %v739, %v782
    %v784 = vsel %vm760, %v743, %v783
    %v785 = vsel %vm762, %v747, %v784
    %v786 = vsel %vm764, %v751, %v785
    %vm791 = vcmask 64512
    %v792 = vsel %vm791, %v765, -inf
    %793 = vmax.xlane.f32.xlu0 %v792
    %v794 = vpop.xlane.xlu0 %793
    %v795 = vsel %vm791, %v772, -inf
    %796 = vmax.xlane.f32.xlu0 %v795
    %v797 = vpop.xlane.xlu0 %796
    %v798 = vsel %vm791, %v779, -inf
    %799 = vmax.xlane.f32.xlu0 %v798
    %v800 = vpop.xlane.xlu0 %799
    %v801 = vsel %vm791, %v786, -inf
    %802 = vmax.xlane.f32.xlu0 %v801
    %v803 = vpop.xlane.xlu0 %802
    %v808 = vlaneseq
    %v809 = vshrl.u32 %v808, 7
    %v810 = vsub.s32 0, %v809
    %v811 = vrot.slane %v794, %v810
    %v812 = vlaneseq
    %v813 = vshrl.u32 %v812, 7
    %v814 = vsub.s32 1, %v813
    %v815 = vrot.slane %v794, %v814
    %v816 = vlaneseq
    %v817 = vshrl.u32 %v816, 7
    %v818 = vsub.s32 2, %v817
    %v819 = vrot.slane %v794, %v818
    %v820 = vlaneseq
    %v821 = vshrl.u32 %v820, 7
    %v822 = vsub.s32 3, %v821
    %v823 = vrot.slane %v794, %v822
    %v824 = vlaneseq
    %v825 = vshrl.u32 %v824, 7
    %v826 = vsub.s32 4, %v825
    %v827 = vrot.slane %v794, %v826
    %v828 = vlaneseq
    %v829 = vshrl.u32 %v828, 7
    %v830 = vsub.s32 5, %v829
    %v831 = vrot.slane %v794, %v830
    %v832 = vlaneseq
    %v833 = vshrl.u32 %v832, 7
    %v834 = vsub.s32 6, %v833
    %v835 = vrot.slane %v794, %v834
    %v836 = vlaneseq
    %v837 = vshrl.u32 %v836, 7
    %v838 = vsub.s32 7, %v837
    %v839 = vrot.slane %v794, %v838
    %v840 = vlaneseq
    %v841 = vshrl.u32 %v840, 7
    %v842 = vsub.s32 0, %v841
    %v843 = vrot.slane %v797, %v842
    %v844 = vlaneseq
    %v845 = vshrl.u32 %v844, 7
    %v846 = vsub.s32 1, %v845
    %v847 = vrot.slane %v797, %v846
    %v848 = vlaneseq
    %v849 = vshrl.u32 %v848, 7
    %v850 = vsub.s32 2, %v849
    %v851 = vrot.slane %v797, %v850
    %v852 = vlaneseq
    %v853 = vshrl.u32 %v852, 7
    %v854 = vsub.s32 3, %v853
    %v855 = vrot.slane %v797, %v854
    %v856 = vlaneseq
    %v857 = vshrl.u32 %v856, 7
    %v858 = vsub.s32 4, %v857
    %v859 = vrot.slane %v797, %v858
    %v860 = vlaneseq
    %v861 = vshrl.u32 %v860, 7
    %v862 = vsub.s32 5, %v861
    %v863 = vrot.slane %v797, %v862
    %v864 = vlaneseq
    %v865 = vshrl.u32 %v864, 7
    %v866 = vsub.s32 6, %v865
    %v867 = vrot.slane %v797, %v866
    %v868 = vlaneseq
    %v869 = vshrl.u32 %v868, 7
    %v870 = vsub.s32 7, %v869
    %v871 = vrot.slane %v797, %v870
    %v872 = vlaneseq
    %v873 = vshrl.u32 %v872, 7
    %v874 = vsub.s32 0, %v873
    %v875 = vrot.slane %v800, %v874
    %v876 = vlaneseq
    %v877 = vshrl.u32 %v876, 7
    %v878 = vsub.s32 1, %v877
    %v879 = vrot.slane %v800, %v878
    %v880 = vlaneseq
    %v881 = vshrl.u32 %v880, 7
    %v882 = vsub.s32 2, %v881
    %v883 = vrot.slane %v800, %v882
    %v884 = vlaneseq
    %v885 = vshrl.u32 %v884, 7
    %v886 = vsub.s32 3, %v885
    %v887 = vrot.slane %v800, %v886
    %v888 = vlaneseq
    %v889 = vshrl.u32 %v888, 7
    %v890 = vsub.s32 4, %v889
    %v891 = vrot.slane %v800, %v890
    %v892 = vlaneseq
    %v893 = vshrl.u32 %v892, 7
    %v894 = vsub.s32 5, %v893
    %v895 = vrot.slane %v800, %v894
    %v896 = vlaneseq
    %v897 = vshrl.u32 %v896, 7
    %v898 = vsub.s32 6, %v897
    %v899 = vrot.slane %v800, %v898
    %v900 = vlaneseq
    %v901 = vshrl.u32 %v900, 7
    %v902 = vsub.s32 7, %v901
    %v903 = vrot.slane %v800, %v902
    %v904 = vlaneseq
    %v905 = vshrl.u32 %v904, 7
    %v906 = vsub.s32 0, %v905
    %v907 = vrot.slane %v803, %v906
    %v908 = vlaneseq
    %v909 = vshrl.u32 %v908, 7
    %v910 = vsub.s32 1, %v909
    %v911 = vrot.slane %v803, %v910
    %v912 = vlaneseq
    %v913 = vshrl.u32 %v912, 7
    %v914 = vsub.s32 2, %v913
    %v915 = vrot.slane %v803, %v914
    %v916 = vlaneseq
    %v917 = vshrl.u32 %v916, 7
    %v918 = vsub.s32 3, %v917
    %v919 = vrot.slane %v803, %v918
    %v920 = vlaneseq
    %v921 = vshrl.u32 %v920, 7
    %v922 = vsub.s32 4, %v921
    %v923 = vrot.slane %v803, %v922
    %v924 = vlaneseq
    %v925 = vshrl.u32 %v924, 7
    %v926 = vsub.s32 5, %v925
    %v927 = vrot.slane %v803, %v926
    %v928 = vlaneseq
    %v929 = vshrl.u32 %v928, 7
    %v930 = vsub.s32 6, %v929
    %v931 = vrot.slane %v803, %v930
    %v932 = vlaneseq
    %v933 = vshrl.u32 %v932, 7
    %v934 = vsub.s32 7, %v933
    %v935 = vrot.slane %v803, %v934
    %v968 = vsub.f32 %v496, %v811
    %v969 = vsub.f32 %v499, %v815
    %v970 = vsub.f32 %v502, %v819
    %v971 = vsub.f32 %v505, %v823
    %v972 = vsub.f32 %v508, %v827
    %v973 = vsub.f32 %v511, %v831
    %v974 = vsub.f32 %v514, %v835
    %v975 = vsub.f32 %v517, %v839
    %v976 = vsub.f32 %v520, %v843
    %v977 = vsub.f32 %v523, %v847
    %v978 = vsub.f32 %v526, %v851
    %v979 = vsub.f32 %v529, %v855
    %v980 = vsub.f32 %v532, %v859
    %v981 = vsub.f32 %v535, %v863
    %v982 = vsub.f32 %v538, %v867
    %v983 = vsub.f32 %v541, %v871
    %v984 = vsub.f32 %v544, %v875
    %v985 = vsub.f32 %v547, %v879
    %v986 = vsub.f32 %v550, %v883
    %v987 = vsub.f32 %v553, %v887
    %v988 = vsub.f32 %v556, %v891
    %v989 = vsub.f32 %v559, %v895
    %v990 = vsub.f32 %v562, %v899
    %v991 = vsub.f32 %v565, %v903
    %v992 = vsub.f32 %v568, %v907
    %v993 = vsub.f32 %v571, %v911
    %v994 = vsub.f32 %v574, %v915
    %v995 = vsub.f32 %v577, %v919
    %v996 = vsub.f32 %v580, %v923
    %v997 = vsub.f32 %v583, %v927
    %v998 = vsub.f32 %v586, %v931
    %v999 = vsub.f32 %v589, %v935
    %v1000 = vmul.f32 %v968, 1.442695
    %v1001 = vpow.pop %v1000
    %v1002 = vmul.f32 %v969, 1.442695
    %v1003 = vpow.pop %v1002
    %v1004 = vmul.f32 %v970, 1.442695
    %v1005 = vpow.pop %v1004
    %v1006 = vmul.f32 %v971, 1.442695
    %v1007 = vpow.pop %v1006
    %v1008 = vmul.f32 %v972, 1.442695
    %v1009 = vpow.pop %v1008
    %v1010 = vmul.f32 %v973, 1.442695
    %v1011 = vpow.pop %v1010
    %v1012 = vmul.f32 %v974, 1.442695
    %v1013 = vpow.pop %v1012
    %v1014 = vmul.f32 %v975, 1.442695
    %v1015 = vpow.pop %v1014
    %v1016 = vmul.f32 %v976, 1.442695
    %v1017 = vpow.pop %v1016
    %v1018 = vmul.f32 %v977, 1.442695
    %v1019 = vpow.pop %v1018
    %v1020 = vmul.f32 %v978, 1.442695
    %v1021 = vpow.pop %v1020
    %v1022 = vmul.f32 %v979, 1.442695
    %v1023 = vpow.pop %v1022
    %v1024 = vmul.f32 %v980, 1.442695
    %v1025 = vpow.pop %v1024
    %v1026 = vmul.f32 %v981, 1.442695
    %v1027 = vpow.pop %v1026
    %v1028 = vmul.f32 %v982, 1.442695
    %v1029 = vpow.pop %v1028
    %v1030 = vmul.f32 %v983, 1.442695
    %v1031 = vpow.pop %v1030
    %v1032 = vmul.f32 %v984, 1.442695
    %v1033 = vpow.pop %v1032
    %v1034 = vmul.f32 %v985, 1.442695
    %v1035 = vpow.pop %v1034
    %v1036 = vmul.f32 %v986, 1.442695
    %v1037 = vpow.pop %v1036
    %v1038 = vmul.f32 %v987, 1.442695
    %v1039 = vpow.pop %v1038
    %v1040 = vmul.f32 %v988, 1.442695
    %v1041 = vpow.pop %v1040
    %v1042 = vmul.f32 %v989, 1.442695
    %v1043 = vpow.pop %v1042
    %v1044 = vmul.f32 %v990, 1.442695
    %v1045 = vpow.pop %v1044
    %v1046 = vmul.f32 %v991, 1.442695
    %v1047 = vpow.pop %v1046
    %v1048 = vmul.f32 %v992, 1.442695
    %v1049 = vpow.pop %v1048
    %v1050 = vmul.f32 %v993, 1.442695
    %v1051 = vpow.pop %v1050
    %v1052 = vmul.f32 %v994, 1.442695
    %v1053 = vpow.pop %v1052
    %v1054 = vmul.f32 %v995, 1.442695
    %v1055 = vpow.pop %v1054
    %v1056 = vmul.f32 %v996, 1.442695
    %v1057 = vpow.pop %v1056
    %v1058 = vmul.f32 %v997, 1.442695
    %v1059 = vpow.pop %v1058
    %v1060 = vmul.f32 %v998, 1.442695
    %v1061 = vpow.pop %v1060
    %v1062 = vmul.f32 %v999, 1.442695
    %v1063 = vpow.pop %v1062
    %1096 = vset.pattern.permute.xlu0 0
    %1097 = vperm.xlu0 %1096, %v1001
    %v1098 = vpop.permute.xlu0 %1097
    %1099 = vset.pattern.permute.xlu0 0
    %1100 = vperm.xlu0 %1099, %v1003
    %v1101 = vpop.permute.xlu0 %1100
    %1102 = vset.pattern.permute.xlu0 0
    %1103 = vperm.xlu0 %1102, %v1005
    %v1104 = vpop.permute.xlu0 %1103
    %1105 = vset.pattern.permute.xlu0 0
    %1106 = vperm.xlu0 %1105, %v1007
    %v1107 = vpop.permute.xlu0 %1106
    %1108 = vset.pattern.permute.xlu0 0
    %1109 = vperm.xlu0 %1108, %v1009
    %v1110 = vpop.permute.xlu0 %1109
    %1111 = vset.pattern.permute.xlu0 0
    %1112 = vperm.xlu0 %1111, %v1011
    %v1113 = vpop.permute.xlu0 %1112
    %1114 = vset.pattern.permute.xlu0 0
    %1115 = vperm.xlu0 %1114, %v1013
    %v1116 = vpop.permute.xlu0 %1115
    %1117 = vset.pattern.permute.xlu0 0
    %1118 = vperm.xlu0 %1117, %v1015
    %v1119 = vpop.permute.xlu0 %1118
    %1120 = vset.pattern.permute.xlu0 0
    %1121 = vperm.xlu0 %1120, %v1017
    %v1122 = vpop.permute.xlu0 %1121
    %1123 = vset.pattern.permute.xlu0 0
    %1124 = vperm.xlu0 %1123, %v1019
    %v1125 = vpop.permute.xlu0 %1124
    %1126 = vset.pattern.permute.xlu0 0
    %1127 = vperm.xlu0 %1126, %v1021
    %v1128 = vpop.permute.xlu0 %1127
    %1129 = vset.pattern.permute.xlu0 0
    %1130 = vperm.xlu0 %1129, %v1023
    %v1131 = vpop.permute.xlu0 %1130
    %1132 = vset.pattern.permute.xlu0 0
    %1133 = vperm.xlu0 %1132, %v1025
    %v1134 = vpop.permute.xlu0 %1133
    %1135 = vset.pattern.permute.xlu0 0
    %1136 = vperm.xlu0 %1135, %v1027
    %v1137 = vpop.permute.xlu0 %1136
    %1138 = vset.pattern.permute.xlu0 0
    %1139 = vperm.xlu0 %1138, %v1029
    %v1140 = vpop.permute.xlu0 %1139
    %1141 = vset.pattern.permute.xlu0 0
    %1142 = vperm.xlu0 %1141, %v1031
    %v1143 = vpop.permute.xlu0 %1142
    %1144 = vset.pattern.permute.xlu0 0
    %1145 = vperm.xlu0 %1144, %v1033
    %v1146 = vpop.permute.xlu0 %1145
    %1147 = vset.pattern.permute.xlu0 0
    %1148 = vperm.xlu0 %1147, %v1035
    %v1149 = vpop.permute.xlu0 %1148
    %1150 = vset.pattern.permute.xlu0 0
    %1151 = vperm.xlu0 %1150, %v1037
    %v1152 = vpop.permute.xlu0 %1151
    %1153 = vset.pattern.permute.xlu0 0
    %1154 = vperm.xlu0 %1153, %v1039
    %v1155 = vpop.permute.xlu0 %1154
    %1156 = vset.pattern.permute.xlu0 0
    %1157 = vperm.xlu0 %1156, %v1041
    %v1158 = vpop.permute.xlu0 %1157
    %1159 = vset.pattern.permute.xlu0 0
    %1160 = vperm.xlu0 %1159, %v1043
    %v1161 = vpop.permute.xlu0 %1160
    %1162 = vset.pattern.permute.xlu0 0
    %1163 = vperm.xlu0 %1162, %v1045
    %v1164 = vpop.permute.xlu0 %1163
    %1165 = vset.pattern.permute.xlu0 0
    %1166 = vperm.xlu0 %1165, %v1047
    %v1167 = vpop.permute.xlu0 %1166
    %1168 = vset.pattern.permute.xlu0 0
    %1169 = vperm.xlu0 %1168, %v1049
    %v1170 = vpop.permute.xlu0 %1169
    %1171 = vset.pattern.permute.xlu0 0
    %1172 = vperm.xlu0 %1171, %v1051
    %v1173 = vpop.permute.xlu0 %1172
    %1174 = vset.pattern.permute.xlu0 0
    %1175 = vperm.xlu0 %1174, %v1053
    %v1176 = vpop.permute.xlu0 %1175
    %1177 = vset.pattern.permute.xlu0 0
    %1178 = vperm.xlu0 %1177, %v1055
    %v1179 = vpop.permute.xlu0 %1178
    %1180 = vset.pattern.permute.xlu0 0
    %1181 = vperm.xlu0 %1180, %v1057
    %v1182 = vpop.permute.xlu0 %1181
    %1183 = vset.pattern.permute.xlu0 0
    %1184 = vperm.xlu0 %1183, %v1059
    %v1185 = vpop.permute.xlu0 %1184
    %1186 = vset.pattern.permute.xlu0 0
    %1187 = vperm.xlu0 %1186, %v1061
    %v1188 = vpop.permute.xlu0 %1187
    %1189 = vset.pattern.permute.xlu0 0
    %1190 = vperm.xlu0 %1189, %v1063
    %v1191 = vpop.permute.xlu0 %1190
    %v1192 = vlaneseq
    %v1193 = vshrl.u32 %v1192, 7
    %v1194 = vsub.s32 %v623, %v1193
    %v1195 = vrot.slane %v1098, %v1194
    %v1196 = vlaneseq
    %v1197 = vshrl.u32 %v1196, 7
    %v1198 = vsub.s32 %v623, %v1197
    %v1199 = vrot.slane %v1101, %v1198
    %v1200 = vlaneseq
    %v1201 = vshrl.u32 %v1200, 7
    %v1202 = vsub.s32 %v623, %v1201
    %v1203 = vrot.slane %v1104, %v1202
    %v1204 = vlaneseq
    %v1205 = vshrl.u32 %v1204, 7
    %v1206 = vsub.s32 %v623, %v1205
    %v1207 = vrot.slane %v1107, %v1206
    %v1208 = vlaneseq
    %v1209 = vshrl.u32 %v1208, 7
    %v1210 = vsub.s32 %v623, %v1209
    %v1211 = vrot.slane %v1110, %v1210
    %v1212 = vlaneseq
    %v1213 = vshrl.u32 %v1212, 7
    %v1214 = vsub.s32 %v623, %v1213
    %v1215 = vrot.slane %v1113, %v1214
    %v1216 = vlaneseq
    %v1217 = vshrl.u32 %v1216, 7
    %v1218 = vsub.s32 %v623, %v1217
    %v1219 = vrot.slane %v1116, %v1218
    %v1220 = vlaneseq
    %v1221 = vshrl.u32 %v1220, 7
    %v1222 = vsub.s32 %v623, %v1221
    %v1223 = vrot.slane %v1119, %v1222
    %v1224 = vlaneseq
    %v1225 = vshrl.u32 %v1224, 7
    %v1226 = vsub.s32 %v623, %v1225
    %v1227 = vrot.slane %v1122, %v1226
    %v1228 = vlaneseq
    %v1229 = vshrl.u32 %v1228, 7
    %v1230 = vsub.s32 %v623, %v1229
    %v1231 = vrot.slane %v1125, %v1230
    %v1232 = vlaneseq
    %v1233 = vshrl.u32 %v1232, 7
    %v1234 = vsub.s32 %v623, %v1233
    %v1235 = vrot.slane %v1128, %v1234
    %v1236 = vlaneseq
    %v1237 = vshrl.u32 %v1236, 7
    %v1238 = vsub.s32 %v623, %v1237
    %v1239 = vrot.slane %v1131, %v1238
    %v1240 = vlaneseq
    %v1241 = vshrl.u32 %v1240, 7
    %v1242 = vsub.s32 %v623, %v1241
    %v1243 = vrot.slane %v1134, %v1242
    %v1244 = vlaneseq
    %v1245 = vshrl.u32 %v1244, 7
    %v1246 = vsub.s32 %v623, %v1245
    %v1247 = vrot.slane %v1137, %v1246
    %v1248 = vlaneseq
    %v1249 = vshrl.u32 %v1248, 7
    %v1250 = vsub.s32 %v623, %v1249
    %v1251 = vrot.slane %v1140, %v1250
    %v1252 = vlaneseq
    %v1253 = vshrl.u32 %v1252, 7
    %v1254 = vsub.s32 %v623, %v1253
    %v1255 = vrot.slane %v1143, %v1254
    %v1256 = vlaneseq
    %v1257 = vshrl.u32 %v1256, 7
    %v1258 = vsub.s32 %v623, %v1257
    %v1259 = vrot.slane %v1146, %v1258
    %v1260 = vlaneseq
    %v1261 = vshrl.u32 %v1260, 7
    %v1262 = vsub.s32 %v623, %v1261
    %v1263 = vrot.slane %v1149, %v1262
    %v1264 = vlaneseq
    %v1265 = vshrl.u32 %v1264, 7
    %v1266 = vsub.s32 %v623, %v1265
    %v1267 = vrot.slane %v1152, %v1266
    %v1268 = vlaneseq
    %v1269 = vshrl.u32 %v1268, 7
    %v1270 = vsub.s32 %v623, %v1269
    %v1271 = vrot.slane %v1155, %v1270
    %v1272 = vlaneseq
    %v1273 = vshrl.u32 %v1272, 7
    %v1274 = vsub.s32 %v623, %v1273
    %v1275 = vrot.slane %v1158, %v1274
    %v1276 = vlaneseq
    %v1277 = vshrl.u32 %v1276, 7
    %v1278 = vsub.s32 %v623, %v1277
    %v1279 = vrot.slane %v1161, %v1278
    %v1280 = vlaneseq
    %v1281 = vshrl.u32 %v1280, 7
    %v1282 = vsub.s32 %v623, %v1281
    %v1283 = vrot.slane %v1164, %v1282
    %v1284 = vlaneseq
    %v1285 = vshrl.u32 %v1284, 7
    %v1286 = vsub.s32 %v623, %v1285
    %v1287 = vrot.slane %v1167, %v1286
    %v1288 = vlaneseq
    %v1289 = vshrl.u32 %v1288, 7
    %v1290 = vsub.s32 %v623, %v1289
    %v1291 = vrot.slane %v1170, %v1290
    %v1292 = vlaneseq
    %v1293 = vshrl.u32 %v1292, 7
    %v1294 = vsub.s32 %v623, %v1293
    %v1295 = vrot.slane %v1173, %v1294
    %v1296 = vlaneseq
    %v1297 = vshrl.u32 %v1296, 7
    %v1298 = vsub.s32 %v623, %v1297
    %v1299 = vrot.slane %v1176, %v1298
    %v1300 = vlaneseq
    %v1301 = vshrl.u32 %v1300, 7
    %v1302 = vsub.s32 %v623, %v1301
    %v1303 = vrot.slane %v1179, %v1302
    %v1304 = vlaneseq
    %v1305 = vshrl.u32 %v1304, 7
    %v1306 = vsub.s32 %v623, %v1305
    %v1307 = vrot.slane %v1182, %v1306
    %v1308 = vlaneseq
    %v1309 = vshrl.u32 %v1308, 7
    %v1310 = vsub.s32 %v623, %v1309
    %v1311 = vrot.slane %v1185, %v1310
    %v1312 = vlaneseq
    %v1313 = vshrl.u32 %v1312, 7
    %v1314 = vsub.s32 %v623, %v1313
    %v1315 = vrot.slane %v1188, %v1314
    %v1316 = vlaneseq
    %v1317 = vshrl.u32 %v1316, 7
    %v1318 = vsub.s32 %v623, %v1317
    %v1319 = vrot.slane %v1191, %v1318
    %v1320 = vsel %vm752, %v1199, %v1195
    %v1321 = vsel %vm754, %v1203, %v1320
    %v1322 = vsel %vm756, %v1207, %v1321
    %v1323 = vsel %vm758, %v1211, %v1322
    %v1324 = vsel %vm760, %v1215, %v1323
    %v1325 = vsel %vm762, %v1219, %v1324
    %v1326 = vsel %vm764, %v1223, %v1325
    %v1327 = vsel %vm752, %v1231, %v1227
    %v1328 = vsel %vm754, %v1235, %v1327
    %v1329 = vsel %vm756, %v1239, %v1328
    %v1330 = vsel %vm758, %v1243, %v1329
    %v1331 = vsel %vm760, %v1247, %v1330
    %v1332 = vsel %vm762, %v1251, %v1331
    %v1333 = vsel %vm764, %v1255, %v1332
    %v1334 = vsel %vm752, %v1263, %v1259
    %v1335 = vsel %vm754, %v1267, %v1334
    %v1336 = vsel %vm756, %v1271, %v1335
    %v1337 = vsel %vm758, %v1275, %v1336
    %v1338 = vsel %vm760, %v1279, %v1337
    %v1339 = vsel %vm762, %v1283, %v1338
    %v1340 = vsel %vm764, %v1287, %v1339
    %v1341 = vsel %vm752, %v1295, %v1291
    %v1342 = vsel %vm754, %v1299, %v1341
    %v1343 = vsel %vm756, %v1303, %v1342
    %v1344 = vsel %vm758, %v1307, %v1343
    %v1345 = vsel %vm760, %v1311, %v1344
    %v1346 = vsel %vm762, %v1315, %v1345
    %v1347 = vsel %vm764, %v1319, %v1346
    %v1352 = vsel %vm791, %v1326, 0.0
    %1353 = vadd.xlane.f32.xlu0 %v1352
    %v1354 = vpop.xlane.xlu0 %1353
    %v1355 = vsel %vm791, %v1333, 0.0
    %1356 = vadd.xlane.f32.xlu0 %v1355
    %v1357 = vpop.xlane.xlu0 %1356
    %v1358 = vsel %vm791, %v1340, 0.0
    %1359 = vadd.xlane.f32.xlu0 %v1358
    %v1360 = vpop.xlane.xlu0 %1359
    %v1361 = vsel %vm791, %v1347, 0.0
    %1362 = vadd.xlane.f32.xlu0 %v1361
    %v1363 = vpop.xlane.xlu0 %1362
    %v1364 = vrcp.pop %v1354
    %v1365 = vrcp.pop %v1357
    %v1366 = vrcp.pop %v1360
    %v1367 = vrcp.pop %v1363
    %v1372 = vlaneseq
    %v1373 = vshrl.u32 %v1372, 7
    %v1374 = vsub.s32 0, %v1373
    %v1375 = vrot.slane %v1364, %v1374
    %v1376 = vlaneseq
    %v1377 = vshrl.u32 %v1376, 7
    %v1378 = vsub.s32 1, %v1377
    %v1379 = vrot.slane %v1364, %v1378
    %v1380 = vlaneseq
    %v1381 = vshrl.u32 %v1380, 7
    %v1382 = vsub.s32 2, %v1381
    %v1383 = vrot.slane %v1364, %v1382
    %v1384 = vlaneseq
    %v1385 = vshrl.u32 %v1384, 7
    %v1386 = vsub.s32 3, %v1385
    %v1387 = vrot.slane %v1364, %v1386
    %v1388 = vlaneseq
    %v1389 = vshrl.u32 %v1388, 7
    %v1390 = vsub.s32 4, %v1389
    %v1391 = vrot.slane %v1364, %v1390
    %v1392 = vlaneseq
    %v1393 = vshrl.u32 %v1392, 7
    %v1394 = vsub.s32 5, %v1393
    %v1395 = vrot.slane %v1364, %v1394
    %v1396 = vlaneseq
    %v1397 = vshrl.u32 %v1396, 7
    %v1398 = vsub.s32 6, %v1397
    %v1399 = vrot.slane %v1364, %v1398
    %v1400 = vlaneseq
    %v1401 = vshrl.u32 %v1400, 7
    %v1402 = vsub.s32 7, %v1401
    %v1403 = vrot.slane %v1364, %v1402
    %v1404 = vlaneseq
    %v1405 = vshrl.u32 %v1404, 7
    %v1406 = vsub.s32 0, %v1405
    %v1407 = vrot.slane %v1365, %v1406
    %v1408 = vlaneseq
    %v1409 = vshrl.u32 %v1408, 7
    %v1410 = vsub.s32 1, %v1409
    %v1411 = vrot.slane %v1365, %v1410
    %v1412 = vlaneseq
    %v1413 = vshrl.u32 %v1412, 7
    %v1414 = vsub.s32 2, %v1413
    %v1415 = vrot.slane %v1365, %v1414
    %v1416 = vlaneseq
    %v1417 = vshrl.u32 %v1416, 7
    %v1418 = vsub.s32 3, %v1417
    %v1419 = vrot.slane %v1365, %v1418
    %v1420 = vlaneseq
    %v1421 = vshrl.u32 %v1420, 7
    %v1422 = vsub.s32 4, %v1421
    %v1423 = vrot.slane %v1365, %v1422
    %v1424 = vlaneseq
    %v1425 = vshrl.u32 %v1424, 7
    %v1426 = vsub.s32 5, %v1425
    %v1427 = vrot.slane %v1365, %v1426
    %v1428 = vlaneseq
    %v1429 = vshrl.u32 %v1428, 7
    %v1430 = vsub.s32 6, %v1429
    %v1431 = vrot.slane %v1365, %v1430
    %v1432 = vlaneseq
    %v1433 = vshrl.u32 %v1432, 7
    %v1434 = vsub.s32 7, %v1433
    %v1435 = vrot.slane %v1365, %v1434
    %v1436 = vlaneseq
    %v1437 = vshrl.u32 %v1436, 7
    %v1438 = vsub.s32 0, %v1437
    %v1439 = vrot.slane %v1366, %v1438
    %v1440 = vlaneseq
    %v1441 = vshrl.u32 %v1440, 7
    %v1442 = vsub.s32 1, %v1441
    %v1443 = vrot.slane %v1366, %v1442
    %v1444 = vlaneseq
    %v1445 = vshrl.u32 %v1444, 7
    %v1446 = vsub.s32 2, %v1445
    %v1447 = vrot.slane %v1366, %v1446
    %v1448 = vlaneseq
    %v1449 = vshrl.u32 %v1448, 7
    %v1450 = vsub.s32 3, %v1449
    %v1451 = vrot.slane %v1366, %v1450
    %v1452 = vlaneseq
    %v1453 = vshrl.u32 %v1452, 7
    %v1454 = vsub.s32 4, %v1453
    %v1455 = vrot.slane %v1366, %v1454
    %v1456 = vlaneseq
    %v1457 = vshrl.u32 %v1456, 7
    %v1458 = vsub.s32 5, %v1457
    %v1459 = vrot.slane %v1366, %v1458
    %v1460 = vlaneseq
    %v1461 = vshrl.u32 %v1460, 7
    %v1462 = vsub.s32 6, %v1461
    %v1463 = vrot.slane %v1366, %v1462
    %v1464 = vlaneseq
    %v1465 = vshrl.u32 %v1464, 7
    %v1466 = vsub.s32 7, %v1465
    %v1467 = vrot.slane %v1366, %v1466
    %v1468 = vlaneseq
    %v1469 = vshrl.u32 %v1468, 7
    %v1470 = vsub.s32 0, %v1469
    %v1471 = vrot.slane %v1367, %v1470
    %v1472 = vlaneseq
    %v1473 = vshrl.u32 %v1472, 7
    %v1474 = vsub.s32 1, %v1473
    %v1475 = vrot.slane %v1367, %v1474
    %v1476 = vlaneseq
    %v1477 = vshrl.u32 %v1476, 7
    %v1478 = vsub.s32 2, %v1477
    %v1479 = vrot.slane %v1367, %v1478
    %v1480 = vlaneseq
    %v1481 = vshrl.u32 %v1480, 7
    %v1482 = vsub.s32 3, %v1481
    %v1483 = vrot.slane %v1367, %v1482
    %v1484 = vlaneseq
    %v1485 = vshrl.u32 %v1484, 7
    %v1486 = vsub.s32 4, %v1485
    %v1487 = vrot.slane %v1367, %v1486
    %v1488 = vlaneseq
    %v1489 = vshrl.u32 %v1488, 7
    %v1490 = vsub.s32 5, %v1489
    %v1491 = vrot.slane %v1367, %v1490
    %v1492 = vlaneseq
    %v1493 = vshrl.u32 %v1492, 7
    %v1494 = vsub.s32 6, %v1493
    %v1495 = vrot.slane %v1367, %v1494
    %v1496 = vlaneseq
    %v1497 = vshrl.u32 %v1496, 7
    %v1498 = vsub.s32 7, %v1497
    %v1499 = vrot.slane %v1367, %v1498
    %v1532 = vmul.f32 %v1001, %v1375
    %v1533 = vmul.f32 %v1003, %v1379
    %v1534 = vmul.f32 %v1005, %v1383
    %v1535 = vmul.f32 %v1007, %v1387
    %v1536 = vmul.f32 %v1009, %v1391
    %v1537 = vmul.f32 %v1011, %v1395
    %v1538 = vmul.f32 %v1013, %v1399
    %v1539 = vmul.f32 %v1015, %v1403
    %v1540 = vmul.f32 %v1017, %v1407
    %v1541 = vmul.f32 %v1019, %v1411
    %v1542 = vmul.f32 %v1021, %v1415
    %v1543 = vmul.f32 %v1023, %v1419
    %v1544 = vmul.f32 %v1025, %v1423
    %v1545 = vmul.f32 %v1027, %v1427
    %v1546 = vmul.f32 %v1029, %v1431
    %v1547 = vmul.f32 %v1031, %v1435
    %v1548 = vmul.f32 %v1033, %v1439
    %v1549 = vmul.f32 %v1035, %v1443
    %v1550 = vmul.f32 %v1037, %v1447
    %v1551 = vmul.f32 %v1039, %v1451
    %v1552 = vmul.f32 %v1041, %v1455
    %v1553 = vmul.f32 %v1043, %v1459
    %v1554 = vmul.f32 %v1045, %v1463
    %v1555 = vmul.f32 %v1047, %v1467
    %v1556 = vmul.f32 %v1049, %v1471
    %v1557 = vmul.f32 %v1051, %v1475
    %v1558 = vmul.f32 %v1053, %v1479
    %v1559 = vmul.f32 %v1055, %v1483
    %v1560 = vmul.f32 %v1057, %v1487
    %v1561 = vmul.f32 %v1059, %v1491
    %v1562 = vmul.f32 %v1061, %v1495
    %v1563 = vmul.f32 %v1063, %v1499
    %1565 = vset.pattern.permute.xlu0 0
    %1566 = vperm.xlu0 %1565, %v1532
    %v1567 = vpop.permute.xlu0 %1566
    %1570 = vset.pattern.permute.xlu0 0
    %1571 = vperm.xlu0 %1570, %v1533
    %v1572 = vpop.permute.xlu0 %1571
    %1575 = vset.pattern.permute.xlu0 0
    %1576 = vperm.xlu0 %1575, %v1534
    %v1577 = vpop.permute.xlu0 %1576
    %1580 = vset.pattern.permute.xlu0 0
    %1581 = vperm.xlu0 %1580, %v1535
    %v1582 = vpop.permute.xlu0 %1581
    %1585 = vset.pattern.permute.xlu0 0
    %1586 = vperm.xlu0 %1585, %v1536
    %v1587 = vpop.permute.xlu0 %1586
    %1590 = vset.pattern.permute.xlu0 0
    %1591 = vperm.xlu0 %1590, %v1537
    %v1592 = vpop.permute.xlu0 %1591
    %1595 = vset.pattern.permute.xlu0 0
    %1596 = vperm.xlu0 %1595, %v1538
    %v1597 = vpop.permute.xlu0 %1596
    %1600 = vset.pattern.permute.xlu0 0
    %1601 = vperm.xlu0 %1600, %v1539
    %v1602 = vpop.permute.xlu0 %1601
    %1605 = vset.pattern.permute.xlu0 0
    %1606 = vperm.xlu0 %1605, %v1540
    %v1607 = vpop.permute.xlu0 %1606
    %1610 = vset.pattern.permute.xlu0 0
    %1611 = vperm.xlu0 %1610, %v1541
    %v1612 = vpop.permute.xlu0 %1611
    %1615 = vset.pattern.permute.xlu0 0
    %1616 = vperm.xlu0 %1615, %v1542
    %v1617 = vpop.permute.xlu0 %1616
    %1620 = vset.pattern.permute.xlu0 0
    %1621 = vperm.xlu0 %1620, %v1543
    %v1622 = vpop.permute.xlu0 %1621
    %1625 = vset.pattern.permute.xlu0 0
    %1626 = vperm.xlu0 %1625, %v1544
    %v1627 = vpop.permute.xlu0 %1626
    %1630 = vset.pattern.permute.xlu0 0
    %1631 = vperm.xlu0 %1630, %v1545
    %v1632 = vpop.permute.xlu0 %1631
    %1635 = vset.pattern.permute.xlu0 0
    %1636 = vperm.xlu0 %1635, %v1546
    %v1637 = vpop.permute.xlu0 %1636
    %1640 = vset.pattern.permute.xlu0 0
    %1641 = vperm.xlu0 %1640, %v1547
    %v1642 = vpop.permute.xlu0 %1641
    %1645 = vset.pattern.permute.xlu0 0
    %1646 = vperm.xlu0 %1645, %v1548
    %v1647 = vpop.permute.xlu0 %1646
    %1650 = vset.pattern.permute.xlu0 0
    %1651 = vperm.xlu0 %1650, %v1549
    %v1652 = vpop.permute.xlu0 %1651
    %1655 = vset.pattern.permute.xlu0 0
    %1656 = vperm.xlu0 %1655, %v1550
    %v1657 = vpop.permute.xlu0 %1656
    %1660 = vset.pattern.permute.xlu0 0
    %1661 = vperm.xlu0 %1660, %v1551
    %v1662 = vpop.permute.xlu0 %1661
    %1665 = vset.pattern.permute.xlu0 0
    %1666 = vperm.xlu0 %1665, %v1552
    %v1667 = vpop.permute.xlu0 %1666
    %1670 = vset.pattern.permute.xlu0 0
    %1671 = vperm.xlu0 %1670, %v1553
    %v1672 = vpop.permute.xlu0 %1671
    %1675 = vset.pattern.permute.xlu0 0
    %1676 = vperm.xlu0 %1675, %v1554
    %v1677 = vpop.permute.xlu0 %1676
    %1680 = vset.pattern.permute.xlu0 0
    %1681 = vperm.xlu0 %1680, %v1555
    %v1682 = vpop.permute.xlu0 %1681
    %1685 = vset.pattern.permute.xlu0 0
    %1686 = vperm.xlu0 %1685, %v1556
    %v1687 = vpop.permute.xlu0 %1686
    %1690 = vset.pattern.permute.xlu0 0
    %1691 = vperm.xlu0 %1690, %v1557
    %v1692 = vpop.permute.xlu0 %1691
    %1695 = vset.pattern.permute.xlu0 0
    %1696 = vperm.xlu0 %1695, %v1558
    %v1697 = vpop.permute.xlu0 %1696
    %1700 = vset.pattern.permute.xlu0 0
    %1701 = vperm.xlu0 %1700, %v1559
    %v1702 = vpop.permute.xlu0 %1701
    %1705 = vset.pattern.permute.xlu0 0
    %1706 = vperm.xlu0 %1705, %v1560
    %v1707 = vpop.permute.xlu0 %1706
    %1710 = vset.pattern.permute.xlu0 0
    %1711 = vperm.xlu0 %1710, %v1561
    %v1712 = vpop.permute.xlu0 %1711
    %1715 = vset.pattern.permute.xlu0 0
    %1716 = vperm.xlu0 %1715, %v1562
    %v1717 = vpop.permute.xlu0 %1716
    %1720 = vset.pattern.permute.xlu0 0
    %1721 = vperm.xlu0 %1720, %v1563
    %v1722 = vpop.permute.xlu0 %1721
    %v1724 = vmul.f32 %v46, %v1567
    %v1725 = vmul.f32 %v47, %v1572
    %v1726 = vmul.f32 %v48, %v1577
    %v1727 = vmul.f32 %v49, %v1582
    %v1728 = vmul.f32 %v50, %v1587
    %v1729 = vmul.f32 %v51, %v1592
    %v1730 = vmul.f32 %v52, %v1597
    %v1731 = vmul.f32 %v53, %v1602
    %v1732 = vmul.f32 %v54, %v1607
    %v1733 = vmul.f32 %v55, %v1612
    %v1734 = vmul.f32 %v56, %v1617
    %v1735 = vmul.f32 %v57, %v1622
    %v1736 = vmul.f32 %v58, %v1627
    %v1737 = vmul.f32 %v59, %v1632
    %v1738 = vmul.f32 %v60, %v1637
    %v1739 = vmul.f32 %v61, %v1642
    %v1740 = vmul.f32 %v62, %v1647
    %v1741 = vmul.f32 %v63, %v1652
    %v1742 = vmul.f32 %v64, %v1657
    %v1743 = vmul.f32 %v65, %v1662
    %v1744 = vmul.f32 %v66, %v1667
    %v1745 = vmul.f32 %v67, %v1672
    %v1746 = vmul.f32 %v68, %v1677
    %v1747 = vmul.f32 %v69, %v1682
    %v1748 = vmul.f32 %v70, %v1687
    %v1749 = vmul.f32 %v71, %v1692
    %v1750 = vmul.f32 %v72, %v1697
    %v1751 = vmul.f32 %v73, %v1702
    %v1752 = vmul.f32 %v74, %v1707
    %v1753 = vmul.f32 %v75, %v1712
    %v1754 = vmul.f32 %v76, %v1717
    %v1755 = vmul.f32 %v77, %v1722
    %v1756 = vsel %vm89, %v1724, 0.0
    %v1757 = vrot.slane %v1756, 4
    %v1758 = vadd.f32 %v1756, %v1757
    %v1759 = vrot.slane %v1758, 2
    %v1760 = vadd.f32 %v1758, %v1759
    %v1761 = vrot.slane %v1760, 1
    %v1762 = vadd.f32 %v1760, %v1761
    %v1763 = vsel %vm89, %v1725, 0.0
    %v1764 = vrot.slane %v1763, 4
    %v1765 = vadd.f32 %v1763, %v1764
    %v1766 = vrot.slane %v1765, 2
    %v1767 = vadd.f32 %v1765, %v1766
    %v1768 = vrot.slane %v1767, 1
    %v1769 = vadd.f32 %v1767, %v1768
    %v1770 = vsel %vm89, %v1726, 0.0
    %v1771 = vrot.slane %v1770, 4
    %v1772 = vadd.f32 %v1770, %v1771
    %v1773 = vrot.slane %v1772, 2
    %v1774 = vadd.f32 %v1772, %v1773
    %v1775 = vrot.slane %v1774, 1
    %v1776 = vadd.f32 %v1774, %v1775
    %v1777 = vsel %vm89, %v1727, 0.0
    %v1778 = vrot.slane %v1777, 4
    %v1779 = vadd.f32 %v1777, %v1778
    %v1780 = vrot.slane %v1779, 2
    %v1781 = vadd.f32 %v1779, %v1780
    %v1782 = vrot.slane %v1781, 1
    %v1783 = vadd.f32 %v1781, %v1782
    %v1784 = vsel %vm89, %v1728, 0.0
    %v1785 = vrot.slane %v1784, 4
    %v1786 = vadd.f32 %v1784, %v1785
    %v1787 = vrot.slane %v1786, 2
    %v1788 = vadd.f32 %v1786, %v1787
    %v1789 = vrot.slane %v1788, 1
    %v1790 = vadd.f32 %v1788, %v1789
    %v1791 = vsel %vm89, %v1729, 0.0
    %v1792 = vrot.slane %v1791, 4
    %v1793 = vadd.f32 %v1791, %v1792
    %v1794 = vrot.slane %v1793, 2
    %v1795 = vadd.f32 %v1793, %v1794
    %v1796 = vrot.slane %v1795, 1
    %v1797 = vadd.f32 %v1795, %v1796
    %v1798 = vsel %vm89, %v1730, 0.0
    %v1799 = vrot.slane %v1798, 4
    %v1800 = vadd.f32 %v1798, %v1799
    %v1801 = vrot.slane %v1800, 2
    %v1802 = vadd.f32 %v1800, %v1801
    %v1803 = vrot.slane %v1802, 1
    %v1804 = vadd.f32 %v1802, %v1803
    %v1805 = vsel %vm89, %v1731, 0.0
    %v1806 = vrot.slane %v1805, 4
    %v1807 = vadd.f32 %v1805, %v1806
    %v1808 = vrot.slane %v1807, 2
    %v1809 = vadd.f32 %v1807, %v1808
    %v1810 = vrot.slane %v1809, 1
    %v1811 = vadd.f32 %v1809, %v1810
    %v1812 = vsel %vm89, %v1732, 0.0
    %v1813 = vrot.slane %v1812, 4
    %v1814 = vadd.f32 %v1812, %v1813
    %v1815 = vrot.slane %v1814, 2
    %v1816 = vadd.f32 %v1814, %v1815
    %v1817 = vrot.slane %v1816, 1
    %v1818 = vadd.f32 %v1816, %v1817
    %v1819 = vsel %vm89, %v1733, 0.0
    %v1820 = vrot.slane %v1819, 4
    %v1821 = vadd.f32 %v1819, %v1820
    %v1822 = vrot.slane %v1821, 2
    %v1823 = vadd.f32 %v1821, %v1822
    %v1824 = vrot.slane %v1823, 1
    %v1825 = vadd.f32 %v1823, %v1824
    %v1826 = vsel %vm89, %v1734, 0.0
    %v1827 = vrot.slane %v1826, 4
    %v1828 = vadd.f32 %v1826, %v1827
    %v1829 = vrot.slane %v1828, 2
    %v1830 = vadd.f32 %v1828, %v1829
    %v1831 = vrot.slane %v1830, 1
    %v1832 = vadd.f32 %v1830, %v1831
    %v1833 = vsel %vm89, %v1735, 0.0
    %v1834 = vrot.slane %v1833, 4
    %v1835 = vadd.f32 %v1833, %v1834
    %v1836 = vrot.slane %v1835, 2
    %v1837 = vadd.f32 %v1835, %v1836
    %v1838 = vrot.slane %v1837, 1
    %v1839 = vadd.f32 %v1837, %v1838
    %v1840 = vsel %vm89, %v1736, 0.0
    %v1841 = vrot.slane %v1840, 4
    %v1842 = vadd.f32 %v1840, %v1841
    %v1843 = vrot.slane %v1842, 2
    %v1844 = vadd.f32 %v1842, %v1843
    %v1845 = vrot.slane %v1844, 1
    %v1846 = vadd.f32 %v1844, %v1845
    %v1847 = vsel %vm89, %v1737, 0.0
    %v1848 = vrot.slane %v1847, 4
    %v1849 = vadd.f32 %v1847, %v1848
    %v1850 = vrot.slane %v1849, 2
    %v1851 = vadd.f32 %v1849, %v1850
    %v1852 = vrot.slane %v1851, 1
    %v1853 = vadd.f32 %v1851, %v1852
    %v1854 = vsel %vm89, %v1738, 0.0
    %v1855 = vrot.slane %v1854, 4
    %v1856 = vadd.f32 %v1854, %v1855
    %v1857 = vrot.slane %v1856, 2
    %v1858 = vadd.f32 %v1856, %v1857
    %v1859 = vrot.slane %v1858, 1
    %v1860 = vadd.f32 %v1858, %v1859
    %v1861 = vsel %vm89, %v1739, 0.0
    %v1862 = vrot.slane %v1861, 4
    %v1863 = vadd.f32 %v1861, %v1862
    %v1864 = vrot.slane %v1863, 2
    %v1865 = vadd.f32 %v1863, %v1864
    %v1866 = vrot.slane %v1865, 1
    %v1867 = vadd.f32 %v1865, %v1866
    %v1868 = vsel %vm89, %v1740, 0.0
    %v1869 = vrot.slane %v1868, 4
    %v1870 = vadd.f32 %v1868, %v1869
    %v1871 = vrot.slane %v1870, 2
    %v1872 = vadd.f32 %v1870, %v1871
    %v1873 = vrot.slane %v1872, 1
    %v1874 = vadd.f32 %v1872, %v1873
    %v1875 = vsel %vm89, %v1741, 0.0
    %v1876 = vrot.slane %v1875, 4
    %v1877 = vadd.f32 %v1875, %v1876
    %v1878 = vrot.slane %v1877, 2
    %v1879 = vadd.f32 %v1877, %v1878
    %v1880 = vrot.slane %v1879, 1
    %v1881 = vadd.f32 %v1879, %v1880
    %v1882 = vsel %vm89, %v1742, 0.0
    %v1883 = vrot.slane %v1882, 4
    %v1884 = vadd.f32 %v1882, %v1883
    %v1885 = vrot.slane %v1884, 2
    %v1886 = vadd.f32 %v1884, %v1885
    %v1887 = vrot.slane %v1886, 1
    %v1888 = vadd.f32 %v1886, %v1887
    %v1889 = vsel %vm89, %v1743, 0.0
    %v1890 = vrot.slane %v1889, 4
    %v1891 = vadd.f32 %v1889, %v1890
    %v1892 = vrot.slane %v1891, 2
    %v1893 = vadd.f32 %v1891, %v1892
    %v1894 = vrot.slane %v1893, 1
    %v1895 = vadd.f32 %v1893, %v1894
    %v1896 = vsel %vm89, %v1744, 0.0
    %v1897 = vrot.slane %v1896, 4
    %v1898 = vadd.f32 %v1896, %v1897
    %v1899 = vrot.slane %v1898, 2
    %v1900 = vadd.f32 %v1898, %v1899
    %v1901 = vrot.slane %v1900, 1
    %v1902 = vadd.f32 %v1900, %v1901
    %v1903 = vsel %vm89, %v1745, 0.0
    %v1904 = vrot.slane %v1903, 4
    %v1905 = vadd.f32 %v1903, %v1904
    %v1906 = vrot.slane %v1905, 2
    %v1907 = vadd.f32 %v1905, %v1906
    %v1908 = vrot.slane %v1907, 1
    %v1909 = vadd.f32 %v1907, %v1908
    %v1910 = vsel %vm89, %v1746, 0.0
    %v1911 = vrot.slane %v1910, 4
    %v1912 = vadd.f32 %v1910, %v1911
    %v1913 = vrot.slane %v1912, 2
    %v1914 = vadd.f32 %v1912, %v1913
    %v1915 = vrot.slane %v1914, 1
    %v1916 = vadd.f32 %v1914, %v1915
    %v1917 = vsel %vm89, %v1747, 0.0
    %v1918 = vrot.slane %v1917, 4
    %v1919 = vadd.f32 %v1917, %v1918
    %v1920 = vrot.slane %v1919, 2
    %v1921 = vadd.f32 %v1919, %v1920
    %v1922 = vrot.slane %v1921, 1
    %v1923 = vadd.f32 %v1921, %v1922
    %v1924 = vsel %vm89, %v1748, 0.0
    %v1925 = vrot.slane %v1924, 4
    %v1926 = vadd.f32 %v1924, %v1925
    %v1927 = vrot.slane %v1926, 2
    %v1928 = vadd.f32 %v1926, %v1927
    %v1929 = vrot.slane %v1928, 1
    %v1930 = vadd.f32 %v1928, %v1929
    %v1931 = vsel %vm89, %v1749, 0.0
    %v1932 = vrot.slane %v1931, 4
    %v1933 = vadd.f32 %v1931, %v1932
    %v1934 = vrot.slane %v1933, 2
    %v1935 = vadd.f32 %v1933, %v1934
    %v1936 = vrot.slane %v1935, 1
    %v1937 = vadd.f32 %v1935, %v1936
    %v1938 = vsel %vm89, %v1750, 0.0
    %v1939 = vrot.slane %v1938, 4
    %v1940 = vadd.f32 %v1938, %v1939
    %v1941 = vrot.slane %v1940, 2
    %v1942 = vadd.f32 %v1940, %v1941
    %v1943 = vrot.slane %v1942, 1
    %v1944 = vadd.f32 %v1942, %v1943
    %v1945 = vsel %vm89, %v1751, 0.0
    %v1946 = vrot.slane %v1945, 4
    %v1947 = vadd.f32 %v1945, %v1946
    %v1948 = vrot.slane %v1947, 2
    %v1949 = vadd.f32 %v1947, %v1948
    %v1950 = vrot.slane %v1949, 1
    %v1951 = vadd.f32 %v1949, %v1950
    %v1952 = vsel %vm89, %v1752, 0.0
    %v1953 = vrot.slane %v1952, 4
    %v1954 = vadd.f32 %v1952, %v1953
    %v1955 = vrot.slane %v1954, 2
    %v1956 = vadd.f32 %v1954, %v1955
    %v1957 = vrot.slane %v1956, 1
    %v1958 = vadd.f32 %v1956, %v1957
    %v1959 = vsel %vm89, %v1753, 0.0
    %v1960 = vrot.slane %v1959, 4
    %v1961 = vadd.f32 %v1959, %v1960
    %v1962 = vrot.slane %v1961, 2
    %v1963 = vadd.f32 %v1961, %v1962
    %v1964 = vrot.slane %v1963, 1
    %v1965 = vadd.f32 %v1963, %v1964
    %v1966 = vsel %vm89, %v1754, 0.0
    %v1967 = vrot.slane %v1966, 4
    %v1968 = vadd.f32 %v1966, %v1967
    %v1969 = vrot.slane %v1968, 2
    %v1970 = vadd.f32 %v1968, %v1969
    %v1971 = vrot.slane %v1970, 1
    %v1972 = vadd.f32 %v1970, %v1971
    %v1973 = vsel %vm89, %v1755, 0.0
    %v1974 = vrot.slane %v1973, 4
    %v1975 = vadd.f32 %v1973, %v1974
    %v1976 = vrot.slane %v1975, 2
    %v1977 = vadd.f32 %v1975, %v1976
    %v1978 = vrot.slane %v1977, 1
    %v1979 = vadd.f32 %v1977, %v1978
    %v1988 = vsel %vm752, %v1769, %v1762
    %v1989 = vsel %vm754, %v1776, %v1988
    %v1990 = vsel %vm756, %v1783, %v1989
    %v1991 = vsel %vm758, %v1790, %v1990
    %v1992 = vsel %vm760, %v1797, %v1991
    %v1993 = vsel %vm762, %v1804, %v1992
    %v1994 = vsel %vm764, %v1811, %v1993
    %1996 = vst.msk [vmem:[#allocation7] sm:$0xff] %vm89, %v1994
    %v2005 = vsel %vm752, %v1825, %v1818
    %v2006 = vsel %vm754, %v1832, %v2005
    %v2007 = vsel %vm756, %v1839, %v2006
    %v2008 = vsel %vm758, %v1846, %v2007
    %v2009 = vsel %vm760, %v1853, %v2008
    %v2010 = vsel %vm762, %v1860, %v2009
    %v2011 = vsel %vm764, %v1867, %v2010
    %2012 = vrot.lane.b32.xlu0 %v2011, 32
    %v2013 = vpop.permute.xlu0 %2012
    %vm2015 = vcmask 523520
    %2016 = vst.msk [vmem:[#allocation7] sm:$0xff] %vm2015, %v2013
    %v2025 = vsel %vm752, %v1881, %v1874
    %v2026 = vsel %vm754, %v1888, %v2025
    %v2027 = vsel %vm756, %v1895, %v2026
    %v2028 = vsel %vm758, %v1902, %v2027
    %v2029 = vsel %vm760, %v1909, %v2028
    %v2030 = vsel %vm762, %v1916, %v2029
    %v2031 = vsel %vm764, %v1923, %v2030
    %2032 = vrot.lane.b32.xlu0 %v2031, 64
    %v2033 = vpop.permute.xlu0 %2032
    %vm2035 = vcmask 785920
    %2036 = vst.msk [vmem:[#allocation7] sm:$0xff] %vm2035, %v2033
    %v2045 = vsel %vm752, %v1937, %v1930
    %v2046 = vsel %vm754, %v1944, %v2045
    %v2047 = vsel %vm756, %v1951, %v2046
    %v2048 = vsel %vm758, %v1958, %v2047
    %v2049 = vsel %vm760, %v1965, %v2048
    %v2050 = vsel %vm762, %v1972, %v2049
    %v2051 = vsel %vm764, %v1979, %v2050
    %2052 = vrot.lane.b32.xlu0 %v2051, 96
    %v2053 = vpop.permute.xlu0 %2052
    %vm2055 = vcmask 1048320
    %2056 = vst.msk [vmem:[#allocation7] sm:$0xff] %vm2055, %v2053
    // Predicated region
    $region26: #{tpu_custom_call.1} parent=1 // pred_check
      _
    $region27: #{tpu_custom_call.1} parent=1 // pred_check_branch
      %2058 = sbr.rel (0) target = $region29
    $region28: #{tpu_custom_call.1} parent=1 // pred_region
      %s2060 = ssub.s32 128, 128
      %2061 = vsyncadd [#allocation4], %s2060
      %s2063 = sshll.u32 [#allocation7], 4
      %s2064 = int_to_ptr.vmem [resolvable:$true] %s2063
      %2066 = dma.vmem_to_hbm [thread:$0]  %s2064, 128, %s4, [#allocation4]
    $region29: #{tpu_custom_call.1} parent=1 // pred_fallthru
      _
    // Predicated region
    $region30: #{tpu_custom_call.1} parent=1 // pred_check
      _
    $region31: #{tpu_custom_call.1} parent=1 // pred_check_branch
      %2068 = sbr.rel (0) target = $region33
    $region32: #{tpu_custom_call.1} parent=1 // pred_region
      %2069 = dma.done [#allocation4], 128
    $region33: #{tpu_custom_call.1} parent=1 // pred_fallthru
      _
    %2070 = vsyncpa [#allocation3], 1
    %2071 = vsyncpa [#allocation6], 1
    %2072 = vsyncpa [#allocation4], 1

// kernel: tpu_custom_call.1
$region0: #{tpu_custom_call.1}
  #allocation0 [shape = 'u32[]', space=smem, size = 0x4, offset = 0x4, fixed_abs, tag = 'smem constant byte address 0x4 - core index']
  #allocation1 [shape = 'u32[144,128]{1,0:T(1,128)}', space=vmem, size = 0x12000, scoped, tag = 'internal scratch']
  %s0 = inlined_call_operand.hbm [shape: f32[32,8,32], index: 0, kind: input, shape index: {}]
  %s1 = inlined_call_operand.hbm [shape: f32[32,32], index: 1, kind: input, shape index: {}]
  %s2 = inlined_call_operand.vmem [shape: f32[1,32], index: 2, kind: input, shape index: {}]
  %s3 = inlined_call_operand.vmem [shape: f32[1,32], index: 3, kind: input, shape index: {}]
  %s4 = inlined_call_operand.hbm [shape: f32[8,128], index: 4, kind: output, shape index: {}]
  %s5 = sld [smem:[#allocation0]]
  $region34: #{tpu_custom_call.1} parent=0
    _
  %s7 = ssub.s32 1, %s5
  %s8 = scalar_select 0, %s7, %s5
  $region1: #{tpu_custom_call.1} parent=0
    #allocation2 [shape = 'u8[131072]{0}', space=vmem, size = 0x20000, scoped, tag = 'input window, operand 0, single buffered']
    #allocation3 [shape = 's32[1]{0}', space=sflag, size = 0x4, scoped, tag = 'scoped memory for tpu_custom_call.1']
    #allocation4 [shape = 's32[1]{0}', space=sflag, size = 0x4, scoped, tag = 'scoped memory for tpu_custom_call.1']
    #allocation5 [shape = 'u8[16384]{0}', space=vmem, size = 0x4000, scoped, tag = 'input window, operand 1, single buffered']
    #allocation6 [shape = 's32[1]{0}', space=sflag, size = 0x4, scoped, tag = 'scoped memory for tpu_custom_call.1']
    #allocation7 [shape = 'u8[4096]{0}', space=vmem, size = 0x1000, scoped, tag = 'output window, operand 0, single buffered']
    %9 = vsyncpa [#allocation3], 0
    %10 = vsyncpa [#allocation6], 0
    %11 = vsyncpa [#allocation4], 0
    // Predicated region
    $region2: #{tpu_custom_call.1} parent=1 // pred_check
      _
    $region3: #{tpu_custom_call.1} parent=1 // pred_check_branch
      %13 = sbr.rel (0) target = $region5
    $region4: #{tpu_custom_call.1} parent=1 // pred_region
      %s15 = ssub.s32 4096, 4096
      %16 = vsyncadd [#allocation3], %s15
      %s17 = sshll.u32 [#allocation2], 4
      %s18 = int_to_ptr.vmem [resolvable:$true] %s17
      %23 = dma.hbm_to_vmem [thread:$0]  %s0, 4096, %s18, [#allocation3], 128, 128, 8
    $region5: #{tpu_custom_call.1} parent=1 // pred_fallthru
      _
    // Predicated region
    $region6: #{tpu_custom_call.1} parent=1 // pred_check
      _
    $region7: #{tpu_custom_call.1} parent=1 // pred_check_branch
      %25 = sbr.rel (0) target = $region9
    $region8: #{tpu_custom_call.1} parent=1 // pred_region
      %s27 = ssub.s32 512, 512
      %28 = vsyncadd [#allocation6], %s27
      %s29 = sshll.u32 [#allocation5], 4
      %s30 = int_to_ptr.vmem [resolvable:$true] %s29
      %35 = dma.hbm_to_vmem [thread:$0]  %s1, 512, %s30, [#allocation6], 128, 128, 8
    $region9: #{tpu_custom_call.1} parent=1 // pred_fallthru
      _
    // Predicated region
    $region10: #{tpu_custom_call.1} parent=1 // pred_check
      _
    $region11: #{tpu_custom_call.1} parent=1 // pred_check_branch
      %37 = sbr.rel (0) target = $region13
    $region12: #{tpu_custom_call.1} parent=1 // pred_region
      _
    $region13: #{tpu_custom_call.1} parent=1 // pred_fallthru
      _
    // Predicated region
    $region14: #{tpu_custom_call.1} parent=1 // pred_check
      _
    $region15: #{tpu_custom_call.1} parent=1 // pred_check_branch
      %39 = sbr.rel (0) target = $region17
    $region16: #{tpu_custom_call.1} parent=1 // pred_region
      _
    $region17: #{tpu_custom_call.1} parent=1 // pred_fallthru
      _
    // Predicated region
    $region18: #{tpu_custom_call.1} parent=1 // pred_check
      _
    $region19: #{tpu_custom_call.1} parent=1 // pred_check_branch
      %41 = sbr.rel (0) target = $region21
    $region20: #{tpu_custom_call.1} parent=1 // pred_region
      %42 = dma.done [#allocation3], 4096
    $region21: #{tpu_custom_call.1} parent=1 // pred_fallthru
      _
    // Predicated region
    $region22: #{tpu_custom_call.1} parent=1 // pred_check
      _
    $region23: #{tpu_custom_call.1} parent=1 // pred_check_branch
      %44 = sbr.rel (0) target = $region25
    $region24: #{tpu_custom_call.1} parent=1 // pred_region
      %45 = dma.done [#allocation6], 512
    $region25: #{tpu_custom_call.1} parent=1 // pred_fallthru
      _
    %v46 = vld [vmem:[#allocation2] sm:$0xff]
    %v47 = vld [vmem:[#allocation2 + $0x8] sm:$0xff]
    %v48 = vld [vmem:[#allocation2 + $0x10] sm:$0xff]
    %v49 = vld [vmem:[#allocation2 + $0x18] sm:$0xff]
    %v50 = vld [vmem:[#allocation2 + $0x20] sm:$0xff]
    %v51 = vld [vmem:[#allocation2 + $0x28] sm:$0xff]
    %v52 = vld [vmem:[#allocation2 + $0x30] sm:$0xff]
    %v53 = vld [vmem:[#allocation2 + $0x38] sm:$0xff]
    %v54 = vld [vmem:[#allocation2 + $0x40] sm:$0xff]
    %v55 = vld [vmem:[#allocation2 + $0x48] sm:$0xff]
    %v56 = vld [vmem:[#allocation2 + $0x50] sm:$0xff]
    %v57 = vld [vmem:[#allocation2 + $0x58] sm:$0xff]
    %v58 = vld [vmem:[#allocation2 + $0x60] sm:$0xff]
    %v59 = vld [vmem:[#allocation2 + $0x68] sm:$0xff]
    %v60 = vld [vmem:[#allocation2 + $0x70] sm:$0xff]
    %v61 = vld [vmem:[#allocation2 + $0x78] sm:$0xff]
    %v62 = vld [vmem:[#allocation2 + $0x80] sm:$0xff]
    %v63 = vld [vmem:[#allocation2 + $0x88] sm:$0xff]
    %v64 = vld [vmem:[#allocation2 + $0x90] sm:$0xff]
    %v65 = vld [vmem:[#allocation2 + $0x98] sm:$0xff]
    %v66 = vld [vmem:[#allocation2 + $0xa0] sm:$0xff]
    %v67 = vld [vmem:[#allocation2 + $0xa8] sm:$0xff]
    %v68 = vld [vmem:[#allocation2 + $0xb0] sm:$0xff]
    %v69 = vld [vmem:[#allocation2 + $0xb8] sm:$0xff]
    %v70 = vld [vmem:[#allocation2 + $0xc0] sm:$0xff]
    %v71 = vld [vmem:[#allocation2 + $0xc8] sm:$0xff]
    %v72 = vld [vmem:[#allocation2 + $0xd0] sm:$0xff]
    %v73 = vld [vmem:[#allocation2 + $0xd8] sm:$0xff]
    %v74 = vld [vmem:[#allocation2 + $0xe0] sm:$0xff]
    %v75 = vld [vmem:[#allocation2 + $0xe8] sm:$0xff]
    %v76 = vld [vmem:[#allocation2 + $0xf0] sm:$0xff]
    %v77 = vld [vmem:[#allocation2 + $0xf8] sm:$0xff]
    %v78 = vld [vmem:[#allocation5] sm:$0xff]
    %v79 = vld [vmem:[#allocation5 + $0x8] sm:$0xff]
    %v80 = vld [vmem:[#allocation5 + $0x10] sm:$0xff]
    %v81 = vld [vmem:[#allocation5 + $0x18] sm:$0xff]
    %v82 = vld [vmem:[%s2] sm:$0x1]
    %v84 = vlaneseq
    %v85 = vshrl.u32 %v84, 7
    %v86 = vsub.s32 0, %v85
    %v87 = vrot.slane %v82, %v86
    %vm89 = vcmask 261120
    %v91 = vsel %vm89, %v46, 0
    %v94 = vsel %vm89, %v47, 0
    %v97 = vsel %vm89, %v48, 0
    %v100 = vsel %vm89, %v49, 0
    %v103 = vsel %vm89, %v50, 0
    %v106 = vsel %vm89, %v51, 0
    %v109 = vsel %vm89, %v52, 0
    %v112 = vsel %vm89, %v53, 0
    %v115 = vsel %vm89, %v54, 0
    %v118 = vsel %vm89, %v55, 0
    %v121 = vsel %vm89, %v56, 0
    %v124 = vsel %vm89, %v57, 0
    %v127 = vsel %vm89, %v58, 0
    %v130 = vsel %vm89, %v59, 0
    %v133 = vsel %vm89, %v60, 0
    %v136 = vsel %vm89, %v61, 0
    %v139 = vsel %vm89, %v62, 0
    %v142 = vsel %vm89, %v63, 0
    %v145 = vsel %vm89, %v64, 0
    %v148 = vsel %vm89, %v65, 0
    %v151 = vsel %vm89, %v66, 0
    %v154 = vsel %vm89, %v67, 0
    %v157 = vsel %vm89, %v68, 0
    %v160 = vsel %vm89, %v69, 0
    %v163 = vsel %vm89, %v70, 0
    %v166 = vsel %vm89, %v71, 0
    %v169 = vsel %vm89, %v72, 0
    %v172 = vsel %vm89, %v73, 0
    %v175 = vsel %vm89, %v74, 0
    %v178 = vsel %vm89, %v75, 0
    %v181 = vsel %vm89, %v76, 0
    %v184 = vsel %vm89, %v77, 0
    %v187 = vsel %vm89, %v78, 0
    %v190 = vsel %vm89, %v79, 0
    %v193 = vsel %vm89, %v80, 0
    %v196 = vsel %vm89, %v81, 0
    %198 = vmatprep.subr.mxu0 0.0
    %199 = vmatpush1.xpose.msra.mxu0 %v187
    %200 = vmatprep.subr.mxu0 0.0
    %201 = vmatpush1.xpose.msra.mxu0 %v190
    %202 = vmatprep.subr.mxu0 0.0
    %203 = vmatpush1.xpose.msra.mxu0 %v193
    %204 = vmatprep.subr.mxu0 0.0
    %205 = vmatpush1.xpose.msra.mxu0 %v196
    %206 = vmatprep.subr.mxu0 0.0
    %207 = vmatpush1.xpose.msra.mxu0 0.0
    %208 = vmatprep.subr.mxu0 0.0
    %209 = vmatpush1.xpose.msra.mxu0 0.0
    %210 = vmatprep.subr.mxu0 0.0
    %211 = vmatpush1.xpose.msra.mxu0 0.0
    %212 = vmatprep.subr.mxu0 0.0
    %213 = vmatpush1.xpose.msra.mxu0 0.0
    %214 = vmatprep.subr.mxu0 0.0
    %215 = vmatpush1.xpose.msra.mxu0 0.0
    %216 = vmatprep.subr.mxu0 0.0
    %217 = vmatpush1.xpose.msra.mxu0 0.0
    %218 = vmatprep.subr.mxu0 0.0
    %219 = vmatpush1.xpose.msra.mxu0 0.0
    %220 = vmatprep.subr.mxu0 0.0
    %221 = vmatpush1.xpose.msra.mxu0 0.0
    %222 = vmatprep.subr.mxu0 0.0
    %223 = vmatpush1.xpose.msra.mxu0 0.0
    %224 = vmatprep.subr.mxu0 0.0
    %225 = vmatpush1.xpose.msra.mxu0 0.0
    %226 = vmatprep.subr.mxu0 0.0
    %227 = vmatpush1.xpose.msra.mxu0 0.0
    %228 = vmatprep.subr.mxu0 0.0
    %229 = vmatpush1.xpose.msra.mxu0 0.0
    %230 = vmatprep.subr.mxu0 0.0
    %231 = vmatpush1.xpose.msra.mxu0 0.0
    %232 = vmatprep.subr.mxu0 0.0
    %233 = vmatpush1.xpose.msra.mxu0 0.0
    %234 = vmatprep.subr.mxu0 0.0
    %235 = vmatpush1.xpose.msra.mxu0 0.0
    %236 = vmatprep.subr.mxu0 0.0
    %237 = vmatpush1.xpose.msra.mxu0 0.0
    %238 = vmatprep.subr.mxu0 0.0
    %239 = vmatpush1.xpose.msra.mxu0 0.0
    %240 = vmatprep.subr.mxu0 0.0
    %241 = vmatpush1.xpose.msra.mxu0 0.0
    %242 = vmatprep.subr.mxu0 0.0
    %243 = vmatpush1.xpose.msra.mxu0 0.0
    %244 = vmatprep.subr.mxu0 0.0
    %245 = vmatpush1.xpose.msra.mxu0 0.0
    %246 = vmatprep.subr.mxu0 0.0
    %247 = vmatpush1.xpose.msra.mxu0 0.0
    %248 = vmatprep.subr.mxu0 0.0
    %249 = vmatpush1.xpose.msra.mxu0 0.0
    %250 = vmatprep.subr.mxu0 0.0
    %251 = vmatpush1.xpose.msra.mxu0 0.0
    %252 = vmatprep.subr.mxu0 0.0
    %253 = vmatpush1.xpose.msra.mxu0 0.0
    %254 = vmatprep.subr.mxu0 0.0
    %255 = vmatpush1.xpose.msra.mxu0 0.0
    %256 = vmatprep.subr.mxu0 0.0
    %257 = vmatpush1.xpose.msra.mxu0 0.0
    %258 = vmatprep.subr.mxu0 0.0
    %259 = vmatpush1.xpose.msra.mxu0 0.0
    %260 = vmatprep.subr.mxu0 0.0
    %261 = vmatpush1.xpose.msra.mxu0 0.0
    %262 = vmatprep.mubr.f32.mxu0 0.0
    %263 = vmatmul.mubr.f32.gmra.mrb[0].mxu0 %v91
    %v264 = vpop.f32.mrb[0].mxu0
    %v265 = vadd.f32 %v87, %v264
    %v266 = vpop.f32.mrb[0].mxu0
    %267 = vmatprep.mubr.f32.mxu0 0.0
    %268 = vmatmul.mubr.f32.gmra.mrb[0].mxu0 %v94
    %v269 = vpop.f32.mrb[0].mxu0
    %v270 = vadd.f32 %v87, %v269
    %v271 = vpop.f32.mrb[0].mxu0
    %272 = vmatprep.mubr.f32.mxu0 0.0
    %273 = vmatmul.mubr.f32.gmra.mrb[0].mxu0 %v97
    %v274 = vpop.f32.mrb[0].mxu0
    %v275 = vadd.f32 %v87, %v274
    %v276 = vpop.f32.mrb[0].mxu0
    %277 = vmatprep.mubr.f32.mxu0 0.0
    %278 = vmatmul.mubr.f32.gmra.mrb[0].mxu0 %v100
    %v279 = vpop.f32.mrb[0].mxu0
    %v280 = vadd.f32 %v87, %v279
    %v281 = vpop.f32.mrb[0].mxu0
    %282 = vmatprep.mubr.f32.mxu0 0.0
    %283 = vmatmul.mubr.f32.gmra.mrb[0].mxu0 %v103
    %v284 = vpop.f32.mrb[0].mxu0
    %v285 = vadd.f32 %v87, %v284
    %v286 = vpop.f32.mrb[0].mxu0
    %287 = vmatprep.mubr.f32.mxu0 0.0
    %288 = vmatmul.mubr.f32.gmra.mrb[0].mxu0 %v106
    %v289 = vpop.f32.mrb[0].mxu0
    %v290 = vadd.f32 %v87, %v289
    %v291 = vpop.f32.mrb[0].mxu0
    %292 = vmatprep.mubr.f32.mxu0 0.0
    %293 = vmatmul.mubr.f32.gmra.mrb[0].mxu0 %v109
    %v294 = vpop.f32.mrb[0].mxu0
    %v295 = vadd.f32 %v87, %v294
    %v296 = vpop.f32.mrb[0].mxu0
    %297 = vmatprep.mubr.f32.mxu0 0.0
    %298 = vmatmul.mubr.f32.gmra.mrb[0].mxu0 %v112
    %v299 = vpop.f32.mrb[0].mxu0
    %v300 = vadd.f32 %v87, %v299
    %v301 = vpop.f32.mrb[0].mxu0
    %302 = vmatprep.mubr.f32.mxu0 0.0
    %303 = vmatmul.mubr.f32.gmra.mrb[0].mxu0 %v115
    %v304 = vpop.f32.mrb[0].mxu0
    %v305 = vadd.f32 %v87, %v304
    %v306 = vpop.f32.mrb[0].mxu0
    %307 = vmatprep.mubr.f32.mxu0 0.0
    %308 = vmatmul.mubr.f32.gmra.mrb[0].mxu0 %v118
    %v309 = vpop.f32.mrb[0].mxu0
    %v310 = vadd.f32 %v87, %v309
    %v311 = vpop.f32.mrb[0].mxu0
    %312 = vmatprep.mubr.f32.mxu0 0.0
    %313 = vmatmul.mubr.f32.gmra.mrb[0].mxu0 %v121
    %v314 = vpop.f32.mrb[0].mxu0
    %v315 = vadd.f32 %v87, %v314
    %v316 = vpop.f32.mrb[0].mxu0
    %317 = vmatprep.mubr.f32.mxu0 0.0
    %318 = vmatmul.mubr.f32.gmra.mrb[0].mxu0 %v124
    %v319 = vpop.f32.mrb[0].mxu0
    %v320 = vadd.f32 %v87, %v319
    %v321 = vpop.f32.mrb[0].mxu0
    %322 = vmatprep.mubr.f32.mxu0 0.0
    %323 = vmatmul.mubr.f32.gmra.mrb[0].mxu0 %v127
    %v324 = vpop.f32.mrb[0].mxu0
    %v325 = vadd.f32 %v87, %v324
    %v326 = vpop.f32.mrb[0].mxu0
    %327 = vmatprep.mubr.f32.mxu0 0.0
    %328 = vmatmul.mubr.f32.gmra.mrb[0].mxu0 %v130
    %v329 = vpop.f32.mrb[0].mxu0
    %v330 = vadd.f32 %v87, %v329
    %v331 = vpop.f32.mrb[0].mxu0
    %332 = vmatprep.mubr.f32.mxu0 0.0
    %333 = vmatmul.mubr.f32.gmra.mrb[0].mxu0 %v133
    %v334 = vpop.f32.mrb[0].mxu0
    %v335 = vadd.f32 %v87, %v334
    %v336 = vpop.f32.mrb[0].mxu0
    %337 = vmatprep.mubr.f32.mxu0 0.0
    %338 = vmatmul.mubr.f32.gmra.mrb[0].mxu0 %v136
    %v339 = vpop.f32.mrb[0].mxu0
    %v340 = vadd.f32 %v87, %v339
    %v341 = vpop.f32.mrb[0].mxu0
    %342 = vmatprep.mubr.f32.mxu0 0.0
    %343 = vmatmul.mubr.f32.gmra.mrb[0].mxu0 %v139
    %v344 = vpop.f32.mrb[0].mxu0
    %v345 = vadd.f32 %v87, %v344
    %v346 = vpop.f32.mrb[0].mxu0
    %347 = vmatprep.mubr.f32.mxu0 0.0
    %348 = vmatmul.mubr.f32.gmra.mrb[0].mxu0 %v142
    %v349 = vpop.f32.mrb[0].mxu0
    %v350 = vadd.f32 %v87, %v349
    %v351 = vpop.f32.mrb[0].mxu0
    %352 = vmatprep.mubr.f32.mxu0 0.0
    %353 = vmatmul.mubr.f32.gmra.mrb[0].mxu0 %v145
    %v354 = vpop.f32.mrb[0].mxu0
    %v355 = vadd.f32 %v87, %v354
    %v356 = vpop.f32.mrb[0].mxu0
    %357 = vmatprep.mubr.f32.mxu0 0.0
    %358 = vmatmul.mubr.f32.gmra.mrb[0].mxu0 %v148
    %v359 = vpop.f32.mrb[0].mxu0
    %v360 = vadd.f32 %v87, %v359
    %v361 = vpop.f32.mrb[0].mxu0
    %362 = vmatprep.mubr.f32.mxu0 0.0
    %363 = vmatmul.mubr.f32.gmra.mrb[0].mxu0 %v151
    %v364 = vpop.f32.mrb[0].mxu0
    %v365 = vadd.f32 %v87, %v364
    %v366 = vpop.f32.mrb[0].mxu0
    %367 = vmatprep.mubr.f32.mxu0 0.0
    %368 = vmatmul.mubr.f32.gmra.mrb[0].mxu0 %v154
    %v369 = vpop.f32.mrb[0].mxu0
    %v370 = vadd.f32 %v87, %v369
    %v371 = vpop.f32.mrb[0].mxu0
    %372 = vmatprep.mubr.f32.mxu0 0.0
    %373 = vmatmul.mubr.f32.gmra.mrb[0].mxu0 %v157
    %v374 = vpop.f32.mrb[0].mxu0
    %v375 = vadd.f32 %v87, %v374
    %v376 = vpop.f32.mrb[0].mxu0
    %377 = vmatprep.mubr.f32.mxu0 0.0
    %378 = vmatmul.mubr.f32.gmra.mrb[0].mxu0 %v160
    %v379 = vpop.f32.mrb[0].mxu0
    %v380 = vadd.f32 %v87, %v379
    %v381 = vpop.f32.mrb[0].mxu0
    %382 = vmatprep.mubr.f32.mxu0 0.0
    %383 = vmatmul.mubr.f32.gmra.mrb[0].mxu0 %v163
    %v384 = vpop.f32.mrb[0].mxu0
    %v385 = vadd.f32 %v87, %v384
    %v386 = vpop.f32.mrb[0].mxu0
    %387 = vmatprep.mubr.f32.mxu0 0.0
    %388 = vmatmul.mubr.f32.gmra.mrb[0].mxu0 %v166
    %v389 = vpop.f32.mrb[0].mxu0
    %v390 = vadd.f32 %v87, %v389
    %v391 = vpop.f32.mrb[0].mxu0
    %392 = vmatprep.mubr.f32.mxu0 0.0
    %393 = vmatmul.mubr.f32.gmra.mrb[0].mxu0 %v169
    %v394 = vpop.f32.mrb[0].mxu0
    %v395 = vadd.f32 %v87, %v394
    %v396 = vpop.f32.mrb[0].mxu0
    %397 = vmatprep.mubr.f32.mxu0 0.0
    %398 = vmatmul.mubr.f32.gmra.mrb[0].mxu0 %v172
    %v399 = vpop.f32.mrb[0].mxu0
    %v400 = vadd.f32 %v87, %v399
    %v401 = vpop.f32.mrb[0].mxu0
    %402 = vmatprep.mubr.f32.mxu0 0.0
    %403 = vmatmul.mubr.f32.gmra.mrb[0].mxu0 %v175
    %v404 = vpop.f32.mrb[0].mxu0
    %v405 = vadd.f32 %v87, %v404
    %v406 = vpop.f32.mrb[0].mxu0
    %407 = vmatprep.mubr.f32.mxu0 0.0
    %408 = vmatmul.mubr.f32.gmra.mrb[0].mxu0 %v178
    %v409 = vpop.f32.mrb[0].mxu0
    %v410 = vadd.f32 %v87, %v409
    %v411 = vpop.f32.mrb[0].mxu0
    %412 = vmatprep.mubr.f32.mxu0 0.0
    %413 = vmatmul.mubr.f32.gmra.mrb[0].mxu0 %v181
    %v414 = vpop.f32.mrb[0].mxu0
    %v415 = vadd.f32 %v87, %v414
    %v416 = vpop.f32.mrb[0].mxu0
    %417 = vmatprep.mubr.f32.mxu0 0.0
    %418 = vmatmul.mubr.f32.gmra.mrb[0].mxu0 %v184
    %v419 = vpop.f32.mrb[0].mxu0
    %v420 = vadd.f32 %v87, %v419
    %v421 = vpop.f32.mrb[0].mxu0
    %422 = vdwg.mxu0
    %v423 = vtanh.pop %v265
    %v424 = vtanh.pop %v270
    %v425 = vtanh.pop %v275
    %v426 = vtanh.pop %v280
    %v427 = vtanh.pop %v285
    %v428 = vtanh.pop %v290
    %v429 = vtanh.pop %v295
    %v430 = vtanh.pop %v300
    %v431 = vtanh.pop %v305
    %v432 = vtanh.pop %v310
    %v433 = vtanh.pop %v315
    %v434 = vtanh.pop %v320
    %v435 = vtanh.pop %v325
    %v436 = vtanh.pop %v330
    %v437 = vtanh.pop %v335
    %v438 = vtanh.pop %v340
    %v439 = vtanh.pop %v345
    %v440 = vtanh.pop %v350
    %v441 = vtanh.pop %v355
    %v442 = vtanh.pop %v360
    %v443 = vtanh.pop %v365
    %v444 = vtanh.pop %v370
    %v445 = vtanh.pop %v375
    %v446 = vtanh.pop %v380
    %v447 = vtanh.pop %v385
    %v448 = vtanh.pop %v390
    %v449 = vtanh.pop %v395
    %v450 = vtanh.pop %v400
    %v451 = vtanh.pop %v405
    %v452 = vtanh.pop %v410
    %v453 = vtanh.pop %v415
    %v454 = vtanh.pop %v420
    %v455 = vld [vmem:[%s3] sm:$0x1]
    %v457 = vlaneseq
    %v458 = vshrl.u32 %v457, 7
    %v459 = vsub.s32 0, %v458
    %v460 = vrot.slane %v455, %v459
    %v462 = vmul.f32 %v423, %v460
    %v463 = vmul.f32 %v424, %v460
    %v464 = vmul.f32 %v425, %v460
    %v465 = vmul.f32 %v426, %v460
    %v466 = vmul.f32 %v427, %v460
    %v467 = vmul.f32 %v428, %v460
    %v468 = vmul.f32 %v429, %v460
    %v469 = vmul.f32 %v430, %v460
    %v470 = vmul.f32 %v431, %v460
    %v471 = vmul.f32 %v432, %v460
    %v472 = vmul.f32 %v433, %v460
    %v473 = vmul.f32 %v434, %v460
    %v474 = vmul.f32 %v435, %v460
    %v475 = vmul.f32 %v436, %v460
    %v476 = vmul.f32 %v437, %v460
    %v477 = vmul.f32 %v438, %v460
    %v478 = vmul.f32 %v439, %v460
    %v479 = vmul.f32 %v440, %v460
    %v480 = vmul.f32 %v441, %v460
    %v481 = vmul.f32 %v442, %v460
    %v482 = vmul.f32 %v443, %v460
    %v483 = vmul.f32 %v444, %v460
    %v484 = vmul.f32 %v445, %v460
    %v485 = vmul.f32 %v446, %v460
    %v486 = vmul.f32 %v447, %v460
    %v487 = vmul.f32 %v448, %v460
    %v488 = vmul.f32 %v449, %v460
    %v489 = vmul.f32 %v450, %v460
    %v490 = vmul.f32 %v451, %v460
    %v491 = vmul.f32 %v452, %v460
    %v492 = vmul.f32 %v453, %v460
    %v493 = vmul.f32 %v454, %v460
    %v494 = vsel %vm89, %v462, 0.0
    %495 = vadd.xlane.f32.xlu0 %v494
    %v496 = vpop.xlane.xlu0 %495
    %v497 = vsel %vm89, %v463, 0.0
    %498 = vadd.xlane.f32.xlu0 %v497
    %v499 = vpop.xlane.xlu0 %498
    %v500 = vsel %vm89, %v464, 0.0
    %501 = vadd.xlane.f32.xlu0 %v500
    %v502 = vpop.xlane.xlu0 %501
    %v503 = vsel %vm89, %v465, 0.0
    %504 = vadd.xlane.f32.xlu0 %v503
    %v505 = vpop.xlane.xlu0 %504
    %v506 = vsel %vm89, %v466, 0.0
    %507 = vadd.xlane.f32.xlu0 %v506
    %v508 = vpop.xlane.xlu0 %507
    %v509 = vsel %vm89, %v467, 0.0
    %510 = vadd.xlane.f32.xlu0 %v509
    %v511 = vpop.xlane.xlu0 %510
    %v512 = vsel %vm89, %v468, 0.0
    %513 = vadd.xlane.f32.xlu0 %v512
    %v514 = vpop.xlane.xlu0 %513
    %v515 = vsel %vm89, %v469, 0.0
    %516 = vadd.xlane.f32.xlu0 %v515
    %v517 = vpop.xlane.xlu0 %516
    %v518 = vsel %vm89, %v470, 0.0
    %519 = vadd.xlane.f32.xlu0 %v518
    %v520 = vpop.xlane.xlu0 %519
    %v521 = vsel %vm89, %v471, 0.0
    %522 = vadd.xlane.f32.xlu0 %v521
    %v523 = vpop.xlane.xlu0 %522
    %v524 = vsel %vm89, %v472, 0.0
    %525 = vadd.xlane.f32.xlu0 %v524
    %v526 = vpop.xlane.xlu0 %525
    %v527 = vsel %vm89, %v473, 0.0
    %528 = vadd.xlane.f32.xlu0 %v527
    %v529 = vpop.xlane.xlu0 %528
    %v530 = vsel %vm89, %v474, 0.0
    %531 = vadd.xlane.f32.xlu0 %v530
    %v532 = vpop.xlane.xlu0 %531
    %v533 = vsel %vm89, %v475, 0.0
    %534 = vadd.xlane.f32.xlu0 %v533
    %v535 = vpop.xlane.xlu0 %534
    %v536 = vsel %vm89, %v476, 0.0
    %537 = vadd.xlane.f32.xlu0 %v536
    %v538 = vpop.xlane.xlu0 %537
    %v539 = vsel %vm89, %v477, 0.0
    %540 = vadd.xlane.f32.xlu0 %v539
    %v541 = vpop.xlane.xlu0 %540
    %v542 = vsel %vm89, %v478, 0.0
    %543 = vadd.xlane.f32.xlu0 %v542
    %v544 = vpop.xlane.xlu0 %543
    %v545 = vsel %vm89, %v479, 0.0
    %546 = vadd.xlane.f32.xlu0 %v545
    %v547 = vpop.xlane.xlu0 %546
    %v548 = vsel %vm89, %v480, 0.0
    %549 = vadd.xlane.f32.xlu0 %v548
    %v550 = vpop.xlane.xlu0 %549
    %v551 = vsel %vm89, %v481, 0.0
    %552 = vadd.xlane.f32.xlu0 %v551
    %v553 = vpop.xlane.xlu0 %552
    %v554 = vsel %vm89, %v482, 0.0
    %555 = vadd.xlane.f32.xlu0 %v554
    %v556 = vpop.xlane.xlu0 %555
    %v557 = vsel %vm89, %v483, 0.0
    %558 = vadd.xlane.f32.xlu0 %v557
    %v559 = vpop.xlane.xlu0 %558
    %v560 = vsel %vm89, %v484, 0.0
    %561 = vadd.xlane.f32.xlu0 %v560
    %v562 = vpop.xlane.xlu0 %561
    %v563 = vsel %vm89, %v485, 0.0
    %564 = vadd.xlane.f32.xlu0 %v563
    %v565 = vpop.xlane.xlu0 %564
    %v566 = vsel %vm89, %v486, 0.0
    %567 = vadd.xlane.f32.xlu0 %v566
    %v568 = vpop.xlane.xlu0 %567
    %v569 = vsel %vm89, %v487, 0.0
    %570 = vadd.xlane.f32.xlu0 %v569
    %v571 = vpop.xlane.xlu0 %570
    %v572 = vsel %vm89, %v488, 0.0
    %573 = vadd.xlane.f32.xlu0 %v572
    %v574 = vpop.xlane.xlu0 %573
    %v575 = vsel %vm89, %v489, 0.0
    %576 = vadd.xlane.f32.xlu0 %v575
    %v577 = vpop.xlane.xlu0 %576
    %v578 = vsel %vm89, %v490, 0.0
    %579 = vadd.xlane.f32.xlu0 %v578
    %v580 = vpop.xlane.xlu0 %579
    %v581 = vsel %vm89, %v491, 0.0
    %582 = vadd.xlane.f32.xlu0 %v581
    %v583 = vpop.xlane.xlu0 %582
    %v584 = vsel %vm89, %v492, 0.0
    %585 = vadd.xlane.f32.xlu0 %v584
    %v586 = vpop.xlane.xlu0 %585
    %v587 = vsel %vm89, %v493, 0.0
    %588 = vadd.xlane.f32.xlu0 %v587
    %v589 = vpop.xlane.xlu0 %588
    %v622 = vlaneseq
    %v623 = vand.u32 %v622, 127
    %v624 = vlaneseq
    %v625 = vshrl.u32 %v624, 7
    %v626 = vsub.s32 %v623, %v625
    %v627 = vrot.slane %v496, %v626
    %v628 = vlaneseq
    %v629 = vshrl.u32 %v628, 7
    %v630 = vsub.s32 %v623, %v629
    %v631 = vrot.slane %v499, %v630
    %v632 = vlaneseq
    %v633 = vshrl.u32 %v632, 7
    %v634 = vsub.s32 %v623, %v633
    %v635 = vrot.slane %v502, %v634
    %v636 = vlaneseq
    %v637 = vshrl.u32 %v636, 7
    %v638 = vsub.s32 %v623, %v637
    %v639 = vrot.slane %v505, %v638
    %v640 = vlaneseq
    %v641 = vshrl.u32 %v640, 7
    %v642 = vsub.s32 %v623, %v641
    %v643 = vrot.slane %v508, %v642
    %v644 = vlaneseq
    %v645 = vshrl.u32 %v644, 7
    %v646 = vsub.s32 %v623, %v645
    %v647 = vrot.slane %v511, %v646
    %v648 = vlaneseq
    %v649 = vshrl.u32 %v648, 7
    %v650 = vsub.s32 %v623, %v649
    %v651 = vrot.slane %v514, %v650
    %v652 = vlaneseq
    %v653 = vshrl.u32 %v652, 7
    %v654 = vsub.s32 %v623, %v653
    %v655 = vrot.slane %v517, %v654
    %v656 = vlaneseq
    %v657 = vshrl.u32 %v656, 7
    %v658 = vsub.s32 %v623, %v657
    %v659 = vrot.slane %v520, %v658
    %v660 = vlaneseq
    %v661 = vshrl.u32 %v660, 7
    %v662 = vsub.s32 %v623, %v661
    %v663 = vrot.slane %v523, %v662
    %v664 = vlaneseq
    %v665 = vshrl.u32 %v664, 7
    %v666 = vsub.s32 %v623, %v665
    %v667 = vrot.slane %v526, %v666
    %v668 = vlaneseq
    %v669 = vshrl.u32 %v668, 7
    %v670 = vsub.s32 %v623, %v669
    %v671 = vrot.slane %v529, %v670
    %v672 = vlaneseq
    %v673 = vshrl.u32 %v672, 7
    %v674 = vsub.s32 %v623, %v673
    %v675 = vrot.slane %v532, %v674
    %v676 = vlaneseq
    %v677 = vshrl.u32 %v676, 7
    %v678 = vsub.s32 %v623, %v677
    %v679 = vrot.slane %v535, %v678
    %v680 = vlaneseq
    %v681 = vshrl.u32 %v680, 7
    %v682 = vsub.s32 %v623, %v681
    %v683 = vrot.slane %v538, %v682
    %v684 = vlaneseq
    %v685 = vshrl.u32 %v684, 7
    %v686 = vsub.s32 %v623, %v685
    %v687 = vrot.slane %v541, %v686
    %v688 = vlaneseq
    %v689 = vshrl.u32 %v688, 7
    %v690 = vsub.s32 %v623, %v689
    %v691 = vrot.slane %v544, %v690
    %v692 = vlaneseq
    %v693 = vshrl.u32 %v692, 7
    %v694 = vsub.s32 %v623, %v693
    %v695 = vrot.slane %v547, %v694
    %v696 = vlaneseq
    %v697 = vshrl.u32 %v696, 7
    %v698 = vsub.s32 %v623, %v697
    %v699 = vrot.slane %v550, %v698
    %v700 = vlaneseq
    %v701 = vshrl.u32 %v700, 7
    %v702 = vsub.s32 %v623, %v701
    %v703 = vrot.slane %v553, %v702
    %v704 = vlaneseq
    %v705 = vshrl.u32 %v704, 7
    %v706 = vsub.s32 %v623, %v705
    %v707 = vrot.slane %v556, %v706
    %v708 = vlaneseq
    %v709 = vshrl.u32 %v708, 7
    %v710 = vsub.s32 %v623, %v709
    %v711 = vrot.slane %v559, %v710
    %v712 = vlaneseq
    %v713 = vshrl.u32 %v712, 7
    %v714 = vsub.s32 %v623, %v713
    %v715 = vrot.slane %v562, %v714
    %v716 = vlaneseq
    %v717 = vshrl.u32 %v716, 7
    %v718 = vsub.s32 %v623, %v717
    %v719 = vrot.slane %v565, %v718
    %v720 = vlaneseq
    %v721 = vshrl.u32 %v720, 7
    %v722 = vsub.s32 %v623, %v721
    %v723 = vrot.slane %v568, %v722
    %v724 = vlaneseq
    %v725 = vshrl.u32 %v724, 7
    %v726 = vsub.s32 %v623, %v725
    %v727 = vrot.slane %v571, %v726
    %v728 = vlaneseq
    %v729 = vshrl.u32 %v728, 7
    %v730 = vsub.s32 %v623, %v729
    %v731 = vrot.slane %v574, %v730
    %v732 = vlaneseq
    %v733 = vshrl.u32 %v732, 7
    %v734 = vsub.s32 %v623, %v733
    %v735 = vrot.slane %v577, %v734
    %v736 = vlaneseq
    %v737 = vshrl.u32 %v736, 7
    %v738 = vsub.s32 %v623, %v737
    %v739 = vrot.slane %v580, %v738
    %v740 = vlaneseq
    %v741 = vshrl.u32 %v740, 7
    %v742 = vsub.s32 %v623, %v741
    %v743 = vrot.slane %v583, %v742
    %v744 = vlaneseq
    %v745 = vshrl.u32 %v744, 7
    %v746 = vsub.s32 %v623, %v745
    %v747 = vrot.slane %v586, %v746
    %v748 = vlaneseq
    %v749 = vshrl.u32 %v748, 7
    %v750 = vsub.s32 %v623, %v749
    %v751 = vrot.slane %v589, %v750
    %vm752 = vcmask 1041409
    %v753 = vsel %vm752, %v631, %v627
    %vm754 = vcmask 1042434
    %v755 = vsel %vm754, %v635, %v753
    %vm756 = vcmask 1043459
    %v757 = vsel %vm756, %v639, %v755
    %vm758 = vcmask 1044484
    %v759 = vsel %vm758, %v643, %v757
    %vm760 = vcmask 1045509
    %v761 = vsel %vm760, %v647, %v759
    %vm762 = vcmask 1046534
    %v763 = vsel %vm762, %v651, %v761
    %vm764 = vcmask 1047559
    %v765 = vsel %vm764, %v655, %v763
    %v766 = vsel %vm752, %v663, %v659
    %v767 = vsel %vm754, %v667, %v766
    %v768 = vsel %vm756, %v671, %v767
    %v769 = vsel %vm758, %v675, %v768
    %v770 = vsel %vm760, %v679, %v769
    %v771 = vsel %vm762, %v683, %v770
    %v772 = vsel %vm764, %v687, %v771
    %v773 = vsel %vm752, %v695, %v691
    %v774 = vsel %vm754, %v699, %v773
    %v775 = vsel %vm756, %v703, %v774
    %v776 = vsel %vm758, %v707, %v775
    %v777 = vsel %vm760, %v711, %v776
    %v778 = vsel %vm762, %v715, %v777
    %v779 = vsel %vm764, %v719, %v778
    %v780 = vsel %vm752, %v727, %v723
    %v781 = vsel %vm754, %v731, %v780
    %v782 = vsel %vm756, %v735, %v781
    %v783 = vsel %vm758, %v739, %v782
    %v784 = vsel %vm760, %v743, %v783
    %v785 = vsel %vm762, %v747, %v784
    %v786 = vsel %vm764, %v751, %v785
    %vm791 = vcmask 64512
    %v792 = vsel %vm791, %v765, -inf
    %793 = vmax.xlane.f32.xlu0 %v792
    %v794 = vpop.xlane.xlu0 %793
    %v795 = vsel %vm791, %v772, -inf
    %796 = vmax.xlane.f32.xlu0 %v795
    %v797 = vpop.xlane.xlu0 %796
    %v798 = vsel %vm791, %v779, -inf
    %799 = vmax.xlane.f32.xlu0 %v798
    %v800 = vpop.xlane.xlu0 %799
    %v801 = vsel %vm791, %v786, -inf
    %802 = vmax.xlane.f32.xlu0 %v801
    %v803 = vpop.xlane.xlu0 %802
    %v808 = vlaneseq
    %v809 = vshrl.u32 %v808, 7
    %v810 = vsub.s32 0, %v809
    %v811 = vrot.slane %v794, %v810
    %v812 = vlaneseq
    %v813 = vshrl.u32 %v812, 7
    %v814 = vsub.s32 1, %v813
    %v815 = vrot.slane %v794, %v814
    %v816 = vlaneseq
    %v817 = vshrl.u32 %v816, 7
    %v818 = vsub.s32 2, %v817
    %v819 = vrot.slane %v794, %v818
    %v820 = vlaneseq
    %v821 = vshrl.u32 %v820, 7
    %v822 = vsub.s32 3, %v821
    %v823 = vrot.slane %v794, %v822
    %v824 = vlaneseq
    %v825 = vshrl.u32 %v824, 7
    %v826 = vsub.s32 4, %v825
    %v827 = vrot.slane %v794, %v826
    %v828 = vlaneseq
    %v829 = vshrl.u32 %v828, 7
    %v830 = vsub.s32 5, %v829
    %v831 = vrot.slane %v794, %v830
    %v832 = vlaneseq
    %v833 = vshrl.u32 %v832, 7
    %v834 = vsub.s32 6, %v833
    %v835 = vrot.slane %v794, %v834
    %v836 = vlaneseq
    %v837 = vshrl.u32 %v836, 7
    %v838 = vsub.s32 7, %v837
    %v839 = vrot.slane %v794, %v838
    %v840 = vlaneseq
    %v841 = vshrl.u32 %v840, 7
    %v842 = vsub.s32 0, %v841
    %v843 = vrot.slane %v797, %v842
    %v844 = vlaneseq
    %v845 = vshrl.u32 %v844, 7
    %v846 = vsub.s32 1, %v845
    %v847 = vrot.slane %v797, %v846
    %v848 = vlaneseq
    %v849 = vshrl.u32 %v848, 7
    %v850 = vsub.s32 2, %v849
    %v851 = vrot.slane %v797, %v850
    %v852 = vlaneseq
    %v853 = vshrl.u32 %v852, 7
    %v854 = vsub.s32 3, %v853
    %v855 = vrot.slane %v797, %v854
    %v856 = vlaneseq
    %v857 = vshrl.u32 %v856, 7
    %v858 = vsub.s32 4, %v857
    %v859 = vrot.slane %v797, %v858
    %v860 = vlaneseq
    %v861 = vshrl.u32 %v860, 7
    %v862 = vsub.s32 5, %v861
    %v863 = vrot.slane %v797, %v862
    %v864 = vlaneseq
    %v865 = vshrl.u32 %v864, 7
    %v866 = vsub.s32 6, %v865
    %v867 = vrot.slane %v797, %v866
    %v868 = vlaneseq
    %v869 = vshrl.u32 %v868, 7
    %v870 = vsub.s32 7, %v869
    %v871 = vrot.slane %v797, %v870
    %v872 = vlaneseq
    %v873 = vshrl.u32 %v872, 7
    %v874 = vsub.s32 0, %v873
    %v875 = vrot.slane %v800, %v874
    %v876 = vlaneseq
    %v877 = vshrl.u32 %v876, 7
    %v878 = vsub.s32 1, %v877
    %v879 = vrot.slane %v800, %v878
    %v880 = vlaneseq
    %v881 = vshrl.u32 %v880, 7
    %v882 = vsub.s32 2, %v881
    %v883 = vrot.slane %v800, %v882
    %v884 = vlaneseq
    %v885 = vshrl.u32 %v884, 7
    %v886 = vsub.s32 3, %v885
    %v887 = vrot.slane %v800, %v886
    %v888 = vlaneseq
    %v889 = vshrl.u32 %v888, 7
    %v890 = vsub.s32 4, %v889
    %v891 = vrot.slane %v800, %v890
    %v892 = vlaneseq
    %v893 = vshrl.u32 %v892, 7
    %v894 = vsub.s32 5, %v893
    %v895 = vrot.slane %v800, %v894
    %v896 = vlaneseq
    %v897 = vshrl.u32 %v896, 7
    %v898 = vsub.s32 6, %v897
    %v899 = vrot.slane %v800, %v898
    %v900 = vlaneseq
    %v901 = vshrl.u32 %v900, 7
    %v902 = vsub.s32 7, %v901
    %v903 = vrot.slane %v800, %v902
    %v904 = vlaneseq
    %v905 = vshrl.u32 %v904, 7
    %v906 = vsub.s32 0, %v905
    %v907 = vrot.slane %v803, %v906
    %v908 = vlaneseq
    %v909 = vshrl.u32 %v908, 7
    %v910 = vsub.s32 1, %v909
    %v911 = vrot.slane %v803, %v910
    %v912 = vlaneseq
    %v913 = vshrl.u32 %v912, 7
    %v914 = vsub.s32 2, %v913
    %v915 = vrot.slane %v803, %v914
    %v916 = vlaneseq
    %v917 = vshrl.u32 %v916, 7
    %v918 = vsub.s32 3, %v917
    %v919 = vrot.slane %v803, %v918
    %v920 = vlaneseq
    %v921 = vshrl.u32 %v920, 7
    %v922 = vsub.s32 4, %v921
    %v923 = vrot.slane %v803, %v922
    %v924 = vlaneseq
    %v925 = vshrl.u32 %v924, 7
    %v926 = vsub.s32 5, %v925
    %v927 = vrot.slane %v803, %v926
    %v928 = vlaneseq
    %v929 = vshrl.u32 %v928, 7
    %v930 = vsub.s32 6, %v929
    %v931 = vrot.slane %v803, %v930
    %v932 = vlaneseq
    %v933 = vshrl.u32 %v932, 7
    %v934 = vsub.s32 7, %v933
    %v935 = vrot.slane %v803, %v934
    %v968 = vsub.f32 %v496, %v811
    %v969 = vsub.f32 %v499, %v815
    %v970 = vsub.f32 %v502, %v819
    %v971 = vsub.f32 %v505, %v823
    %v972 = vsub.f32 %v508, %v827
    %v973 = vsub.f32 %v511, %v831
    %v974 = vsub.f32 %v514, %v835
    %v975 = vsub.f32 %v517, %v839
    %v976 = vsub.f32 %v520, %v843
    %v977 = vsub.f32 %v523, %v847
    %v978 = vsub.f32 %v526, %v851
    %v979 = vsub.f32 %v529, %v855
    %v980 = vsub.f32 %v532, %v859
    %v981 = vsub.f32 %v535, %v863
    %v982 = vsub.f32 %v538, %v867
    %v983 = vsub.f32 %v541, %v871
    %v984 = vsub.f32 %v544, %v875
    %v985 = vsub.f32 %v547, %v879
    %v986 = vsub.f32 %v550, %v883
    %v987 = vsub.f32 %v553, %v887
    %v988 = vsub.f32 %v556, %v891
    %v989 = vsub.f32 %v559, %v895
    %v990 = vsub.f32 %v562, %v899
    %v991 = vsub.f32 %v565, %v903
    %v992 = vsub.f32 %v568, %v907
    %v993 = vsub.f32 %v571, %v911
    %v994 = vsub.f32 %v574, %v915
    %v995 = vsub.f32 %v577, %v919
    %v996 = vsub.f32 %v580, %v923
    %v997 = vsub.f32 %v583, %v927
    %v998 = vsub.f32 %v586, %v931
    %v999 = vsub.f32 %v589, %v935
    %v1000 = vmul.f32 %v968, 1.442695
    %v1001 = vpow.pop %v1000
    %v1002 = vmul.f32 %v969, 1.442695
    %v1003 = vpow.pop %v1002
    %v1004 = vmul.f32 %v970, 1.442695
    %v1005 = vpow.pop %v1004
    %v1006 = vmul.f32 %v971, 1.442695
    %v1007 = vpow.pop %v1006
    %v1008 = vmul.f32 %v972, 1.442695
    %v1009 = vpow.pop %v1008
    %v1010 = vmul.f32 %v973, 1.442695
    %v1011 = vpow.pop %v1010
    %v1012 = vmul.f32 %v974, 1.442695
    %v1013 = vpow.pop %v1012
    %v1014 = vmul.f32 %v975, 1.442695
    %v1015 = vpow.pop %v1014
    %v1016 = vmul.f32 %v976, 1.442695
    %v1017 = vpow.pop %v1016
    %v1018 = vmul.f32 %v977, 1.442695
    %v1019 = vpow.pop %v1018
    %v1020 = vmul.f32 %v978, 1.442695
    %v1021 = vpow.pop %v1020
    %v1022 = vmul.f32 %v979, 1.442695
    %v1023 = vpow.pop %v1022
    %v1024 = vmul.f32 %v980, 1.442695
    %v1025 = vpow.pop %v1024
    %v1026 = vmul.f32 %v981, 1.442695
    %v1027 = vpow.pop %v1026
    %v1028 = vmul.f32 %v982, 1.442695
    %v1029 = vpow.pop %v1028
    %v1030 = vmul.f32 %v983, 1.442695
    %v1031 = vpow.pop %v1030
    %v1032 = vmul.f32 %v984, 1.442695
    %v1033 = vpow.pop %v1032
    %v1034 = vmul.f32 %v985, 1.442695
    %v1035 = vpow.pop %v1034
    %v1036 = vmul.f32 %v986, 1.442695
    %v1037 = vpow.pop %v1036
    %v1038 = vmul.f32 %v987, 1.442695
    %v1039 = vpow.pop %v1038
    %v1040 = vmul.f32 %v988, 1.442695
    %v1041 = vpow.pop %v1040
    %v1042 = vmul.f32 %v989, 1.442695
    %v1043 = vpow.pop %v1042
    %v1044 = vmul.f32 %v990, 1.442695
    %v1045 = vpow.pop %v1044
    %v1046 = vmul.f32 %v991, 1.442695
    %v1047 = vpow.pop %v1046
    %v1048 = vmul.f32 %v992, 1.442695
    %v1049 = vpow.pop %v1048
    %v1050 = vmul.f32 %v993, 1.442695
    %v1051 = vpow.pop %v1050
    %v1052 = vmul.f32 %v994, 1.442695
    %v1053 = vpow.pop %v1052
    %v1054 = vmul.f32 %v995, 1.442695
    %v1055 = vpow.pop %v1054
    %v1056 = vmul.f32 %v996, 1.442695
    %v1057 = vpow.pop %v1056
    %v1058 = vmul.f32 %v997, 1.442695
    %v1059 = vpow.pop %v1058
    %v1060 = vmul.f32 %v998, 1.442695
    %v1061 = vpow.pop %v1060
    %v1062 = vmul.f32 %v999, 1.442695
    %v1063 = vpow.pop %v1062
    %1096 = vset.pattern.permute.xlu0 0
    %1097 = vperm.xlu0 %1096, %v1001
    %v1098 = vpop.permute.xlu0 %1097
    %1099 = vset.pattern.permute.xlu0 0
    %1100 = vperm.xlu0 %1099, %v1003
    %v1101 = vpop.permute.xlu0 %1100
    %1102 = vset.pattern.permute.xlu0 0
    %1103 = vperm.xlu0 %1102, %v1005
    %v1104 = vpop.permute.xlu0 %1103
    %1105 = vset.pattern.permute.xlu0 0
    %1106 = vperm.xlu0 %1105, %v1007
    %v1107 = vpop.permute.xlu0 %1106
    %1108 = vset.pattern.permute.xlu0 0
    %1109 = vperm.xlu0 %1108, %v1009
    %v1110 = vpop.permute.xlu0 %1109
    %1111 = vset.pattern.permute.xlu0 0
    %1112 = vperm.xlu0 %1111, %v1011
    %v1113 = vpop.permute.xlu0 %1112
    %1114 = vset.pattern.permute.xlu0 0
    %1115 = vperm.xlu0 %1114, %v1013
    %v1116 = vpop.permute.xlu0 %1115
    %1117 = vset.pattern.permute.xlu0 0
    %1118 = vperm.xlu0 %1117, %v1015
    %v1119 = vpop.permute.xlu0 %1118
    %1120 = vset.pattern.permute.xlu0 0
    %1121 = vperm.xlu0 %1120, %v1017
    %v1122 = vpop.permute.xlu0 %1121
    %1123 = vset.pattern.permute.xlu0 0
    %1124 = vperm.xlu0 %1123, %v1019
    %v1125 = vpop.permute.xlu0 %1124
    %1126 = vset.pattern.permute.xlu0 0
    %1127 = vperm.xlu0 %1126, %v1021
    %v1128 = vpop.permute.xlu0 %1127
    %1129 = vset.pattern.permute.xlu0 0
    %1130 = vperm.xlu0 %1129, %v1023
    %v1131 = vpop.permute.xlu0 %1130
    %1132 = vset.pattern.permute.xlu0 0
    %1133 = vperm.xlu0 %1132, %v1025
    %v1134 = vpop.permute.xlu0 %1133
    %1135 = vset.pattern.permute.xlu0 0
    %1136 = vperm.xlu0 %1135, %v1027
    %v1137 = vpop.permute.xlu0 %1136
    %1138 = vset.pattern.permute.xlu0 0
    %1139 = vperm.xlu0 %1138, %v1029
    %v1140 = vpop.permute.xlu0 %1139
    %1141 = vset.pattern.permute.xlu0 0
    %1142 = vperm.xlu0 %1141, %v1031
    %v1143 = vpop.permute.xlu0 %1142
    %1144 = vset.pattern.permute.xlu0 0
    %1145 = vperm.xlu0 %1144, %v1033
    %v1146 = vpop.permute.xlu0 %1145
    %1147 = vset.pattern.permute.xlu0 0
    %1148 = vperm.xlu0 %1147, %v1035
    %v1149 = vpop.permute.xlu0 %1148
    %1150 = vset.pattern.permute.xlu0 0
    %1151 = vperm.xlu0 %1150, %v1037
    %v1152 = vpop.permute.xlu0 %1151
    %1153 = vset.pattern.permute.xlu0 0
    %1154 = vperm.xlu0 %1153, %v1039
    %v1155 = vpop.permute.xlu0 %1154
    %1156 = vset.pattern.permute.xlu0 0
    %1157 = vperm.xlu0 %1156, %v1041
    %v1158 = vpop.permute.xlu0 %1157
    %1159 = vset.pattern.permute.xlu0 0
    %1160 = vperm.xlu0 %1159, %v1043
    %v1161 = vpop.permute.xlu0 %1160
    %1162 = vset.pattern.permute.xlu0 0
    %1163 = vperm.xlu0 %1162, %v1045
    %v1164 = vpop.permute.xlu0 %1163
    %1165 = vset.pattern.permute.xlu0 0
    %1166 = vperm.xlu0 %1165, %v1047
    %v1167 = vpop.permute.xlu0 %1166
    %1168 = vset.pattern.permute.xlu0 0
    %1169 = vperm.xlu0 %1168, %v1049
    %v1170 = vpop.permute.xlu0 %1169
    %1171 = vset.pattern.permute.xlu0 0
    %1172 = vperm.xlu0 %1171, %v1051
    %v1173 = vpop.permute.xlu0 %1172
    %1174 = vset.pattern.permute.xlu0 0
    %1175 = vperm.xlu0 %1174, %v1053
    %v1176 = vpop.permute.xlu0 %1175
    %1177 = vset.pattern.permute.xlu0 0
    %1178 = vperm.xlu0 %1177, %v1055
    %v1179 = vpop.permute.xlu0 %1178
    %1180 = vset.pattern.permute.xlu0 0
    %1181 = vperm.xlu0 %1180, %v1057
    %v1182 = vpop.permute.xlu0 %1181
    %1183 = vset.pattern.permute.xlu0 0
    %1184 = vperm.xlu0 %1183, %v1059
    %v1185 = vpop.permute.xlu0 %1184
    %1186 = vset.pattern.permute.xlu0 0
    %1187 = vperm.xlu0 %1186, %v1061
    %v1188 = vpop.permute.xlu0 %1187
    %1189 = vset.pattern.permute.xlu0 0
    %1190 = vperm.xlu0 %1189, %v1063
    %v1191 = vpop.permute.xlu0 %1190
    %v1192 = vlaneseq
    %v1193 = vshrl.u32 %v1192, 7
    %v1194 = vsub.s32 %v623, %v1193
    %v1195 = vrot.slane %v1098, %v1194
    %v1196 = vlaneseq
    %v1197 = vshrl.u32 %v1196, 7
    %v1198 = vsub.s32 %v623, %v1197
    %v1199 = vrot.slane %v1101, %v1198
    %v1200 = vlaneseq
    %v1201 = vshrl.u32 %v1200, 7
    %v1202 = vsub.s32 %v623, %v1201
    %v1203 = vrot.slane %v1104, %v1202
    %v1204 = vlaneseq
    %v1205 = vshrl.u32 %v1204, 7
    %v1206 = vsub.s32 %v623, %v1205
    %v1207 = vrot.slane %v1107, %v1206
    %v1208 = vlaneseq
    %v1209 = vshrl.u32 %v1208, 7
    %v1210 = vsub.s32 %v623, %v1209
    %v1211 = vrot.slane %v1110, %v1210
    %v1212 = vlaneseq
    %v1213 = vshrl.u32 %v1212, 7
    %v1214 = vsub.s32 %v623, %v1213
    %v1215 = vrot.slane %v1113, %v1214
    %v1216 = vlaneseq
    %v1217 = vshrl.u32 %v1216, 7
    %v1218 = vsub.s32 %v623, %v1217
    %v1219 = vrot.slane %v1116, %v1218
    %v1220 = vlaneseq
    %v1221 = vshrl.u32 %v1220, 7
    %v1222 = vsub.s32 %v623, %v1221
    %v1223 = vrot.slane %v1119, %v1222
    %v1224 = vlaneseq
    %v1225 = vshrl.u32 %v1224, 7
    %v1226 = vsub.s32 %v623, %v1225
    %v1227 = vrot.slane %v1122, %v1226
    %v1228 = vlaneseq
    %v1229 = vshrl.u32 %v1228, 7
    %v1230 = vsub.s32 %v623, %v1229
    %v1231 = vrot.slane %v1125, %v1230
    %v1232 = vlaneseq
    %v1233 = vshrl.u32 %v1232, 7
    %v1234 = vsub.s32 %v623, %v1233
    %v1235 = vrot.slane %v1128, %v1234
    %v1236 = vlaneseq
    %v1237 = vshrl.u32 %v1236, 7
    %v1238 = vsub.s32 %v623, %v1237
    %v1239 = vrot.slane %v1131, %v1238
    %v1240 = vlaneseq
    %v1241 = vshrl.u32 %v1240, 7
    %v1242 = vsub.s32 %v623, %v1241
    %v1243 = vrot.slane %v1134, %v1242
    %v1244 = vlaneseq
    %v1245 = vshrl.u32 %v1244, 7
    %v1246 = vsub.s32 %v623, %v1245
    %v1247 = vrot.slane %v1137, %v1246
    %v1248 = vlaneseq
    %v1249 = vshrl.u32 %v1248, 7
    %v1250 = vsub.s32 %v623, %v1249
    %v1251 = vrot.slane %v1140, %v1250
    %v1252 = vlaneseq
    %v1253 = vshrl.u32 %v1252, 7
    %v1254 = vsub.s32 %v623, %v1253
    %v1255 = vrot.slane %v1143, %v1254
    %v1256 = vlaneseq
    %v1257 = vshrl.u32 %v1256, 7
    %v1258 = vsub.s32 %v623, %v1257
    %v1259 = vrot.slane %v1146, %v1258
    %v1260 = vlaneseq
    %v1261 = vshrl.u32 %v1260, 7
    %v1262 = vsub.s32 %v623, %v1261
    %v1263 = vrot.slane %v1149, %v1262
    %v1264 = vlaneseq
    %v1265 = vshrl.u32 %v1264, 7
    %v1266 = vsub.s32 %v623, %v1265
    %v1267 = vrot.slane %v1152, %v1266
    %v1268 = vlaneseq
    %v1269 = vshrl.u32 %v1268, 7
    %v1270 = vsub.s32 %v623, %v1269
    %v1271 = vrot.slane %v1155, %v1270
    %v1272 = vlaneseq
    %v1273 = vshrl.u32 %v1272, 7
    %v1274 = vsub.s32 %v623, %v1273
    %v1275 = vrot.slane %v1158, %v1274
    %v1276 = vlaneseq
    %v1277 = vshrl.u32 %v1276, 7
    %v1278 = vsub.s32 %v623, %v1277
    %v1279 = vrot.slane %v1161, %v1278
    %v1280 = vlaneseq
    %v1281 = vshrl.u32 %v1280, 7
    %v1282 = vsub.s32 %v623, %v1281
    %v1283 = vrot.slane %v1164, %v1282
    %v1284 = vlaneseq
    %v1285 = vshrl.u32 %v1284, 7
    %v1286 = vsub.s32 %v623, %v1285
    %v1287 = vrot.slane %v1167, %v1286
    %v1288 = vlaneseq
    %v1289 = vshrl.u32 %v1288, 7
    %v1290 = vsub.s32 %v623, %v1289
    %v1291 = vrot.slane %v1170, %v1290
    %v1292 = vlaneseq
    %v1293 = vshrl.u32 %v1292, 7
    %v1294 = vsub.s32 %v623, %v1293
    %v1295 = vrot.slane %v1173, %v1294
    %v1296 = vlaneseq
    %v1297 = vshrl.u32 %v1296, 7
    %v1298 = vsub.s32 %v623, %v1297
    %v1299 = vrot.slane %v1176, %v1298
    %v1300 = vlaneseq
    %v1301 = vshrl.u32 %v1300, 7
    %v1302 = vsub.s32 %v623, %v1301
    %v1303 = vrot.slane %v1179, %v1302
    %v1304 = vlaneseq
    %v1305 = vshrl.u32 %v1304, 7
    %v1306 = vsub.s32 %v623, %v1305
    %v1307 = vrot.slane %v1182, %v1306
    %v1308 = vlaneseq
    %v1309 = vshrl.u32 %v1308, 7
    %v1310 = vsub.s32 %v623, %v1309
    %v1311 = vrot.slane %v1185, %v1310
    %v1312 = vlaneseq
    %v1313 = vshrl.u32 %v1312, 7
    %v1314 = vsub.s32 %v623, %v1313
    %v1315 = vrot.slane %v1188, %v1314
    %v1316 = vlaneseq
    %v1317 = vshrl.u32 %v1316, 7
    %v1318 = vsub.s32 %v623, %v1317
    %v1319 = vrot.slane %v1191, %v1318
    %v1320 = vsel %vm752, %v1199, %v1195
    %v1321 = vsel %vm754, %v1203, %v1320
    %v1322 = vsel %vm756, %v1207, %v1321
    %v1323 = vsel %vm758, %v1211, %v1322
    %v1324 = vsel %vm760, %v1215, %v1323
    %v1325 = vsel %vm762, %v1219, %v1324
    %v1326 = vsel %vm764, %v1223, %v1325
    %v1327 = vsel %vm752, %v1231, %v1227
    %v1328 = vsel %vm754, %v1235, %v1327
    %v1329 = vsel %vm756, %v1239, %v1328
    %v1330 = vsel %vm758, %v1243, %v1329
    %v1331 = vsel %vm760, %v1247, %v1330
    %v1332 = vsel %vm762, %v1251, %v1331
    %v1333 = vsel %vm764, %v1255, %v1332
    %v1334 = vsel %vm752, %v1263, %v1259
    %v1335 = vsel %vm754, %v1267, %v1334
    %v1336 = vsel %vm756, %v1271, %v1335
    %v1337 = vsel %vm758, %v1275, %v1336
    %v1338 = vsel %vm760, %v1279, %v1337
    %v1339 = vsel %vm762, %v1283, %v1338
    %v1340 = vsel %vm764, %v1287, %v1339
    %v1341 = vsel %vm752, %v1295, %v1291
    %v1342 = vsel %vm754, %v1299, %v1341
    %v1343 = vsel %vm756, %v1303, %v1342
    %v1344 = vsel %vm758, %v1307, %v1343
    %v1345 = vsel %vm760, %v1311, %v1344
    %v1346 = vsel %vm762, %v1315, %v1345
    %v1347 = vsel %vm764, %v1319, %v1346
    %v1352 = vsel %vm791, %v1326, 0.0
    %1353 = vadd.xlane.f32.xlu0 %v1352
    %v1354 = vpop.xlane.xlu0 %1353
    %v1355 = vsel %vm791, %v1333, 0.0
    %1356 = vadd.xlane.f32.xlu0 %v1355
    %v1357 = vpop.xlane.xlu0 %1356
    %v1358 = vsel %vm791, %v1340, 0.0
    %1359 = vadd.xlane.f32.xlu0 %v1358
    %v1360 = vpop.xlane.xlu0 %1359
    %v1361 = vsel %vm791, %v1347, 0.0
    %1362 = vadd.xlane.f32.xlu0 %v1361
    %v1363 = vpop.xlane.xlu0 %1362
    %v1364 = vrcp.pop %v1354
    %v1365 = vrcp.pop %v1357
    %v1366 = vrcp.pop %v1360
    %v1367 = vrcp.pop %v1363
    %v1372 = vlaneseq
    %v1373 = vshrl.u32 %v1372, 7
    %v1374 = vsub.s32 0, %v1373
    %v1375 = vrot.slane %v1364, %v1374
    %v1376 = vlaneseq
    %v1377 = vshrl.u32 %v1376, 7
    %v1378 = vsub.s32 1, %v1377
    %v1379 = vrot.slane %v1364, %v1378
    %v1380 = vlaneseq
    %v1381 = vshrl.u32 %v1380, 7
    %v1382 = vsub.s32 2, %v1381
    %v1383 = vrot.slane %v1364, %v1382
    %v1384 = vlaneseq
    %v1385 = vshrl.u32 %v1384, 7
    %v1386 = vsub.s32 3, %v1385
    %v1387 = vrot.slane %v1364, %v1386
    %v1388 = vlaneseq
    %v1389 = vshrl.u32 %v1388, 7
    %v1390 = vsub.s32 4, %v1389
    %v1391 = vrot.slane %v1364, %v1390
    %v1392 = vlaneseq
    %v1393 = vshrl.u32 %v1392, 7
    %v1394 = vsub.s32 5, %v1393
    %v1395 = vrot.slane %v1364, %v1394
    %v1396 = vlaneseq
    %v1397 = vshrl.u32 %v1396, 7
    %v1398 = vsub.s32 6, %v1397
    %v1399 = vrot.slane %v1364, %v1398
    %v1400 = vlaneseq
    %v1401 = vshrl.u32 %v1400, 7
    %v1402 = vsub.s32 7, %v1401
    %v1403 = vrot.slane %v1364, %v1402
    %v1404 = vlaneseq
    %v1405 = vshrl.u32 %v1404, 7
    %v1406 = vsub.s32 0, %v1405
    %v1407 = vrot.slane %v1365, %v1406
    %v1408 = vlaneseq
    %v1409 = vshrl.u32 %v1408, 7
    %v1410 = vsub.s32 1, %v1409
    %v1411 = vrot.slane %v1365, %v1410
    %v1412 = vlaneseq
    %v1413 = vshrl.u32 %v1412, 7
    %v1414 = vsub.s32 2, %v1413
    %v1415 = vrot.slane %v1365, %v1414
    %v1416 = vlaneseq
    %v1417 = vshrl.u32 %v1416, 7
    %v1418 = vsub.s32 3, %v1417
    %v1419 = vrot.slane %v1365, %v1418
    %v1420 = vlaneseq
    %v1421 = vshrl.u32 %v1420, 7
    %v1422 = vsub.s32 4, %v1421
    %v1423 = vrot.slane %v1365, %v1422
    %v1424 = vlaneseq
    %v1425 = vshrl.u32 %v1424, 7
    %v1426 = vsub.s32 5, %v1425
    %v1427 = vrot.slane %v1365, %v1426
    %v1428 = vlaneseq
    %v1429 = vshrl.u32 %v1428, 7
    %v1430 = vsub.s32 6, %v1429
    %v1431 = vrot.slane %v1365, %v1430
    %v1432 = vlaneseq
    %v1433 = vshrl.u32 %v1432, 7
    %v1434 = vsub.s32 7, %v1433
    %v1435 = vrot.slane %v1365, %v1434
    %v1436 = vlaneseq
    %v1437 = vshrl.u32 %v1436, 7
    %v1438 = vsub.s32 0, %v1437
    %v1439 = vrot.slane %v1366, %v1438
    %v1440 = vlaneseq
    %v1441 = vshrl.u32 %v1440, 7
    %v1442 = vsub.s32 1, %v1441
    %v1443 = vrot.slane %v1366, %v1442
    %v1444 = vlaneseq
    %v1445 = vshrl.u32 %v1444, 7
    %v1446 = vsub.s32 2, %v1445
    %v1447 = vrot.slane %v1366, %v1446
    %v1448 = vlaneseq
    %v1449 = vshrl.u32 %v1448, 7
    %v1450 = vsub.s32 3, %v1449
    %v1451 = vrot.slane %v1366, %v1450
    %v1452 = vlaneseq
    %v1453 = vshrl.u32 %v1452, 7
    %v1454 = vsub.s32 4, %v1453
    %v1455 = vrot.slane %v1366, %v1454
    %v1456 = vlaneseq
    %v1457 = vshrl.u32 %v1456, 7
    %v1458 = vsub.s32 5, %v1457
    %v1459 = vrot.slane %v1366, %v1458
    %v1460 = vlaneseq
    %v1461 = vshrl.u32 %v1460, 7
    %v1462 = vsub.s32 6, %v1461
    %v1463 = vrot.slane %v1366, %v1462
    %v1464 = vlaneseq
    %v1465 = vshrl.u32 %v1464, 7
    %v1466 = vsub.s32 7, %v1465
    %v1467 = vrot.slane %v1366, %v1466
    %v1468 = vlaneseq
    %v1469 = vshrl.u32 %v1468, 7
    %v1470 = vsub.s32 0, %v1469
    %v1471 = vrot.slane %v1367, %v1470
    %v1472 = vlaneseq
    %v1473 = vshrl.u32 %v1472, 7
    %v1474 = vsub.s32 1, %v1473
    %v1475 = vrot.slane %v1367, %v1474
    %v1476 = vlaneseq
    %v1477 = vshrl.u32 %v1476, 7
    %v1478 = vsub.s32 2, %v1477
    %v1479 = vrot.slane %v1367, %v1478
    %v1480 = vlaneseq
    %v1481 = vshrl.u32 %v1480, 7
    %v1482 = vsub.s32 3, %v1481
    %v1483 = vrot.slane %v1367, %v1482
    %v1484 = vlaneseq
    %v1485 = vshrl.u32 %v1484, 7
    %v1486 = vsub.s32 4, %v1485
    %v1487 = vrot.slane %v1367, %v1486
    %v1488 = vlaneseq
    %v1489 = vshrl.u32 %v1488, 7
    %v1490 = vsub.s32 5, %v1489
    %v1491 = vrot.slane %v1367, %v1490
    %v1492 = vlaneseq
    %v1493 = vshrl.u32 %v1492, 7
    %v1494 = vsub.s32 6, %v1493
    %v1495 = vrot.slane %v1367, %v1494
    %v1496 = vlaneseq
    %v1497 = vshrl.u32 %v1496, 7
    %v1498 = vsub.s32 7, %v1497
    %v1499 = vrot.slane %v1367, %v1498
    %v1532 = vmul.f32 %v1001, %v1375
    %v1533 = vmul.f32 %v1003, %v1379
    %v1534 = vmul.f32 %v1005, %v1383
    %v1535 = vmul.f32 %v1007, %v1387
    %v1536 = vmul.f32 %v1009, %v1391
    %v1537 = vmul.f32 %v1011, %v1395
    %v1538 = vmul.f32 %v1013, %v1399
    %v1539 = vmul.f32 %v1015, %v1403
    %v1540 = vmul.f32 %v1017, %v1407
    %v1541 = vmul.f32 %v1019, %v1411
    %v1542 = vmul.f32 %v1021, %v1415
    %v1543 = vmul.f32 %v1023, %v1419
    %v1544 = vmul.f32 %v1025, %v1423
    %v1545 = vmul.f32 %v1027, %v1427
    %v1546 = vmul.f32 %v1029, %v1431
    %v1547 = vmul.f32 %v1031, %v1435
    %v1548 = vmul.f32 %v1033, %v1439
    %v1549 = vmul.f32 %v1035, %v1443
    %v1550 = vmul.f32 %v1037, %v1447
    %v1551 = vmul.f32 %v1039, %v1451
    %v1552 = vmul.f32 %v1041, %v1455
    %v1553 = vmul.f32 %v1043, %v1459
    %v1554 = vmul.f32 %v1045, %v1463
    %v1555 = vmul.f32 %v1047, %v1467
    %v1556 = vmul.f32 %v1049, %v1471
    %v1557 = vmul.f32 %v1051, %v1475
    %v1558 = vmul.f32 %v1053, %v1479
    %v1559 = vmul.f32 %v1055, %v1483
    %v1560 = vmul.f32 %v1057, %v1487
    %v1561 = vmul.f32 %v1059, %v1491
    %v1562 = vmul.f32 %v1061, %v1495
    %v1563 = vmul.f32 %v1063, %v1499
    %1565 = vset.pattern.permute.xlu0 0
    %1566 = vperm.xlu0 %1565, %v1532
    %v1567 = vpop.permute.xlu0 %1566
    %1570 = vset.pattern.permute.xlu0 0
    %1571 = vperm.xlu0 %1570, %v1533
    %v1572 = vpop.permute.xlu0 %1571
    %1575 = vset.pattern.permute.xlu0 0
    %1576 = vperm.xlu0 %1575, %v1534
    %v1577 = vpop.permute.xlu0 %1576
    %1580 = vset.pattern.permute.xlu0 0
    %1581 = vperm.xlu0 %1580, %v1535
    %v1582 = vpop.permute.xlu0 %1581
    %1585 = vset.pattern.permute.xlu0 0
    %1586 = vperm.xlu0 %1585, %v1536
    %v1587 = vpop.permute.xlu0 %1586
    %1590 = vset.pattern.permute.xlu0 0
    %1591 = vperm.xlu0 %1590, %v1537
    %v1592 = vpop.permute.xlu0 %1591
    %1595 = vset.pattern.permute.xlu0 0
    %1596 = vperm.xlu0 %1595, %v1538
    %v1597 = vpop.permute.xlu0 %1596
    %1600 = vset.pattern.permute.xlu0 0
    %1601 = vperm.xlu0 %1600, %v1539
    %v1602 = vpop.permute.xlu0 %1601
    %1605 = vset.pattern.permute.xlu0 0
    %1606 = vperm.xlu0 %1605, %v1540
    %v1607 = vpop.permute.xlu0 %1606
    %1610 = vset.pattern.permute.xlu0 0
    %1611 = vperm.xlu0 %1610, %v1541
    %v1612 = vpop.permute.xlu0 %1611
    %1615 = vset.pattern.permute.xlu0 0
    %1616 = vperm.xlu0 %1615, %v1542
    %v1617 = vpop.permute.xlu0 %1616
    %1620 = vset.pattern.permute.xlu0 0
    %1621 = vperm.xlu0 %1620, %v1543
    %v1622 = vpop.permute.xlu0 %1621
    %1625 = vset.pattern.permute.xlu0 0
    %1626 = vperm.xlu0 %1625, %v1544
    %v1627 = vpop.permute.xlu0 %1626
    %1630 = vset.pattern.permute.xlu0 0
    %1631 = vperm.xlu0 %1630, %v1545
    %v1632 = vpop.permute.xlu0 %1631
    %1635 = vset.pattern.permute.xlu0 0
    %1636 = vperm.xlu0 %1635, %v1546
    %v1637 = vpop.permute.xlu0 %1636
    %1640 = vset.pattern.permute.xlu0 0
    %1641 = vperm.xlu0 %1640, %v1547
    %v1642 = vpop.permute.xlu0 %1641
    %1645 = vset.pattern.permute.xlu0 0
    %1646 = vperm.xlu0 %1645, %v1548
    %v1647 = vpop.permute.xlu0 %1646
    %1650 = vset.pattern.permute.xlu0 0
    %1651 = vperm.xlu0 %1650, %v1549
    %v1652 = vpop.permute.xlu0 %1651
    %1655 = vset.pattern.permute.xlu0 0
    %1656 = vperm.xlu0 %1655, %v1550
    %v1657 = vpop.permute.xlu0 %1656
    %1660 = vset.pattern.permute.xlu0 0
    %1661 = vperm.xlu0 %1660, %v1551
    %v1662 = vpop.permute.xlu0 %1661
    %1665 = vset.pattern.permute.xlu0 0
    %1666 = vperm.xlu0 %1665, %v1552
    %v1667 = vpop.permute.xlu0 %1666
    %1670 = vset.pattern.permute.xlu0 0
    %1671 = vperm.xlu0 %1670, %v1553
    %v1672 = vpop.permute.xlu0 %1671
    %1675 = vset.pattern.permute.xlu0 0
    %1676 = vperm.xlu0 %1675, %v1554
    %v1677 = vpop.permute.xlu0 %1676
    %1680 = vset.pattern.permute.xlu0 0
    %1681 = vperm.xlu0 %1680, %v1555
    %v1682 = vpop.permute.xlu0 %1681
    %1685 = vset.pattern.permute.xlu0 0
    %1686 = vperm.xlu0 %1685, %v1556
    %v1687 = vpop.permute.xlu0 %1686
    %1690 = vset.pattern.permute.xlu0 0
    %1691 = vperm.xlu0 %1690, %v1557
    %v1692 = vpop.permute.xlu0 %1691
    %1695 = vset.pattern.permute.xlu0 0
    %1696 = vperm.xlu0 %1695, %v1558
    %v1697 = vpop.permute.xlu0 %1696
    %1700 = vset.pattern.permute.xlu0 0
    %1701 = vperm.xlu0 %1700, %v1559
    %v1702 = vpop.permute.xlu0 %1701
    %1705 = vset.pattern.permute.xlu0 0
    %1706 = vperm.xlu0 %1705, %v1560
    %v1707 = vpop.permute.xlu0 %1706
    %1710 = vset.pattern.permute.xlu0 0
    %1711 = vperm.xlu0 %1710, %v1561
    %v1712 = vpop.permute.xlu0 %1711
    %1715 = vset.pattern.permute.xlu0 0
    %1716 = vperm.xlu0 %1715, %v1562
    %v1717 = vpop.permute.xlu0 %1716
    %1720 = vset.pattern.permute.xlu0 0
    %1721 = vperm.xlu0 %1720, %v1563
    %v1722 = vpop.permute.xlu0 %1721
    %v1724 = vmul.f32 %v46, %v1567
    %v1725 = vmul.f32 %v47, %v1572
    %v1726 = vmul.f32 %v48, %v1577
    %v1727 = vmul.f32 %v49, %v1582
    %v1728 = vmul.f32 %v50, %v1587
    %v1729 = vmul.f32 %v51, %v1592
    %v1730 = vmul.f32 %v52, %v1597
    %v1731 = vmul.f32 %v53, %v1602
    %v1732 = vmul.f32 %v54, %v1607
    %v1733 = vmul.f32 %v55, %v1612
    %v1734 = vmul.f32 %v56, %v1617
    %v1735 = vmul.f32 %v57, %v1622
    %v1736 = vmul.f32 %v58, %v1627
    %v1737 = vmul.f32 %v59, %v1632
    %v1738 = vmul.f32 %v60, %v1637
    %v1739 = vmul.f32 %v61, %v1642
    %v1740 = vmul.f32 %v62, %v1647
    %v1741 = vmul.f32 %v63, %v1652
    %v1742 = vmul.f32 %v64, %v1657
    %v1743 = vmul.f32 %v65, %v1662
    %v1744 = vmul.f32 %v66, %v1667
    %v1745 = vmul.f32 %v67, %v1672
    %v1746 = vmul.f32 %v68, %v1677
    %v1747 = vmul.f32 %v69, %v1682
    %v1748 = vmul.f32 %v70, %v1687
    %v1749 = vmul.f32 %v71, %v1692
    %v1750 = vmul.f32 %v72, %v1697
    %v1751 = vmul.f32 %v73, %v1702
    %v1752 = vmul.f32 %v74, %v1707
    %v1753 = vmul.f32 %v75, %v1712
    %v1754 = vmul.f32 %v76, %v1717
    %v1755 = vmul.f32 %v77, %v1722
    %v1756 = vsel %vm89, %v1724, 0.0
    %v1757 = vrot.slane %v1756, 4
    %v1758 = vadd.f32 %v1756, %v1757
    %v1759 = vrot.slane %v1758, 2
    %v1760 = vadd.f32 %v1758, %v1759
    %v1761 = vrot.slane %v1760, 1
    %v1762 = vadd.f32 %v1760, %v1761
    %v1763 = vsel %vm89, %v1725, 0.0
    %v1764 = vrot.slane %v1763, 4
    %v1765 = vadd.f32 %v1763, %v1764
    %v1766 = vrot.slane %v1765, 2
    %v1767 = vadd.f32 %v1765, %v1766
    %v1768 = vrot.slane %v1767, 1
    %v1769 = vadd.f32 %v1767, %v1768
    %v1770 = vsel %vm89, %v1726, 0.0
    %v1771 = vrot.slane %v1770, 4
    %v1772 = vadd.f32 %v1770, %v1771
    %v1773 = vrot.slane %v1772, 2
    %v1774 = vadd.f32 %v1772, %v1773
    %v1775 = vrot.slane %v1774, 1
    %v1776 = vadd.f32 %v1774, %v1775
    %v1777 = vsel %vm89, %v1727, 0.0
    %v1778 = vrot.slane %v1777, 4
    %v1779 = vadd.f32 %v1777, %v1778
    %v1780 = vrot.slane %v1779, 2
    %v1781 = vadd.f32 %v1779, %v1780
    %v1782 = vrot.slane %v1781, 1
    %v1783 = vadd.f32 %v1781, %v1782
    %v1784 = vsel %vm89, %v1728, 0.0
    %v1785 = vrot.slane %v1784, 4
    %v1786 = vadd.f32 %v1784, %v1785
    %v1787 = vrot.slane %v1786, 2
    %v1788 = vadd.f32 %v1786, %v1787
    %v1789 = vrot.slane %v1788, 1
    %v1790 = vadd.f32 %v1788, %v1789
    %v1791 = vsel %vm89, %v1729, 0.0
    %v1792 = vrot.slane %v1791, 4
    %v1793 = vadd.f32 %v1791, %v1792
    %v1794 = vrot.slane %v1793, 2
    %v1795 = vadd.f32 %v1793, %v1794
    %v1796 = vrot.slane %v1795, 1
    %v1797 = vadd.f32 %v1795, %v1796
    %v1798 = vsel %vm89, %v1730, 0.0
    %v1799 = vrot.slane %v1798, 4
    %v1800 = vadd.f32 %v1798, %v1799
    %v1801 = vrot.slane %v1800, 2
    %v1802 = vadd.f32 %v1800, %v1801
    %v1803 = vrot.slane %v1802, 1
    %v1804 = vadd.f32 %v1802, %v1803
    %v1805 = vsel %vm89, %v1731, 0.0
    %v1806 = vrot.slane %v1805, 4
    %v1807 = vadd.f32 %v1805, %v1806
    %v1808 = vrot.slane %v1807, 2
    %v1809 = vadd.f32 %v1807, %v1808
    %v1810 = vrot.slane %v1809, 1
    %v1811 = vadd.f32 %v1809, %v1810
    %v1812 = vsel %vm89, %v1732, 0.0
    %v1813 = vrot.slane %v1812, 4
    %v1814 = vadd.f32 %v1812, %v1813
    %v1815 = vrot.slane %v1814, 2
    %v1816 = vadd.f32 %v1814, %v1815
    %v1817 = vrot.slane %v1816, 1
    %v1818 = vadd.f32 %v1816, %v1817
    %v1819 = vsel %vm89, %v1733, 0.0
    %v1820 = vrot.slane %v1819, 4
    %v1821 = vadd.f32 %v1819, %v1820
    %v1822 = vrot.slane %v1821, 2
    %v1823 = vadd.f32 %v1821, %v1822
    %v1824 = vrot.slane %v1823, 1
    %v1825 = vadd.f32 %v1823, %v1824
    %v1826 = vsel %vm89, %v1734, 0.0
    %v1827 = vrot.slane %v1826, 4
    %v1828 = vadd.f32 %v1826, %v1827
    %v1829 = vrot.slane %v1828, 2
    %v1830 = vadd.f32 %v1828, %v1829
    %v1831 = vrot.slane %v1830, 1
    %v1832 = vadd.f32 %v1830, %v1831
    %v1833 = vsel %vm89, %v1735, 0.0
    %v1834 = vrot.slane %v1833, 4
    %v1835 = vadd.f32 %v1833, %v1834
    %v1836 = vrot.slane %v1835, 2
    %v1837 = vadd.f32 %v1835, %v1836
    %v1838 = vrot.slane %v1837, 1
    %v1839 = vadd.f32 %v1837, %v1838
    %v1840 = vsel %vm89, %v1736, 0.0
    %v1841 = vrot.slane %v1840, 4
    %v1842 = vadd.f32 %v1840, %v1841
    %v1843 = vrot.slane %v1842, 2
    %v1844 = vadd.f32 %v1842, %v1843
    %v1845 = vrot.slane %v1844, 1
    %v1846 = vadd.f32 %v1844, %v1845
    %v1847 = vsel %vm89, %v1737, 0.0
    %v1848 = vrot.slane %v1847, 4
    %v1849 = vadd.f32 %v1847, %v1848
    %v1850 = vrot.slane %v1849, 2
    %v1851 = vadd.f32 %v1849, %v1850
    %v1852 = vrot.slane %v1851, 1
    %v1853 = vadd.f32 %v1851, %v1852
    %v1854 = vsel %vm89, %v1738, 0.0
    %v1855 = vrot.slane %v1854, 4
    %v1856 = vadd.f32 %v1854, %v1855
    %v1857 = vrot.slane %v1856, 2
    %v1858 = vadd.f32 %v1856, %v1857
    %v1859 = vrot.slane %v1858, 1
    %v1860 = vadd.f32 %v1858, %v1859
    %v1861 = vsel %vm89, %v1739, 0.0
    %v1862 = vrot.slane %v1861, 4
    %v1863 = vadd.f32 %v1861, %v1862
    %v1864 = vrot.slane %v1863, 2
    %v1865 = vadd.f32 %v1863, %v1864
    %v1866 = vrot.slane %v1865, 1
    %v1867 = vadd.f32 %v1865, %v1866
    %v1868 = vsel %vm89, %v1740, 0.0
    %v1869 = vrot.slane %v1868, 4
    %v1870 = vadd.f32 %v1868, %v1869
    %v1871 = vrot.slane %v1870, 2
    %v1872 = vadd.f32 %v1870, %v1871
    %v1873 = vrot.slane %v1872, 1
    %v1874 = vadd.f32 %v1872, %v1873
    %v1875 = vsel %vm89, %v1741, 0.0
    %v1876 = vrot.slane %v1875, 4
    %v1877 = vadd.f32 %v1875, %v1876
    %v1878 = vrot.slane %v1877, 2
    %v1879 = vadd.f32 %v1877, %v1878
    %v1880 = vrot.slane %v1879, 1
    %v1881 = vadd.f32 %v1879, %v1880
    %v1882 = vsel %vm89, %v1742, 0.0
    %v1883 = vrot.slane %v1882, 4
    %v1884 = vadd.f32 %v1882, %v1883
    %v1885 = vrot.slane %v1884, 2
    %v1886 = vadd.f32 %v1884, %v1885
    %v1887 = vrot.slane %v1886, 1
    %v1888 = vadd.f32 %v1886, %v1887
    %v1889 = vsel %vm89, %v1743, 0.0
    %v1890 = vrot.slane %v1889, 4
    %v1891 = vadd.f32 %v1889, %v1890
    %v1892 = vrot.slane %v1891, 2
    %v1893 = vadd.f32 %v1891, %v1892
    %v1894 = vrot.slane %v1893, 1
    %v1895 = vadd.f32 %v1893, %v1894
    %v1896 = vsel %vm89, %v1744, 0.0
    %v1897 = vrot.slane %v1896, 4
    %v1898 = vadd.f32 %v1896, %v1897
    %v1899 = vrot.slane %v1898, 2
    %v1900 = vadd.f32 %v1898, %v1899
    %v1901 = vrot.slane %v1900, 1
    %v1902 = vadd.f32 %v1900, %v1901
    %v1903 = vsel %vm89, %v1745, 0.0
    %v1904 = vrot.slane %v1903, 4
    %v1905 = vadd.f32 %v1903, %v1904
    %v1906 = vrot.slane %v1905, 2
    %v1907 = vadd.f32 %v1905, %v1906
    %v1908 = vrot.slane %v1907, 1
    %v1909 = vadd.f32 %v1907, %v1908
    %v1910 = vsel %vm89, %v1746, 0.0
    %v1911 = vrot.slane %v1910, 4
    %v1912 = vadd.f32 %v1910, %v1911
    %v1913 = vrot.slane %v1912, 2
    %v1914 = vadd.f32 %v1912, %v1913
    %v1915 = vrot.slane %v1914, 1
    %v1916 = vadd.f32 %v1914, %v1915
    %v1917 = vsel %vm89, %v1747, 0.0
    %v1918 = vrot.slane %v1917, 4
    %v1919 = vadd.f32 %v1917, %v1918
    %v1920 = vrot.slane %v1919, 2
    %v1921 = vadd.f32 %v1919, %v1920
    %v1922 = vrot.slane %v1921, 1
    %v1923 = vadd.f32 %v1921, %v1922
    %v1924 = vsel %vm89, %v1748, 0.0
    %v1925 = vrot.slane %v1924, 4
    %v1926 = vadd.f32 %v1924, %v1925
    %v1927 = vrot.slane %v1926, 2
    %v1928 = vadd.f32 %v1926, %v1927
    %v1929 = vrot.slane %v1928, 1
    %v1930 = vadd.f32 %v1928, %v1929
    %v1931 = vsel %vm89, %v1749, 0.0
    %v1932 = vrot.slane %v1931, 4
    %v1933 = vadd.f32 %v1931, %v1932
    %v1934 = vrot.slane %v1933, 2
    %v1935 = vadd.f32 %v1933, %v1934
    %v1936 = vrot.slane %v1935, 1
    %v1937 = vadd.f32 %v1935, %v1936
    %v1938 = vsel %vm89, %v1750, 0.0
    %v1939 = vrot.slane %v1938, 4
    %v1940 = vadd.f32 %v1938, %v1939
    %v1941 = vrot.slane %v1940, 2
    %v1942 = vadd.f32 %v1940, %v1941
    %v1943 = vrot.slane %v1942, 1
    %v1944 = vadd.f32 %v1942, %v1943
    %v1945 = vsel %vm89, %v1751, 0.0
    %v1946 = vrot.slane %v1945, 4
    %v1947 = vadd.f32 %v1945, %v1946
    %v1948 = vrot.slane %v1947, 2
    %v1949 = vadd.f32 %v1947, %v1948
    %v1950 = vrot.slane %v1949, 1
    %v1951 = vadd.f32 %v1949, %v1950
    %v1952 = vsel %vm89, %v1752, 0.0
    %v1953 = vrot.slane %v1952, 4
    %v1954 = vadd.f32 %v1952, %v1953
    %v1955 = vrot.slane %v1954, 2
    %v1956 = vadd.f32 %v1954, %v1955
    %v1957 = vrot.slane %v1956, 1
    %v1958 = vadd.f32 %v1956, %v1957
    %v1959 = vsel %vm89, %v1753, 0.0
    %v1960 = vrot.slane %v1959, 4
    %v1961 = vadd.f32 %v1959, %v1960
    %v1962 = vrot.slane %v1961, 2
    %v1963 = vadd.f32 %v1961, %v1962
    %v1964 = vrot.slane %v1963, 1
    %v1965 = vadd.f32 %v1963, %v1964
    %v1966 = vsel %vm89, %v1754, 0.0
    %v1967 = vrot.slane %v1966, 4
    %v1968 = vadd.f32 %v1966, %v1967
    %v1969 = vrot.slane %v1968, 2
    %v1970 = vadd.f32 %v1968, %v1969
    %v1971 = vrot.slane %v1970, 1
    %v1972 = vadd.f32 %v1970, %v1971
    %v1973 = vsel %vm89, %v1755, 0.0
    %v1974 = vrot.slane %v1973, 4
    %v1975 = vadd.f32 %v1973, %v1974
    %v1976 = vrot.slane %v1975, 2
    %v1977 = vadd.f32 %v1975, %v1976
    %v1978 = vrot.slane %v1977, 1
    %v1979 = vadd.f32 %v1977, %v1978
    %v1988 = vsel %vm752, %v1769, %v1762
    %v1989 = vsel %vm754, %v1776, %v1988
    %v1990 = vsel %vm756, %v1783, %v1989
    %v1991 = vsel %vm758, %v1790, %v1990
    %v1992 = vsel %vm760, %v1797, %v1991
    %v1993 = vsel %vm762, %v1804, %v1992
    %v1994 = vsel %vm764, %v1811, %v1993
    %1996 = vst.msk [vmem:[#allocation7] sm:$0xff] %vm89, %v1994
    %v2005 = vsel %vm752, %v1825, %v1818
    %v2006 = vsel %vm754, %v1832, %v2005
    %v2007 = vsel %vm756, %v1839, %v2006
    %v2008 = vsel %vm758, %v1846, %v2007
    %v2009 = vsel %vm760, %v1853, %v2008
    %v2010 = vsel %vm762, %v1860, %v2009
    %v2011 = vsel %vm764, %v1867, %v2010
    %2012 = vrot.lane.b32.xlu0 %v2011, 32
    %v2013 = vpop.permute.xlu0 %2012
    %vm2015 = vcmask 523520
    %2016 = vst.msk [vmem:[#allocation7] sm:$0xff] %vm2015, %v2013
    %v2025 = vsel %vm752, %v1881, %v1874
    %v2026 = vsel %vm754, %v1888, %v2025
    %v2027 = vsel %vm756, %v1895, %v2026
    %v2028 = vsel %vm758, %v1902, %v2027
    %v2029 = vsel %vm760, %v1909, %v2028
    %v2030 = vsel %vm762, %v1916, %v2029
    %v2031 = vsel %vm764, %v1923, %v2030
    %2032 = vrot.lane.b32.xlu0 %v2031, 64
    %v2033 = vpop.permute.xlu0 %2032
    %vm2035 = vcmask 785920
    %2036 = vst.msk [vmem:[#allocation7] sm:$0xff] %vm2035, %v2033
    %v2045 = vsel %vm752, %v1937, %v1930
    %v2046 = vsel %vm754, %v1944, %v2045
    %v2047 = vsel %vm756, %v1951, %v2046
    %v2048 = vsel %vm758, %v1958, %v2047
    %v2049 = vsel %vm760, %v1965, %v2048
    %v2050 = vsel %vm762, %v1972, %v2049
    %v2051 = vsel %vm764, %v1979, %v2050
    %2052 = vrot.lane.b32.xlu0 %v2051, 96
    %v2053 = vpop.permute.xlu0 %2052
    %vm2055 = vcmask 1048320
    %2056 = vst.msk [vmem:[#allocation7] sm:$0xff] %vm2055, %v2053
    // Predicated region
    $region26: #{tpu_custom_call.1} parent=1 // pred_check
      _
    $region27: #{tpu_custom_call.1} parent=1 // pred_check_branch
      %2058 = sbr.rel (0) target = $region29
    $region28: #{tpu_custom_call.1} parent=1 // pred_region
      %s2060 = ssub.s32 128, 128
      %2061 = vsyncadd [#allocation4], %s2060
      %s2063 = sshll.u32 [#allocation7], 4
      %s2064 = int_to_ptr.vmem [resolvable:$true] %s2063
      %2066 = dma.vmem_to_hbm [thread:$0]  %s2064, 128, %s4, [#allocation4]
    $region29: #{tpu_custom_call.1} parent=1 // pred_fallthru
      _
    // Predicated region
    $region30: #{tpu_custom_call.1} parent=1 // pred_check
      _
    $region31: #{tpu_custom_call.1} parent=1 // pred_check_branch
      %2068 = sbr.rel (0) target = $region33
    $region32: #{tpu_custom_call.1} parent=1 // pred_region
      %2069 = dma.done [#allocation4], 128
    $region33: #{tpu_custom_call.1} parent=1 // pred_fallthru
      _
    %2070 = vsyncpa [#allocation3], 1
    %2071 = vsyncpa [#allocation6], 1
    %2072 = vsyncpa [#allocation4], 1

</llo_original>
